<compile_context>
chip_gen: v7x
topology: tpu7x:2x2x1
jax: 0.10.0
libtpu: 0.0.40
codegen_flags: <defaults>
</compile_context>

<pallas_src>
import functools

import jax
import jax.numpy as jnp
import numpy as np
from jax import lax
from jax.experimental import pallas as pl
from jax.experimental.pallas import tpu as pltpu

EPS = 1e-5


# ----------------------------- in-kernel helpers ------------------------------
def _load_channels(x_ref, C):
    """Per-channel dense 2-D slabs (tile_n, L) from the (tile_n, C, L) block."""
    return [x_ref[:, c, :].astype(jnp.float32) for c in range(C)]


def _conv1d_k3(xc, w_ref, b_ref, first, last):
    """k=3, pad=1 conv as shifted VPU FMAs on per-channel slabs.

    xc:     list of C arrays, each (tile_n, L) f32
    w_ref:  SMEM flat (3*C*C,) f32, order [tap, c_in, c_out]
    b_ref:  SMEM flat (C,) f32
    first/last: (1, L) bool lane masks marking the sequence boundary
                (needed because roll wraps real data when block L == L).
    """
    C = len(xc)
    L = xc[0].shape[1]
    taps = []
    for x in xc:
        xm1 = jnp.where(first, 0.0, pltpu.roll(x, 1, 1))        # x[l-1]
        xp1 = jnp.where(last, 0.0, pltpu.roll(x, L - 1, 1))     # x[l+1]
        taps.append((xm1, x, xp1))

    ys = []
    for co in range(C):
        acc = None
        for ci in range(C):
            tci = taps[ci]
            for t in range(3):
                term = w_ref[(t * C + ci) * C + co] * tci[t]    # scalar * vreg
                acc = term if acc is None else acc + term
        ys.append(acc + b_ref[co])
    return ys


def _write_stats(ys, stats_ref):
    """Per-channel (sum, sum_sq) over the batch tile -> (1, 2C, 1) block."""
    rows = [jnp.sum(y, axis=0, keepdims=True) for y in ys]          # C x (1, L)
    rows += [jnp.sum(y * y, axis=0, keepdims=True) for y in ys]     # C x (1, L)
    r = jnp.concatenate(rows, axis=0)                               # (2C, L)
    stats_ref[...] = jnp.sum(r, axis=1, keepdims=True)[None]        # (1, 2C, 1)


def _lane_masks(L):
    lane = lax.broadcasted_iota(jnp.int32, (1, L), 1)
    return lane == 0, lane == L - 1


# --------------------------------- kernels ------------------------------------
def _bn1_stats_kernel(x_ref, w1_ref, b1_ref, stats_ref):
    C, L = x_ref.shape[1], x_ref.shape[2]
    first, last = _lane_masks(L)
    xc = _load_channels(x_ref, C)
    y1 = _conv1d_k3(xc, w1_ref, b1_ref, first, last)
    _write_stats(y1, stats_ref)


def _bn2_stats_kernel(x_ref, w1_ref, b1_ref, a1_ref, w2_ref, b2_ref, stats_ref):
    C, L = x_ref.shape[1], x_ref.shape[2]
    first, last = _lane_masks(L)
    xc = _load_channels(x_ref, C)
    y1 = _conv1d_k3(xc, w1_ref, b1_ref, first, last)
    h = [jnp.maximum(y1[c] * a1_ref[c] + a1_ref[C + c], 0.0) for c in range(C)]
    y2 = _conv1d_k3(h, w2_ref, b2_ref, first, last)
    _write_stats(y2, stats_ref)


def _final_kernel(x_ref, w1_ref, b1_ref, a1_ref, w2_ref, b2_ref, a2_ref, o_ref):
    C, L = x_ref.shape[1], x_ref.shape[2]
    first, last = _lane_masks(L)
    xc = _load_channels(x_ref, C)
    y1 = _conv1d_k3(xc, w1_ref, b1_ref, first, last)
    h = [jnp.maximum(y1[c] * a1_ref[c] + a1_ref[C + c], 0.0) for c in range(C)]
    y2 = _conv1d_k3(h, w2_ref, b2_ref, first, last)
    for c in range(C):
        z = y2[c] * a2_ref[c] + a2_ref[C + c] + xc[c]               # bn2 + residual
        o_ref[:, c, :] = jnp.maximum(z, 0.0).astype(o_ref.dtype)


# --------------------------------- wrapper -------------------------------------
def _pick_tile_n(N, C, L, itemsize=4, target_bytes=2 << 20, min_steps=4):
    """~2 MiB x-blocks, >=4 grid steps when possible, multiple of 8, divides N."""
    per_sample = max(1, C * L * itemsize)
    tn = max(1, min(N, target_bytes // per_sample))
    if N >= min_steps:
        tn = min(tn, max(1, N // min_steps))
    if tn >= 8:
        tn -= tn % 8                     # full 8-sublane (tile_n, L) slabs
    tn = max(tn, 1)
    while N % tn:
        tn -= 1
    return max(tn, 1)


def _finalize_bn(stats, gamma, beta, count, C):
    """Fold batch stats + gamma/beta into per-channel affine [scale | shift]."""
    tot = jnp.sum(stats[:, :, 0], axis=0)          # (2C,)
    s, sq = tot[:C], tot[C:]
    mean = s / count
    # TODO(synk): E[x^2]-E[x]^2 in f32 can cancel for very large N*L / large
    # activation means; switch to per-tile mean-shifted (Welford) combination.
    var = jnp.maximum(sq / count - mean * mean, 0.0)    # biased (train-mode BN)
    scale = gamma.astype(jnp.float32) * lax.rsqrt(var + EPS)
    shift = beta.astype(jnp.float32) - mean * scale
    return jnp.concatenate([scale, shift])          # (2C,) flat, SMEM-friendly


@functools.partial(jax.jit, static_argnames=("tile_n",))
def residual_block(x, w1, b1, g1, be1, w2, b2, g2, be2, *, tile_n=None):
    """x: (N, C, L) f32 (PyTorch NCL). Conv weights in PyTorch (O, I, 3) layout."""
    N, C, L = x.shape
    if tile_n is None:
        tile_n = _pick_tile_n(N, C, L, jnp.dtype(x.dtype).itemsize)
    assert N % tile_n == 0

    dt = jnp.float32
    # (O, I, K) -> flat [tap, c_in, c_out] scalars for SMEM.
    w1_flat = jnp.transpose(w1, (2, 1, 0)).reshape(-1).astype(dt)
    w2_flat = jnp.transpose(w2, (2, 1, 0)).reshape(-1).astype(dt)
    b1_s = b1.astype(dt)
    b2_s = b2.astype(dt)

    grid = (N // tile_n,)
    x_spec = pl.BlockSpec((tile_n, C, L), lambda n: (n, 0, 0))
    smem = pl.BlockSpec(memory_space=pltpu.MemorySpace.SMEM)
    stats_spec = pl.BlockSpec((1, 2 * C, 1), lambda n: (n, 0, 0))
    stats_shape = jax.ShapeDtypeStruct((grid[0], 2 * C, 1), jnp.float32)
    cparams = pltpu.CompilerParams(
        dimension_semantics=("parallel",),
        vmem_limit_bytes=48 * 1024 * 1024,
    )

    # ---- pass 1: BN1 batch statistics ----
    s1 = pl.pallas_call(
        _bn1_stats_kernel, out_shape=stats_shape, grid=grid,
        in_specs=[x_spec, smem, smem], out_specs=stats_spec,
        compiler_params=cparams,
    )(x, w1_flat, b1_s)
    a1 = _finalize_bn(s1, g1, be1, N * L, C)

    # ---- pass 2: BN2 batch statistics ----
    s2 = pl.pallas_call(
        _bn2_stats_kernel, out_shape=stats_shape, grid=grid,
        in_specs=[x_spec, smem, smem, smem, smem, smem], out_specs=stats_spec,
        compiler_params=cparams,
    )(x, w1_flat, b1_s, a1, w2_flat, b2_s)
    a2 = _finalize_bn(s2, g2, be2, N * L, C)

    # ---- pass 3: conv1 -> bn1 -> relu -> conv2 -> bn2 -> +x -> relu ----
    out = pl.pallas_call(
        _final_kernel,
        out_shape=jax.ShapeDtypeStruct((N, C, L), x.dtype), grid=grid,
        in_specs=[x_spec, smem, smem, smem, smem, smem, smem],
        out_specs=x_spec,
        compiler_params=cparams,
    )(x, w1_flat, b1_s, a1, w2_flat, b2_s, a2)
    return out


# ----------------------------- pure-JAX reference -----------------------------
def _ref_forward(x, w1, b1, g1, be1, w2, b2, g2, be2):
    def conv(x, w, b):
        y = lax.conv_general_dilated(
            x, w, window_strides=(1,), padding=[(1, 1)],
            dimension_numbers=('NCH', 'OIH', 'NCH'))
        return y + b[None, :, None]

    def bn(y, g, be):
        mean = jnp.mean(y, axis=(0, 2), keepdims=True)
        var = jnp.mean((y - mean) ** 2, axis=(0, 2), keepdims=True)
        return (y - mean) / jnp.sqrt(var + EPS) * g[None, :, None] + be[None, :, None]

    out = jnp.maximum(bn(conv(x, w1, b1), g1, be1), 0.0)
    out = bn(conv(out, w2, b2), g2, be2)
    return jnp.maximum(out + x, 0.0)


if __name__ == "__main__":
    # in_channels = out_channels = num_blocks = 4, N = 2, L = 16.
    N, C, L = 2, 4, 16
    key = jax.random.PRNGKey(0)
    k_x, k_w1, k_b1, k_w2, k_b2 = jax.random.split(key, 5)

    x = jax.random.normal(k_x, (N, C, L), dtype=jnp.float32)

    # Conv weights in PyTorch layout (out_channels, in_channels, kernel=3).
    w1 = jax.random.normal(k_w1, (C, C, 3), dtype=jnp.float32) * 0.1
    b1 = jax.random.normal(k_b1, (C,), dtype=jnp.float32) * 0.1
    w2 = jax.random.normal(k_w2, (C, C, 3), dtype=jnp.float32) * 0.1
    b2 = jax.random.normal(k_b2, (C,), dtype=jnp.float32) * 0.1

    # Fresh BatchNorm1d params: gamma = 1, beta = 0 (training-mode batch stats).
    g1 = jnp.ones((C,), jnp.float32); be1 = jnp.zeros((C,), jnp.float32)
    g2 = jnp.ones((C,), jnp.float32); be2 = jnp.zeros((C,), jnp.float32)

    out = residual_block(x, w1, b1, g1, be1, w2, b2, g2, be2)
    out = jax.block_until_ready(out)

    ref = _ref_forward(x, w1, b1, g1, be1, w2, b2, g2, be2)
    np.testing.assert_allclose(np.asarray(out), np.asarray(ref),
                               rtol=1e-4, atol=1e-4)
    print("KERNEL_OK")
</pallas_src>

<mosaic_0001>
module attributes {stable_mosaic.version = 11 : i64} {
  func.func @_bn1_stats_kernel(%arg0: i32, %arg1: memref<2x4x16xf32, #tpu.memory_space<vmem>>, %arg2: memref<48xf32, #tpu.memory_space<smem>>, %arg3: memref<4xf32, #tpu.memory_space<smem>>, %arg4: memref<1x8x1xf32, #tpu.memory_space<vmem>>) attributes {dimension_semantics = [#tpu.dimension_semantics<parallel>], iteration_bounds = array<i64: 1>, scalar_prefetch = 0 : i64, scratch_operands = 0 : i64, tpu.core_type = #tpu.core_type<tc>, window_params = [{transform_indices = @transform_0, window_bounds = array<i64: 2, 4, 16>}, {transform_indices = @transform_1, window_bounds = array<i64: 48>}, {transform_indices = @transform_2, window_bounds = array<i64: 4>}, {transform_indices = @transform_3, window_bounds = array<i64: 1, 8, 1>}]} {
    %0 = tpu.iota {dimensions = array<i32: 1>} : vector<1x16xi32>
    %c0_i32 = arith.constant 0 : i32
    %1 = vector.broadcast %c0_i32 : i32 to vector<1x16xi32>
    %2 = arith.cmpi eq, %0, %1 : vector<1x16xi32>
    %c15_i32 = arith.constant 15 : i32
    %3 = vector.broadcast %c15_i32 : i32 to vector<1x16xi32>
    %4 = arith.cmpi eq, %0, %3 : vector<1x16xi32>
    %c0 = arith.constant 0 : index
    %c0_0 = arith.constant 0 : index
    %c0_1 = arith.constant 0 : index
    %5 = vector.load %arg1[%c0, %c0_0, %c0_1] : memref<2x4x16xf32, #tpu.memory_space<vmem>>, vector<2x1x16xf32>
    %6 = vector.shape_cast %5 : vector<2x1x16xf32> to vector<2x16xf32>
    %c0_2 = arith.constant 0 : index
    %c1 = arith.constant 1 : index
    %c0_3 = arith.constant 0 : index
    %7 = vector.load %arg1[%c0_2, %c1, %c0_3] : memref<2x4x16xf32, #tpu.memory_space<vmem>>, vector<2x1x16xf32>
    %8 = vector.shape_cast %7 : vector<2x1x16xf32> to vector<2x16xf32>
    %c0_4 = arith.constant 0 : index
    %c2 = arith.constant 2 : index
    %c0_5 = arith.constant 0 : index
    %9 = vector.load %arg1[%c0_4, %c2, %c0_5] : memref<2x4x16xf32, #tpu.memory_space<vmem>>, vector<2x1x16xf32>
    %10 = vector.shape_cast %9 : vector<2x1x16xf32> to vector<2x16xf32>
    %c0_6 = arith.constant 0 : index
    %c3 = arith.constant 3 : index
    %c0_7 = arith.constant 0 : index
    %11 = vector.load %arg1[%c0_6, %c3, %c0_7] : memref<2x4x16xf32, #tpu.memory_space<vmem>>, vector<2x1x16xf32>
    %12 = vector.shape_cast %11 : vector<2x1x16xf32> to vector<2x16xf32>
    %c1_i32 = arith.constant 1 : i32
    %13 = tpu.dynamic_rotate %6 by %c1_i32 dim 1 : vector<2x16xf32>, i32 -> vector<2x16xf32>
    %cst = arith.constant 0.000000e+00 : f32
    %14 = vector.shape_cast %2 : vector<1x16xi1> to vector<1x16xi1>
    %15 = vector.broadcast %14 : vector<1x16xi1> to vector<2x16xi1>
    %16 = vector.broadcast %cst : f32 to vector<2x16xf32>
    %17 = arith.select %15, %16, %13 : vector<2x16xi1>, vector<2x16xf32>
    %c15_i32_8 = arith.constant 15 : i32
    %18 = tpu.dynamic_rotate %6 by %c15_i32_8 dim 1 : vector<2x16xf32>, i32 -> vector<2x16xf32>
    %cst_9 = arith.constant 0.000000e+00 : f32
    %19 = vector.shape_cast %4 : vector<1x16xi1> to vector<1x16xi1>
    %20 = vector.broadcast %19 : vector<1x16xi1> to vector<2x16xi1>
    %21 = vector.broadcast %cst_9 : f32 to vector<2x16xf32>
    %22 = arith.select %20, %21, %18 : vector<2x16xi1>, vector<2x16xf32>
    %c1_i32_10 = arith.constant 1 : i32
    %23 = tpu.dynamic_rotate %8 by %c1_i32_10 dim 1 : vector<2x16xf32>, i32 -> vector<2x16xf32>
    %cst_11 = arith.constant 0.000000e+00 : f32
    %24 = vector.shape_cast %2 : vector<1x16xi1> to vector<1x16xi1>
    %25 = vector.broadcast %24 : vector<1x16xi1> to vector<2x16xi1>
    %26 = vector.broadcast %cst_11 : f32 to vector<2x16xf32>
    %27 = arith.select %25, %26, %23 : vector<2x16xi1>, vector<2x16xf32>
    %c15_i32_12 = arith.constant 15 : i32
    %28 = tpu.dynamic_rotate %8 by %c15_i32_12 dim 1 : vector<2x16xf32>, i32 -> vector<2x16xf32>
    %cst_13 = arith.constant 0.000000e+00 : f32
    %29 = vector.shape_cast %4 : vector<1x16xi1> to vector<1x16xi1>
    %30 = vector.broadcast %29 : vector<1x16xi1> to vector<2x16xi1>
    %31 = vector.broadcast %cst_13 : f32 to vector<2x16xf32>
    %32 = arith.select %30, %31, %28 : vector<2x16xi1>, vector<2x16xf32>
    %c1_i32_14 = arith.constant 1 : i32
    %33 = tpu.dynamic_rotate %10 by %c1_i32_14 dim 1 : vector<2x16xf32>, i32 -> vector<2x16xf32>
    %cst_15 = arith.constant 0.000000e+00 : f32
    %34 = vector.shape_cast %2 : vector<1x16xi1> to vector<1x16xi1>
    %35 = vector.broadcast %34 : vector<1x16xi1> to vector<2x16xi1>
    %36 = vector.broadcast %cst_15 : f32 to vector<2x16xf32>
    %37 = arith.select %35, %36, %33 : vector<2x16xi1>, vector<2x16xf32>
    %c15_i32_16 = arith.constant 15 : i32
    %38 = tpu.dynamic_rotate %10 by %c15_i32_16 dim 1 : vector<2x16xf32>, i32 -> vector<2x16xf32>
    %cst_17 = arith.constant 0.000000e+00 : f32
    %39 = vector.shape_cast %4 : vector<1x16xi1> to vector<1x16xi1>
    %40 = vector.broadcast %39 : vector<1x16xi1> to vector<2x16xi1>
    %41 = vector.broadcast %cst_17 : f32 to vector<2x16xf32>
    %42 = arith.select %40, %41, %38 : vector<2x16xi1>, vector<2x16xf32>
    %c1_i32_18 = arith.constant 1 : i32
    %43 = tpu.dynamic_rotate %12 by %c1_i32_18 dim 1 : vector<2x16xf32>, i32 -> vector<2x16xf32>
    %cst_19 = arith.constant 0.000000e+00 : f32
    %44 = vector.shape_cast %2 : vector<1x16xi1> to vector<1x16xi1>
    %45 = vector.broadcast %44 : vector<1x16xi1> to vector<2x16xi1>
    %46 = vector.broadcast %cst_19 : f32 to vector<2x16xf32>
    %47 = arith.select %45, %46, %43 : vector<2x16xi1>, vector<2x16xf32>
    %c15_i32_20 = arith.constant 15 : i32
    %48 = tpu.dynamic_rotate %12 by %c15_i32_20 dim 1 : vector<2x16xf32>, i32 -> vector<2x16xf32>
    %cst_21 = arith.constant 0.000000e+00 : f32
    %49 = vector.shape_cast %4 : vector<1x16xi1> to vector<1x16xi1>
    %50 = vector.broadcast %49 : vector<1x16xi1> to vector<2x16xi1>
    %51 = vector.broadcast %cst_21 : f32 to vector<2x16xf32>
    %52 = arith.select %50, %51, %48 : vector<2x16xi1>, vector<2x16xf32>
    %c0_22 = arith.constant 0 : index
    %53 = memref.load %arg2[%c0_22] : memref<48xf32, #tpu.memory_space<smem>>
    %54 = vector.broadcast %53 : f32 to vector<2x16xf32>
    %55 = arith.mulf %54, %17 : vector<2x16xf32>
    %c16 = arith.constant 16 : index
    %56 = memref.load %arg2[%c16] : memref<48xf32, #tpu.memory_space<smem>>
    %57 = vector.broadcast %56 : f32 to vector<2x16xf32>
    %58 = arith.mulf %57, %6 : vector<2x16xf32>
    %59 = arith.addf %55, %58 : vector<2x16xf32>
    %c32 = arith.constant 32 : index
    %60 = memref.load %arg2[%c32] : memref<48xf32, #tpu.memory_space<smem>>
    %61 = vector.broadcast %60 : f32 to vector<2x16xf32>
    %62 = arith.mulf %61, %22 : vector<2x16xf32>
    %63 = arith.addf %59, %62 : vector<2x16xf32>
    %c4 = arith.constant 4 : index
    %64 = memref.load %arg2[%c4] : memref<48xf32, #tpu.memory_space<smem>>
    %65 = vector.broadcast %64 : f32 to vector<2x16xf32>
    %66 = arith.mulf %65, %27 : vector<2x16xf32>
    %67 = arith.addf %63, %66 : vector<2x16xf32>
    %c20 = arith.constant 20 : index
    %68 = memref.load %arg2[%c20] : memref<48xf32, #tpu.memory_space<smem>>
    %69 = vector.broadcast %68 : f32 to vector<2x16xf32>
    %70 = arith.mulf %69, %8 : vector<2x16xf32>
    %71 = arith.addf %67, %70 : vector<2x16xf32>
    %c36 = arith.constant 36 : index
    %72 = memref.load %arg2[%c36] : memref<48xf32, #tpu.memory_space<smem>>
    %73 = vector.broadcast %72 : f32 to vector<2x16xf32>
    %74 = arith.mulf %73, %32 : vector<2x16xf32>
    %75 = arith.addf %71, %74 : vector<2x16xf32>
    %c8 = arith.constant 8 : index
    %76 = memref.load %arg2[%c8] : memref<48xf32, #tpu.memory_space<smem>>
    %77 = vector.broadcast %76 : f32 to vector<2x16xf32>
    %78 = arith.mulf %77, %37 : vector<2x16xf32>
    %79 = arith.addf %75, %78 : vector<2x16xf32>
    %c24 = arith.constant 24 : index
    %80 = memref.load %arg2[%c24] : memref<48xf32, #tpu.memory_space<smem>>
    %81 = vector.broadcast %80 : f32 to vector<2x16xf32>
    %82 = arith.mulf %81, %10 : vector<2x16xf32>
    %83 = arith.addf %79, %82 : vector<2x16xf32>
    %c40 = arith.constant 40 : index
    %84 = memref.load %arg2[%c40] : memref<48xf32, #tpu.memory_space<smem>>
    %85 = vector.broadcast %84 : f32 to vector<2x16xf32>
    %86 = arith.mulf %85, %42 : vector<2x16xf32>
    %87 = arith.addf %83, %86 : vector<2x16xf32>
    %c12 = arith.constant 12 : index
    %88 = memref.load %arg2[%c12] : memref<48xf32, #tpu.memory_space<smem>>
    %89 = vector.broadcast %88 : f32 to vector<2x16xf32>
    %90 = arith.mulf %89, %47 : vector<2x16xf32>
    %91 = arith.addf %87, %90 : vector<2x16xf32>
    %c28 = arith.constant 28 : index
    %92 = memref.load %arg2[%c28] : memref<48xf32, #tpu.memory_space<smem>>
    %93 = vector.broadcast %92 : f32 to vector<2x16xf32>
    %94 = arith.mulf %93, %12 : vector<2x16xf32>
    %95 = arith.addf %91, %94 : vector<2x16xf32>
    %c44 = arith.constant 44 : index
    %96 = memref.load %arg2[%c44] : memref<48xf32, #tpu.memory_space<smem>>
    %97 = vector.broadcast %96 : f32 to vector<2x16xf32>
    %98 = arith.mulf %97, %52 : vector<2x16xf32>
    %99 = arith.addf %95, %98 : vector<2x16xf32>
    %c0_23 = arith.constant 0 : index
    %100 = memref.load %arg3[%c0_23] : memref<4xf32, #tpu.memory_space<smem>>
    %101 = vector.broadcast %100 : f32 to vector<2x16xf32>
    %102 = arith.addf %99, %101 : vector<2x16xf32>
    %c1_24 = arith.constant 1 : index
    %103 = memref.load %arg2[%c1_24] : memref<48xf32, #tpu.memory_space<smem>>
    %104 = vector.broadcast %103 : f32 to vector<2x16xf32>
    %105 = arith.mulf %104, %17 : vector<2x16xf32>
    %c17 = arith.constant 17 : index
    %106 = memref.load %arg2[%c17] : memref<48xf32, #tpu.memory_space<smem>>
    %107 = vector.broadcast %106 : f32 to vector<2x16xf32>
    %108 = arith.mulf %107, %6 : vector<2x16xf32>
    %109 = arith.addf %105, %108 : vector<2x16xf32>
    %c33 = arith.constant 33 : index
    %110 = memref.load %arg2[%c33] : memref<48xf32, #tpu.memory_space<smem>>
    %111 = vector.broadcast %110 : f32 to vector<2x16xf32>
    %112 = arith.mulf %111, %22 : vector<2x16xf32>
    %113 = arith.addf %109, %112 : vector<2x16xf32>
    %c5 = arith.constant 5 : index
    %114 = memref.load %arg2[%c5] : memref<48xf32, #tpu.memory_space<smem>>
    %115 = vector.broadcast %114 : f32 to vector<2x16xf32>
    %116 = arith.mulf %115, %27 : vector<2x16xf32>
    %117 = arith.addf %113, %116 : vector<2x16xf32>
    %c21 = arith.constant 21 : index
    %118 = memref.load %arg2[%c21] : memref<48xf32, #tpu.memory_space<smem>>
    %119 = vector.broadcast %118 : f32 to vector<2x16xf32>
    %120 = arith.mulf %119, %8 : vector<2x16xf32>
    %121 = arith.addf %117, %120 : vector<2x16xf32>
    %c37 = arith.constant 37 : index
    %122 = memref.load %arg2[%c37] : memref<48xf32, #tpu.memory_space<smem>>
    %123 = vector.broadcast %122 : f32 to vector<2x16xf32>
    %124 = arith.mulf %123, %32 : vector<2x16xf32>
    %125 = arith.addf %121, %124 : vector<2x16xf32>
    %c9 = arith.constant 9 : index
    %126 = memref.load %arg2[%c9] : memref<48xf32, #tpu.memory_space<smem>>
    %127 = vector.broadcast %126 : f32 to vector<2x16xf32>
    %128 = arith.mulf %127, %37 : vector<2x16xf32>
    %129 = arith.addf %125, %128 : vector<2x16xf32>
    %c25 = arith.constant 25 : index
    %130 = memref.load %arg2[%c25] : memref<48xf32, #tpu.memory_space<smem>>
    %131 = vector.broadcast %130 : f32 to vector<2x16xf32>
    %132 = arith.mulf %131, %10 : vector<2x16xf32>
    %133 = arith.addf %129, %132 : vector<2x16xf32>
    %c41 = arith.constant 41 : index
    %134 = memref.load %arg2[%c41] : memref<48xf32, #tpu.memory_space<smem>>
    %135 = vector.broadcast %134 : f32 to vector<2x16xf32>
    %136 = arith.mulf %135, %42 : vector<2x16xf32>
    %137 = arith.addf %133, %136 : vector<2x16xf32>
    %c13 = arith.constant 13 : index
    %138 = memref.load %arg2[%c13] : memref<48xf32, #tpu.memory_space<smem>>
    %139 = vector.broadcast %138 : f32 to vector<2x16xf32>
    %140 = arith.mulf %139, %47 : vector<2x16xf32>
    %141 = arith.addf %137, %140 : vector<2x16xf32>
    %c29 = arith.constant 29 : index
    %142 = memref.load %arg2[%c29] : memref<48xf32, #tpu.memory_space<smem>>
    %143 = vector.broadcast %142 : f32 to vector<2x16xf32>
    %144 = arith.mulf %143, %12 : vector<2x16xf32>
    %145 = arith.addf %141, %144 : vector<2x16xf32>
    %c45 = arith.constant 45 : index
    %146 = memref.load %arg2[%c45] : memref<48xf32, #tpu.memory_space<smem>>
    %147 = vector.broadcast %146 : f32 to vector<2x16xf32>
    %148 = arith.mulf %147, %52 : vector<2x16xf32>
    %149 = arith.addf %145, %148 : vector<2x16xf32>
    %c1_25 = arith.constant 1 : index
    %150 = memref.load %arg3[%c1_25] : memref<4xf32, #tpu.memory_space<smem>>
    %151 = vector.broadcast %150 : f32 to vector<2x16xf32>
    %152 = arith.addf %149, %151 : vector<2x16xf32>
    %c2_26 = arith.constant 2 : index
    %153 = memref.load %arg2[%c2_26] : memref<48xf32, #tpu.memory_space<smem>>
    %154 = vector.broadcast %153 : f32 to vector<2x16xf32>
    %155 = arith.mulf %154, %17 : vector<2x16xf32>
    %c18 = arith.constant 18 : index
    %156 = memref.load %arg2[%c18] : memref<48xf32, #tpu.memory_space<smem>>
    %157 = vector.broadcast %156 : f32 to vector<2x16xf32>
    %158 = arith.mulf %157, %6 : vector<2x16xf32>
    %159 = arith.addf %155, %158 : vector<2x16xf32>
    %c34 = arith.constant 34 : index
    %160 = memref.load %arg2[%c34] : memref<48xf32, #tpu.memory_space<smem>>
    %161 = vector.broadcast %160 : f32 to vector<2x16xf32>
    %162 = arith.mulf %161, %22 : vector<2x16xf32>
    %163 = arith.addf %159, %162 : vector<2x16xf32>
    %c6 = arith.constant 6 : index
    %164 = memref.load %arg2[%c6] : memref<48xf32, #tpu.memory_space<smem>>
    %165 = vector.broadcast %164 : f32 to vector<2x16xf32>
    %166 = arith.mulf %165, %27 : vector<2x16xf32>
    %167 = arith.addf %163, %166 : vector<2x16xf32>
    %c22 = arith.constant 22 : index
    %168 = memref.load %arg2[%c22] : memref<48xf32, #tpu.memory_space<smem>>
    %169 = vector.broadcast %168 : f32 to vector<2x16xf32>
    %170 = arith.mulf %169, %8 : vector<2x16xf32>
    %171 = arith.addf %167, %170 : vector<2x16xf32>
    %c38 = arith.constant 38 : index
    %172 = memref.load %arg2[%c38] : memref<48xf32, #tpu.memory_space<smem>>
    %173 = vector.broadcast %172 : f32 to vector<2x16xf32>
    %174 = arith.mulf %173, %32 : vector<2x16xf32>
    %175 = arith.addf %171, %174 : vector<2x16xf32>
    %c10 = arith.constant 10 : index
    %176 = memref.load %arg2[%c10] : memref<48xf32, #tpu.memory_space<smem>>
    %177 = vector.broadcast %176 : f32 to vector<2x16xf32>
    %178 = arith.mulf %177, %37 : vector<2x16xf32>
    %179 = arith.addf %175, %178 : vector<2x16xf32>
    %c26 = arith.constant 26 : index
    %180 = memref.load %arg2[%c26] : memref<48xf32, #tpu.memory_space<smem>>
    %181 = vector.broadcast %180 : f32 to vector<2x16xf32>
    %182 = arith.mulf %181, %10 : vector<2x16xf32>
    %183 = arith.addf %179, %182 : vector<2x16xf32>
    %c42 = arith.constant 42 : index
    %184 = memref.load %arg2[%c42] : memref<48xf32, #tpu.memory_space<smem>>
    %185 = vector.broadcast %184 : f32 to vector<2x16xf32>
    %186 = arith.mulf %185, %42 : vector<2x16xf32>
    %187 = arith.addf %183, %186 : vector<2x16xf32>
    %c14 = arith.constant 14 : index
    %188 = memref.load %arg2[%c14] : memref<48xf32, #tpu.memory_space<smem>>
    %189 = vector.broadcast %188 : f32 to vector<2x16xf32>
    %190 = arith.mulf %189, %47 : vector<2x16xf32>
    %191 = arith.addf %187, %190 : vector<2x16xf32>
    %c30 = arith.constant 30 : index
    %192 = memref.load %arg2[%c30] : memref<48xf32, #tpu.memory_space<smem>>
    %193 = vector.broadcast %192 : f32 to vector<2x16xf32>
    %194 = arith.mulf %193, %12 : vector<2x16xf32>
    %195 = arith.addf %191, %194 : vector<2x16xf32>
    %c46 = arith.constant 46 : index
    %196 = memref.load %arg2[%c46] : memref<48xf32, #tpu.memory_space<smem>>
    %197 = vector.broadcast %196 : f32 to vector<2x16xf32>
    %198 = arith.mulf %197, %52 : vector<2x16xf32>
    %199 = arith.addf %195, %198 : vector<2x16xf32>
    %c2_27 = arith.constant 2 : index
    %200 = memref.load %arg3[%c2_27] : memref<4xf32, #tpu.memory_space<smem>>
    %201 = vector.broadcast %200 : f32 to vector<2x16xf32>
    %202 = arith.addf %199, %201 : vector<2x16xf32>
    %c3_28 = arith.constant 3 : index
    %203 = memref.load %arg2[%c3_28] : memref<48xf32, #tpu.memory_space<smem>>
    %204 = vector.broadcast %203 : f32 to vector<2x16xf32>
    %205 = arith.mulf %204, %17 : vector<2x16xf32>
    %c19 = arith.constant 19 : index
    %206 = memref.load %arg2[%c19] : memref<48xf32, #tpu.memory_space<smem>>
    %207 = vector.broadcast %206 : f32 to vector<2x16xf32>
    %208 = arith.mulf %207, %6 : vector<2x16xf32>
    %209 = arith.addf %205, %208 : vector<2x16xf32>
    %c35 = arith.constant 35 : index
    %210 = memref.load %arg2[%c35] : memref<48xf32, #tpu.memory_space<smem>>
    %211 = vector.broadcast %210 : f32 to vector<2x16xf32>
    %212 = arith.mulf %211, %22 : vector<2x16xf32>
    %213 = arith.addf %209, %212 : vector<2x16xf32>
    %c7 = arith.constant 7 : index
    %214 = memref.load %arg2[%c7] : memref<48xf32, #tpu.memory_space<smem>>
    %215 = vector.broadcast %214 : f32 to vector<2x16xf32>
    %216 = arith.mulf %215, %27 : vector<2x16xf32>
    %217 = arith.addf %213, %216 : vector<2x16xf32>
    %c23 = arith.constant 23 : index
    %218 = memref.load %arg2[%c23] : memref<48xf32, #tpu.memory_space<smem>>
    %219 = vector.broadcast %218 : f32 to vector<2x16xf32>
    %220 = arith.mulf %219, %8 : vector<2x16xf32>
    %221 = arith.addf %217, %220 : vector<2x16xf32>
    %c39 = arith.constant 39 : index
    %222 = memref.load %arg2[%c39] : memref<48xf32, #tpu.memory_space<smem>>
    %223 = vector.broadcast %222 : f32 to vector<2x16xf32>
    %224 = arith.mulf %223, %32 : vector<2x16xf32>
    %225 = arith.addf %221, %224 : vector<2x16xf32>
    %c11 = arith.constant 11 : index
    %226 = memref.load %arg2[%c11] : memref<48xf32, #tpu.memory_space<smem>>
    %227 = vector.broadcast %226 : f32 to vector<2x16xf32>
    %228 = arith.mulf %227, %37 : vector<2x16xf32>
    %229 = arith.addf %225, %228 : vector<2x16xf32>
    %c27 = arith.constant 27 : index
    %230 = memref.load %arg2[%c27] : memref<48xf32, #tpu.memory_space<smem>>
    %231 = vector.broadcast %230 : f32 to vector<2x16xf32>
    %232 = arith.mulf %231, %10 : vector<2x16xf32>
    %233 = arith.addf %229, %232 : vector<2x16xf32>
    %c43 = arith.constant 43 : index
    %234 = memref.load %arg2[%c43] : memref<48xf32, #tpu.memory_space<smem>>
    %235 = vector.broadcast %234 : f32 to vector<2x16xf32>
    %236 = arith.mulf %235, %42 : vector<2x16xf32>
    %237 = arith.addf %233, %236 : vector<2x16xf32>
    %c15 = arith.constant 15 : index
    %238 = memref.load %arg2[%c15] : memref<48xf32, #tpu.memory_space<smem>>
    %239 = vector.broadcast %238 : f32 to vector<2x16xf32>
    %240 = arith.mulf %239, %47 : vector<2x16xf32>
    %241 = arith.addf %237, %240 : vector<2x16xf32>
    %c31 = arith.constant 31 : index
    %242 = memref.load %arg2[%c31] : memref<48xf32, #tpu.memory_space<smem>>
    %243 = vector.broadcast %242 : f32 to vector<2x16xf32>
    %244 = arith.mulf %243, %12 : vector<2x16xf32>
    %245 = arith.addf %241, %244 : vector<2x16xf32>
    %c47 = arith.constant 47 : index
    %246 = memref.load %arg2[%c47] : memref<48xf32, #tpu.memory_space<smem>>
    %247 = vector.broadcast %246 : f32 to vector<2x16xf32>
    %248 = arith.mulf %247, %52 : vector<2x16xf32>
    %249 = arith.addf %245, %248 : vector<2x16xf32>
    %c3_29 = arith.constant 3 : index
    %250 = memref.load %arg3[%c3_29] : memref<4xf32, #tpu.memory_space<smem>>
    %251 = vector.broadcast %250 : f32 to vector<2x16xf32>
    %252 = arith.addf %249, %251 : vector<2x16xf32>
    %cst_30 = arith.constant dense<0.000000e+00> : vector<16xf32>
    %253 = vector.multi_reduction <add>, %102, %cst_30 [0] : vector<2x16xf32> to vector<16xf32>
    %254 = vector.shape_cast %253 : vector<16xf32> to vector<1x16xf32>
    %cst_31 = arith.constant dense<0.000000e+00> : vector<16xf32>
    %255 = vector.multi_reduction <add>, %152, %cst_31 [0] : vector<2x16xf32> to vector<16xf32>
    %256 = vector.shape_cast %255 : vector<16xf32> to vector<1x16xf32>
    %cst_32 = arith.constant dense<0.000000e+00> : vector<16xf32>
    %257 = vector.multi_reduction <add>, %202, %cst_32 [0] : vector<2x16xf32> to vector<16xf32>
    %258 = vector.shape_cast %257 : vector<16xf32> to vector<1x16xf32>
    %cst_33 = arith.constant dense<0.000000e+00> : vector<16xf32>
    %259 = vector.multi_reduction <add>, %252, %cst_33 [0] : vector<2x16xf32> to vector<16xf32>
    %260 = vector.shape_cast %259 : vector<16xf32> to vector<1x16xf32>
    %261 = arith.mulf %102, %102 : vector<2x16xf32>
    %cst_34 = arith.constant dense<0.000000e+00> : vector<16xf32>
    %262 = vector.multi_reduction <add>, %261, %cst_34 [0] : vector<2x16xf32> to vector<16xf32>
    %263 = vector.shape_cast %262 : vector<16xf32> to vector<1x16xf32>
    %264 = arith.mulf %152, %152 : vector<2x16xf32>
    %cst_35 = arith.constant dense<0.000000e+00> : vector<16xf32>
    %265 = vector.multi_reduction <add>, %264, %cst_35 [0] : vector<2x16xf32> to vector<16xf32>
    %266 = vector.shape_cast %265 : vector<16xf32> to vector<1x16xf32>
    %267 = arith.mulf %202, %202 : vector<2x16xf32>
    %cst_36 = arith.constant dense<0.000000e+00> : vector<16xf32>
    %268 = vector.multi_reduction <add>, %267, %cst_36 [0] : vector<2x16xf32> to vector<16xf32>
    %269 = vector.shape_cast %268 : vector<16xf32> to vector<1x16xf32>
    %270 = arith.mulf %252, %252 : vector<2x16xf32>
    %cst_37 = arith.constant dense<0.000000e+00> : vector<16xf32>
    %271 = vector.multi_reduction <add>, %270, %cst_37 [0] : vector<2x16xf32> to vector<16xf32>
    %272 = vector.shape_cast %271 : vector<16xf32> to vector<1x16xf32>
    %273 = tpu.concatenate %254, %256, %258, %260, %263, %266, %269, %272 in 0 : vector<1x16xf32>, vector<1x16xf32>, vector<1x16xf32>, vector<1x16xf32>, vector<1x16xf32>, vector<1x16xf32>, vector<1x16xf32>, vector<1x16xf32> -> vector<8x16xf32>
    %cst_38 = arith.constant dense<0.000000e+00> : vector<8xf32>
    %274 = vector.multi_reduction <add>, %273, %cst_38 [1] : vector<8x16xf32> to vector<8xf32>
    %275 = vector.shape_cast %274 : vector<8xf32> to vector<8x1xf32>
    %276 = vector.shape_cast %275 : vector<8x1xf32> to vector<1x8x1xf32>
    %c0_39 = arith.constant 0 : index
    %c0_40 = arith.constant 0 : index
    %c0_41 = arith.constant 0 : index
    %277 = vector.load %arg4[%c0_39, %c0_40, %c0_41] : memref<1x8x1xf32, #tpu.memory_space<vmem>>, vector<1x8x1xf32>
    tpu.vector_store %arg4[%c0_39, %c0_40, %c0_41], %276 {strides = array<i32>} : memref<1x8x1xf32, #tpu.memory_space<vmem>>, vector<1x8x1xf32>,
    return
  }
  func.func @transform_0(%arg0: i32) -> (i32, i32, i32) {
    %c0_i32 = arith.constant 0 : i32
    %c0_i32_0 = arith.constant 0 : i32
    %c0_i32_1 = arith.constant 0 : i32
    return %arg0, %c0_i32, %c0_i32_0 : i32, i32, i32
  }
  func.func @transform_1(%arg0: i32) -> i32 {
    %c0_i32 = arith.constant 0 : i32
    %c0_i32_0 = arith.constant 0 : i32
    return %c0_i32 : i32
  }
  func.func @transform_2(%arg0: i32) -> i32 {
    %c0_i32 = arith.constant 0 : i32
    %c0_i32_0 = arith.constant 0 : i32
    return %c0_i32 : i32
  }
  func.func @transform_3(%arg0: i32) -> (i32, i32, i32) {
    %c0_i32 = arith.constant 0 : i32
    %c0_i32_0 = arith.constant 0 : i32
    %c0_i32_1 = arith.constant 0 : i32
    return %arg0, %c0_i32, %c0_i32_0 : i32, i32, i32
  }
}

module attributes {stable_mosaic.version = 11 : i64} {
  func.func @_bn2_stats_kernel(%arg0: i32, %arg1: memref<2x4x16xf32, #tpu.memory_space<vmem>>, %arg2: memref<48xf32, #tpu.memory_space<smem>>, %arg3: memref<4xf32, #tpu.memory_space<smem>>, %arg4: memref<8xf32, #tpu.memory_space<smem>>, %arg5: memref<48xf32, #tpu.memory_space<smem>>, %arg6: memref<4xf32, #tpu.memory_space<smem>>, %arg7: memref<1x8x1xf32, #tpu.memory_space<vmem>>) attributes {dimension_semantics = [#tpu.dimension_semantics<parallel>], iteration_bounds = array<i64: 1>, scalar_prefetch = 0 : i64, scratch_operands = 0 : i64, tpu.core_type = #tpu.core_type<tc>, window_params = [{transform_indices = @transform_0, window_bounds = array<i64: 2, 4, 16>}, {transform_indices = @transform_1, window_bounds = array<i64: 48>}, {transform_indices = @transform_2, window_bounds = array<i64: 4>}, {transform_indices = @transform_3, window_bounds = array<i64: 8>}, {transform_indices = @transform_4, window_bounds = array<i64: 48>}, {transform_indices = @transform_5, window_bounds = array<i64: 4>}, {transform_indices = @transform_6, window_bounds = array<i64: 1, 8, 1>}]} {
    %0 = tpu.iota {dimensions = array<i32: 1>} : vector<1x16xi32>
    %c0_i32 = arith.constant 0 : i32
    %1 = vector.broadcast %c0_i32 : i32 to vector<1x16xi32>
    %2 = arith.cmpi eq, %0, %1 : vector<1x16xi32>
    %c15_i32 = arith.constant 15 : i32
    %3 = vector.broadcast %c15_i32 : i32 to vector<1x16xi32>
    %4 = arith.cmpi eq, %0, %3 : vector<1x16xi32>
    %c0 = arith.constant 0 : index
    %c0_0 = arith.constant 0 : index
    %c0_1 = arith.constant 0 : index
    %5 = vector.load %arg1[%c0, %c0_0, %c0_1] : memref<2x4x16xf32, #tpu.memory_space<vmem>>, vector<2x1x16xf32>
    %6 = vector.shape_cast %5 : vector<2x1x16xf32> to vector<2x16xf32>
    %c0_2 = arith.constant 0 : index
    %c1 = arith.constant 1 : index
    %c0_3 = arith.constant 0 : index
    %7 = vector.load %arg1[%c0_2, %c1, %c0_3] : memref<2x4x16xf32, #tpu.memory_space<vmem>>, vector<2x1x16xf32>
    %8 = vector.shape_cast %7 : vector<2x1x16xf32> to vector<2x16xf32>
    %c0_4 = arith.constant 0 : index
    %c2 = arith.constant 2 : index
    %c0_5 = arith.constant 0 : index
    %9 = vector.load %arg1[%c0_4, %c2, %c0_5] : memref<2x4x16xf32, #tpu.memory_space<vmem>>, vector<2x1x16xf32>
    %10 = vector.shape_cast %9 : vector<2x1x16xf32> to vector<2x16xf32>
    %c0_6 = arith.constant 0 : index
    %c3 = arith.constant 3 : index
    %c0_7 = arith.constant 0 : index
    %11 = vector.load %arg1[%c0_6, %c3, %c0_7] : memref<2x4x16xf32, #tpu.memory_space<vmem>>, vector<2x1x16xf32>
    %12 = vector.shape_cast %11 : vector<2x1x16xf32> to vector<2x16xf32>
    %c1_i32 = arith.constant 1 : i32
    %13 = tpu.dynamic_rotate %6 by %c1_i32 dim 1 : vector<2x16xf32>, i32 -> vector<2x16xf32>
    %cst = arith.constant 0.000000e+00 : f32
    %14 = vector.shape_cast %2 : vector<1x16xi1> to vector<1x16xi1>
    %15 = vector.broadcast %14 : vector<1x16xi1> to vector<2x16xi1>
    %16 = vector.broadcast %cst : f32 to vector<2x16xf32>
    %17 = arith.select %15, %16, %13 : vector<2x16xi1>, vector<2x16xf32>
    %c15_i32_8 = arith.constant 15 : i32
    %18 = tpu.dynamic_rotate %6 by %c15_i32_8 dim 1 : vector<2x16xf32>, i32 -> vector<2x16xf32>
    %cst_9 = arith.constant 0.000000e+00 : f32
    %19 = vector.shape_cast %4 : vector<1x16xi1> to vector<1x16xi1>
    %20 = vector.broadcast %19 : vector<1x16xi1> to vector<2x16xi1>
    %21 = vector.broadcast %cst_9 : f32 to vector<2x16xf32>
    %22 = arith.select %20, %21, %18 : vector<2x16xi1>, vector<2x16xf32>
    %c1_i32_10 = arith.constant 1 : i32
    %23 = tpu.dynamic_rotate %8 by %c1_i32_10 dim 1 : vector<2x16xf32>, i32 -> vector<2x16xf32>
    %cst_11 = arith.constant 0.000000e+00 : f32
    %24 = vector.shape_cast %2 : vector<1x16xi1> to vector<1x16xi1>
    %25 = vector.broadcast %24 : vector<1x16xi1> to vector<2x16xi1>
    %26 = vector.broadcast %cst_11 : f32 to vector<2x16xf32>
    %27 = arith.select %25, %26, %23 : vector<2x16xi1>, vector<2x16xf32>
    %c15_i32_12 = arith.constant 15 : i32
    %28 = tpu.dynamic_rotate %8 by %c15_i32_12 dim 1 : vector<2x16xf32>, i32 -> vector<2x16xf32>
    %cst_13 = arith.constant 0.000000e+00 : f32
    %29 = vector.shape_cast %4 : vector<1x16xi1> to vector<1x16xi1>
    %30 = vector.broadcast %29 : vector<1x16xi1> to vector<2x16xi1>
    %31 = vector.broadcast %cst_13 : f32 to vector<2x16xf32>
    %32 = arith.select %30, %31, %28 : vector<2x16xi1>, vector<2x16xf32>
    %c1_i32_14 = arith.constant 1 : i32
    %33 = tpu.dynamic_rotate %10 by %c1_i32_14 dim 1 : vector<2x16xf32>, i32 -> vector<2x16xf32>
    %cst_15 = arith.constant 0.000000e+00 : f32
    %34 = vector.shape_cast %2 : vector<1x16xi1> to vector<1x16xi1>
    %35 = vector.broadcast %34 : vector<1x16xi1> to vector<2x16xi1>
    %36 = vector.broadcast %cst_15 : f32 to vector<2x16xf32>
    %37 = arith.select %35, %36, %33 : vector<2x16xi1>, vector<2x16xf32>
    %c15_i32_16 = arith.constant 15 : i32
    %38 = tpu.dynamic_rotate %10 by %c15_i32_16 dim 1 : vector<2x16xf32>, i32 -> vector<2x16xf32>
    %cst_17 = arith.constant 0.000000e+00 : f32
    %39 = vector.shape_cast %4 : vector<1x16xi1> to vector<1x16xi1>
    %40 = vector.broadcast %39 : vector<1x16xi1> to vector<2x16xi1>
    %41 = vector.broadcast %cst_17 : f32 to vector<2x16xf32>
    %42 = arith.select %40, %41, %38 : vector<2x16xi1>, vector<2x16xf32>
    %c1_i32_18 = arith.constant 1 : i32
    %43 = tpu.dynamic_rotate %12 by %c1_i32_18 dim 1 : vector<2x16xf32>, i32 -> vector<2x16xf32>
    %cst_19 = arith.constant 0.000000e+00 : f32
    %44 = vector.shape_cast %2 : vector<1x16xi1> to vector<1x16xi1>
    %45 = vector.broadcast %44 : vector<1x16xi1> to vector<2x16xi1>
    %46 = vector.broadcast %cst_19 : f32 to vector<2x16xf32>
    %47 = arith.select %45, %46, %43 : vector<2x16xi1>, vector<2x16xf32>
    %c15_i32_20 = arith.constant 15 : i32
    %48 = tpu.dynamic_rotate %12 by %c15_i32_20 dim 1 : vector<2x16xf32>, i32 -> vector<2x16xf32>
    %cst_21 = arith.constant 0.000000e+00 : f32
    %49 = vector.shape_cast %4 : vector<1x16xi1> to vector<1x16xi1>
    %50 = vector.broadcast %49 : vector<1x16xi1> to vector<2x16xi1>
    %51 = vector.broadcast %cst_21 : f32 to vector<2x16xf32>
    %52 = arith.select %50, %51, %48 : vector<2x16xi1>, vector<2x16xf32>
    %c0_22 = arith.constant 0 : index
    %53 = memref.load %arg2[%c0_22] : memref<48xf32, #tpu.memory_space<smem>>
    %54 = vector.broadcast %53 : f32 to vector<2x16xf32>
    %55 = arith.mulf %54, %17 : vector<2x16xf32>
    %c16 = arith.constant 16 : index
    %56 = memref.load %arg2[%c16] : memref<48xf32, #tpu.memory_space<smem>>
    %57 = vector.broadcast %56 : f32 to vector<2x16xf32>
    %58 = arith.mulf %57, %6 : vector<2x16xf32>
    %59 = arith.addf %55, %58 : vector<2x16xf32>
    %c32 = arith.constant 32 : index
    %60 = memref.load %arg2[%c32] : memref<48xf32, #tpu.memory_space<smem>>
    %61 = vector.broadcast %60 : f32 to vector<2x16xf32>
    %62 = arith.mulf %61, %22 : vector<2x16xf32>
    %63 = arith.addf %59, %62 : vector<2x16xf32>
    %c4 = arith.constant 4 : index
    %64 = memref.load %arg2[%c4] : memref<48xf32, #tpu.memory_space<smem>>
    %65 = vector.broadcast %64 : f32 to vector<2x16xf32>
    %66 = arith.mulf %65, %27 : vector<2x16xf32>
    %67 = arith.addf %63, %66 : vector<2x16xf32>
    %c20 = arith.constant 20 : index
    %68 = memref.load %arg2[%c20] : memref<48xf32, #tpu.memory_space<smem>>
    %69 = vector.broadcast %68 : f32 to vector<2x16xf32>
    %70 = arith.mulf %69, %8 : vector<2x16xf32>
    %71 = arith.addf %67, %70 : vector<2x16xf32>
    %c36 = arith.constant 36 : index
    %72 = memref.load %arg2[%c36] : memref<48xf32, #tpu.memory_space<smem>>
    %73 = vector.broadcast %72 : f32 to vector<2x16xf32>
    %74 = arith.mulf %73, %32 : vector<2x16xf32>
    %75 = arith.addf %71, %74 : vector<2x16xf32>
    %c8 = arith.constant 8 : index
    %76 = memref.load %arg2[%c8] : memref<48xf32, #tpu.memory_space<smem>>
    %77 = vector.broadcast %76 : f32 to vector<2x16xf32>
    %78 = arith.mulf %77, %37 : vector<2x16xf32>
    %79 = arith.addf %75, %78 : vector<2x16xf32>
    %c24 = arith.constant 24 : index
    %80 = memref.load %arg2[%c24] : memref<48xf32, #tpu.memory_space<smem>>
    %81 = vector.broadcast %80 : f32 to vector<2x16xf32>
    %82 = arith.mulf %81, %10 : vector<2x16xf32>
    %83 = arith.addf %79, %82 : vector<2x16xf32>
    %c40 = arith.constant 40 : index
    %84 = memref.load %arg2[%c40] : memref<48xf32, #tpu.memory_space<smem>>
    %85 = vector.broadcast %84 : f32 to vector<2x16xf32>
    %86 = arith.mulf %85, %42 : vector<2x16xf32>
    %87 = arith.addf %83, %86 : vector<2x16xf32>
    %c12 = arith.constant 12 : index
    %88 = memref.load %arg2[%c12] : memref<48xf32, #tpu.memory_space<smem>>
    %89 = vector.broadcast %88 : f32 to vector<2x16xf32>
    %90 = arith.mulf %89, %47 : vector<2x16xf32>
    %91 = arith.addf %87, %90 : vector<2x16xf32>
    %c28 = arith.constant 28 : index
    %92 = memref.load %arg2[%c28] : memref<48xf32, #tpu.memory_space<smem>>
    %93 = vector.broadcast %92 : f32 to vector<2x16xf32>
    %94 = arith.mulf %93, %12 : vector<2x16xf32>
    %95 = arith.addf %91, %94 : vector<2x16xf32>
    %c44 = arith.constant 44 : index
    %96 = memref.load %arg2[%c44] : memref<48xf32, #tpu.memory_space<smem>>
    %97 = vector.broadcast %96 : f32 to vector<2x16xf32>
    %98 = arith.mulf %97, %52 : vector<2x16xf32>
    %99 = arith.addf %95, %98 : vector<2x16xf32>
    %c0_23 = arith.constant 0 : index
    %100 = memref.load %arg3[%c0_23] : memref<4xf32, #tpu.memory_space<smem>>
    %101 = vector.broadcast %100 : f32 to vector<2x16xf32>
    %102 = arith.addf %99, %101 : vector<2x16xf32>
    %c1_24 = arith.constant 1 : index
    %103 = memref.load %arg2[%c1_24] : memref<48xf32, #tpu.memory_space<smem>>
    %104 = vector.broadcast %103 : f32 to vector<2x16xf32>
    %105 = arith.mulf %104, %17 : vector<2x16xf32>
    %c17 = arith.constant 17 : index
    %106 = memref.load %arg2[%c17] : memref<48xf32, #tpu.memory_space<smem>>
    %107 = vector.broadcast %106 : f32 to vector<2x16xf32>
    %108 = arith.mulf %107, %6 : vector<2x16xf32>
    %109 = arith.addf %105, %108 : vector<2x16xf32>
    %c33 = arith.constant 33 : index
    %110 = memref.load %arg2[%c33] : memref<48xf32, #tpu.memory_space<smem>>
    %111 = vector.broadcast %110 : f32 to vector<2x16xf32>
    %112 = arith.mulf %111, %22 : vector<2x16xf32>
    %113 = arith.addf %109, %112 : vector<2x16xf32>
    %c5 = arith.constant 5 : index
    %114 = memref.load %arg2[%c5] : memref<48xf32, #tpu.memory_space<smem>>
    %115 = vector.broadcast %114 : f32 to vector<2x16xf32>
    %116 = arith.mulf %115, %27 : vector<2x16xf32>
    %117 = arith.addf %113, %116 : vector<2x16xf32>
    %c21 = arith.constant 21 : index
    %118 = memref.load %arg2[%c21] : memref<48xf32, #tpu.memory_space<smem>>
    %119 = vector.broadcast %118 : f32 to vector<2x16xf32>
    %120 = arith.mulf %119, %8 : vector<2x16xf32>
    %121 = arith.addf %117, %120 : vector<2x16xf32>
    %c37 = arith.constant 37 : index
    %122 = memref.load %arg2[%c37] : memref<48xf32, #tpu.memory_space<smem>>
    %123 = vector.broadcast %122 : f32 to vector<2x16xf32>
    %124 = arith.mulf %123, %32 : vector<2x16xf32>
    %125 = arith.addf %121, %124 : vector<2x16xf32>
    %c9 = arith.constant 9 : index
    %126 = memref.load %arg2[%c9] : memref<48xf32, #tpu.memory_space<smem>>
    %127 = vector.broadcast %126 : f32 to vector<2x16xf32>
    %128 = arith.mulf %127, %37 : vector<2x16xf32>
    %129 = arith.addf %125, %128 : vector<2x16xf32>
    %c25 = arith.constant 25 : index
    %130 = memref.load %arg2[%c25] : memref<48xf32, #tpu.memory_space<smem>>
    %131 = vector.broadcast %130 : f32 to vector<2x16xf32>
    %132 = arith.mulf %131, %10 : vector<2x16xf32>
    %133 = arith.addf %129, %132 : vector<2x16xf32>
    %c41 = arith.constant 41 : index
    %134 = memref.load %arg2[%c41] : memref<48xf32, #tpu.memory_space<smem>>
    %135 = vector.broadcast %134 : f32 to vector<2x16xf32>
    %136 = arith.mulf %135, %42 : vector<2x16xf32>
    %137 = arith.addf %133, %136 : vector<2x16xf32>
    %c13 = arith.constant 13 : index
    %138 = memref.load %arg2[%c13] : memref<48xf32, #tpu.memory_space<smem>>
    %139 = vector.broadcast %138 : f32 to vector<2x16xf32>
    %140 = arith.mulf %139, %47 : vector<2x16xf32>
    %141 = arith.addf %137, %140 : vector<2x16xf32>
    %c29 = arith.constant 29 : index
    %142 = memref.load %arg2[%c29] : memref<48xf32, #tpu.memory_space<smem>>
    %143 = vector.broadcast %142 : f32 to vector<2x16xf32>
    %144 = arith.mulf %143, %12 : vector<2x16xf32>
    %145 = arith.addf %141, %144 : vector<2x16xf32>
    %c45 = arith.constant 45 : index
    %146 = memref.load %arg2[%c45] : memref<48xf32, #tpu.memory_space<smem>>
    %147 = vector.broadcast %146 : f32 to vector<2x16xf32>
    %148 = arith.mulf %147, %52 : vector<2x16xf32>
    %149 = arith.addf %145, %148 : vector<2x16xf32>
    %c1_25 = arith.constant 1 : index
    %150 = memref.load %arg3[%c1_25] : memref<4xf32, #tpu.memory_space<smem>>
    %151 = vector.broadcast %150 : f32 to vector<2x16xf32>
    %152 = arith.addf %149, %151 : vector<2x16xf32>
    %c2_26 = arith.constant 2 : index
    %153 = memref.load %arg2[%c2_26] : memref<48xf32, #tpu.memory_space<smem>>
    %154 = vector.broadcast %153 : f32 to vector<2x16xf32>
    %155 = arith.mulf %154, %17 : vector<2x16xf32>
    %c18 = arith.constant 18 : index
    %156 = memref.load %arg2[%c18] : memref<48xf32, #tpu.memory_space<smem>>
    %157 = vector.broadcast %156 : f32 to vector<2x16xf32>
    %158 = arith.mulf %157, %6 : vector<2x16xf32>
    %159 = arith.addf %155, %158 : vector<2x16xf32>
    %c34 = arith.constant 34 : index
    %160 = memref.load %arg2[%c34] : memref<48xf32, #tpu.memory_space<smem>>
    %161 = vector.broadcast %160 : f32 to vector<2x16xf32>
    %162 = arith.mulf %161, %22 : vector<2x16xf32>
    %163 = arith.addf %159, %162 : vector<2x16xf32>
    %c6 = arith.constant 6 : index
    %164 = memref.load %arg2[%c6] : memref<48xf32, #tpu.memory_space<smem>>
    %165 = vector.broadcast %164 : f32 to vector<2x16xf32>
    %166 = arith.mulf %165, %27 : vector<2x16xf32>
    %167 = arith.addf %163, %166 : vector<2x16xf32>
    %c22 = arith.constant 22 : index
    %168 = memref.load %arg2[%c22] : memref<48xf32, #tpu.memory_space<smem>>
    %169 = vector.broadcast %168 : f32 to vector<2x16xf32>
    %170 = arith.mulf %169, %8 : vector<2x16xf32>
    %171 = arith.addf %167, %170 : vector<2x16xf32>
    %c38 = arith.constant 38 : index
    %172 = memref.load %arg2[%c38] : memref<48xf32, #tpu.memory_space<smem>>
    %173 = vector.broadcast %172 : f32 to vector<2x16xf32>
    %174 = arith.mulf %173, %32 : vector<2x16xf32>
    %175 = arith.addf %171, %174 : vector<2x16xf32>
    %c10 = arith.constant 10 : index
    %176 = memref.load %arg2[%c10] : memref<48xf32, #tpu.memory_space<smem>>
    %177 = vector.broadcast %176 : f32 to vector<2x16xf32>
    %178 = arith.mulf %177, %37 : vector<2x16xf32>
    %179 = arith.addf %175, %178 : vector<2x16xf32>
    %c26 = arith.constant 26 : index
    %180 = memref.load %arg2[%c26] : memref<48xf32, #tpu.memory_space<smem>>
    %181 = vector.broadcast %180 : f32 to vector<2x16xf32>
    %182 = arith.mulf %181, %10 : vector<2x16xf32>
    %183 = arith.addf %179, %182 : vector<2x16xf32>
    %c42 = arith.constant 42 : index
    %184 = memref.load %arg2[%c42] : memref<48xf32, #tpu.memory_space<smem>>
    %185 = vector.broadcast %184 : f32 to vector<2x16xf32>
    %186 = arith.mulf %185, %42 : vector<2x16xf32>
    %187 = arith.addf %183, %186 : vector<2x16xf32>
    %c14 = arith.constant 14 : index
    %188 = memref.load %arg2[%c14] : memref<48xf32, #tpu.memory_space<smem>>
    %189 = vector.broadcast %188 : f32 to vector<2x16xf32>
    %190 = arith.mulf %189, %47 : vector<2x16xf32>
    %191 = arith.addf %187, %190 : vector<2x16xf32>
    %c30 = arith.constant 30 : index
    %192 = memref.load %arg2[%c30] : memref<48xf32, #tpu.memory_space<smem>>
    %193 = vector.broadcast %192 : f32 to vector<2x16xf32>
    %194 = arith.mulf %193, %12 : vector<2x16xf32>
    %195 = arith.addf %191, %194 : vector<2x16xf32>
    %c46 = arith.constant 46 : index
    %196 = memref.load %arg2[%c46] : memref<48xf32, #tpu.memory_space<smem>>
    %197 = vector.broadcast %196 : f32 to vector<2x16xf32>
    %198 = arith.mulf %197, %52 : vector<2x16xf32>
    %199 = arith.addf %195, %198 : vector<2x16xf32>
    %c2_27 = arith.constant 2 : index
    %200 = memref.load %arg3[%c2_27] : memref<4xf32, #tpu.memory_space<smem>>
    %201 = vector.broadcast %200 : f32 to vector<2x16xf32>
    %202 = arith.addf %199, %201 : vector<2x16xf32>
    %c3_28 = arith.constant 3 : index
    %203 = memref.load %arg2[%c3_28] : memref<48xf32, #tpu.memory_space<smem>>
    %204 = vector.broadcast %203 : f32 to vector<2x16xf32>
    %205 = arith.mulf %204, %17 : vector<2x16xf32>
    %c19 = arith.constant 19 : index
    %206 = memref.load %arg2[%c19] : memref<48xf32, #tpu.memory_space<smem>>
    %207 = vector.broadcast %206 : f32 to vector<2x16xf32>
    %208 = arith.mulf %207, %6 : vector<2x16xf32>
    %209 = arith.addf %205, %208 : vector<2x16xf32>
    %c35 = arith.constant 35 : index
    %210 = memref.load %arg2[%c35] : memref<48xf32, #tpu.memory_space<smem>>
    %211 = vector.broadcast %210 : f32 to vector<2x16xf32>
    %212 = arith.mulf %211, %22 : vector<2x16xf32>
    %213 = arith.addf %209, %212 : vector<2x16xf32>
    %c7 = arith.constant 7 : index
    %214 = memref.load %arg2[%c7] : memref<48xf32, #tpu.memory_space<smem>>
    %215 = vector.broadcast %214 : f32 to vector<2x16xf32>
    %216 = arith.mulf %215, %27 : vector<2x16xf32>
    %217 = arith.addf %213, %216 : vector<2x16xf32>
    %c23 = arith.constant 23 : index
    %218 = memref.load %arg2[%c23] : memref<48xf32, #tpu.memory_space<smem>>
    %219 = vector.broadcast %218 : f32 to vector<2x16xf32>
    %220 = arith.mulf %219, %8 : vector<2x16xf32>
    %221 = arith.addf %217, %220 : vector<2x16xf32>
    %c39 = arith.constant 39 : index
    %222 = memref.load %arg2[%c39] : memref<48xf32, #tpu.memory_space<smem>>
    %223 = vector.broadcast %222 : f32 to vector<2x16xf32>
    %224 = arith.mulf %223, %32 : vector<2x16xf32>
    %225 = arith.addf %221, %224 : vector<2x16xf32>
    %c11 = arith.constant 11 : index
    %226 = memref.load %arg2[%c11] : memref<48xf32, #tpu.memory_space<smem>>
    %227 = vector.broadcast %226 : f32 to vector<2x16xf32>
    %228 = arith.mulf %227, %37 : vector<2x16xf32>
    %229 = arith.addf %225, %228 : vector<2x16xf32>
    %c27 = arith.constant 27 : index
    %230 = memref.load %arg2[%c27] : memref<48xf32, #tpu.memory_space<smem>>
    %231 = vector.broadcast %230 : f32 to vector<2x16xf32>
    %232 = arith.mulf %231, %10 : vector<2x16xf32>
    %233 = arith.addf %229, %232 : vector<2x16xf32>
    %c43 = arith.constant 43 : index
    %234 = memref.load %arg2[%c43] : memref<48xf32, #tpu.memory_space<smem>>
    %235 = vector.broadcast %234 : f32 to vector<2x16xf32>
    %236 = arith.mulf %235, %42 : vector<2x16xf32>
    %237 = arith.addf %233, %236 : vector<2x16xf32>
    %c15 = arith.constant 15 : index
    %238 = memref.load %arg2[%c15] : memref<48xf32, #tpu.memory_space<smem>>
    %239 = vector.broadcast %238 : f32 to vector<2x16xf32>
    %240 = arith.mulf %239, %47 : vector<2x16xf32>
    %241 = arith.addf %237, %240 : vector<2x16xf32>
    %c31 = arith.constant 31 : index
    %242 = memref.load %arg2[%c31] : memref<48xf32, #tpu.memory_space<smem>>
    %243 = vector.broadcast %242 : f32 to vector<2x16xf32>
    %244 = arith.mulf %243, %12 : vector<2x16xf32>
    %245 = arith.addf %241, %244 : vector<2x16xf32>
    %c47 = arith.constant 47 : index
    %246 = memref.load %arg2[%c47] : memref<48xf32, #tpu.memory_space<smem>>
    %247 = vector.broadcast %246 : f32 to vector<2x16xf32>
    %248 = arith.mulf %247, %52 : vector<2x16xf32>
    %249 = arith.addf %245, %248 : vector<2x16xf32>
    %c3_29 = arith.constant 3 : index
    %250 = memref.load %arg3[%c3_29] : memref<4xf32, #tpu.memory_space<smem>>
    %251 = vector.broadcast %250 : f32 to vector<2x16xf32>
    %252 = arith.addf %249, %251 : vector<2x16xf32>
    %c0_30 = arith.constant 0 : index
    %253 = memref.load %arg4[%c0_30] : memref<8xf32, #tpu.memory_space<smem>>
    %254 = vector.broadcast %253 : f32 to vector<2x16xf32>
    %255 = arith.mulf %102, %254 : vector<2x16xf32>
    %c4_31 = arith.constant 4 : index
    %256 = memref.load %arg4[%c4_31] : memref<8xf32, #tpu.memory_space<smem>>
    %257 = vector.broadcast %256 : f32 to vector<2x16xf32>
    %258 = arith.addf %255, %257 : vector<2x16xf32>
    %cst_32 = arith.constant 0.000000e+00 : f32
    %259 = vector.broadcast %cst_32 : f32 to vector<2x16xf32>
    %260 = arith.maximumf %258, %259 : vector<2x16xf32>
    %c1_33 = arith.constant 1 : index
    %261 = memref.load %arg4[%c1_33] : memref<8xf32, #tpu.memory_space<smem>>
    %262 = vector.broadcast %261 : f32 to vector<2x16xf32>
    %263 = arith.mulf %152, %262 : vector<2x16xf32>
    %c5_34 = arith.constant 5 : index
    %264 = memref.load %arg4[%c5_34] : memref<8xf32, #tpu.memory_space<smem>>
    %265 = vector.broadcast %264 : f32 to vector<2x16xf32>
    %266 = arith.addf %263, %265 : vector<2x16xf32>
    %cst_35 = arith.constant 0.000000e+00 : f32
    %267 = vector.broadcast %cst_35 : f32 to vector<2x16xf32>
    %268 = arith.maximumf %266, %267 : vector<2x16xf32>
    %c2_36 = arith.constant 2 : index
    %269 = memref.load %arg4[%c2_36] : memref<8xf32, #tpu.memory_space<smem>>
    %270 = vector.broadcast %269 : f32 to vector<2x16xf32>
    %271 = arith.mulf %202, %270 : vector<2x16xf32>
    %c6_37 = arith.constant 6 : index
    %272 = memref.load %arg4[%c6_37] : memref<8xf32, #tpu.memory_space<smem>>
    %273 = vector.broadcast %272 : f32 to vector<2x16xf32>
    %274 = arith.addf %271, %273 : vector<2x16xf32>
    %cst_38 = arith.constant 0.000000e+00 : f32
    %275 = vector.broadcast %cst_38 : f32 to vector<2x16xf32>
    %276 = arith.maximumf %274, %275 : vector<2x16xf32>
    %c3_39 = arith.constant 3 : index
    %277 = memref.load %arg4[%c3_39] : memref<8xf32, #tpu.memory_space<smem>>
    %278 = vector.broadcast %277 : f32 to vector<2x16xf32>
    %279 = arith.mulf %252, %278 : vector<2x16xf32>
    %c7_40 = arith.constant 7 : index
    %280 = memref.load %arg4[%c7_40] : memref<8xf32, #tpu.memory_space<smem>>
    %281 = vector.broadcast %280 : f32 to vector<2x16xf32>
    %282 = arith.addf %279, %281 : vector<2x16xf32>
    %cst_41 = arith.constant 0.000000e+00 : f32
    %283 = vector.broadcast %cst_41 : f32 to vector<2x16xf32>
    %284 = arith.maximumf %282, %283 : vector<2x16xf32>
    %c1_i32_42 = arith.constant 1 : i32
    %285 = tpu.dynamic_rotate %260 by %c1_i32_42 dim 1 : vector<2x16xf32>, i32 -> vector<2x16xf32>
    %cst_43 = arith.constant 0.000000e+00 : f32
    %286 = vector.shape_cast %2 : vector<1x16xi1> to vector<1x16xi1>
    %287 = vector.broadcast %286 : vector<1x16xi1> to vector<2x16xi1>
    %288 = vector.broadcast %cst_43 : f32 to vector<2x16xf32>
    %289 = arith.select %287, %288, %285 : vector<2x16xi1>, vector<2x16xf32>
    %c15_i32_44 = arith.constant 15 : i32
    %290 = tpu.dynamic_rotate %260 by %c15_i32_44 dim 1 : vector<2x16xf32>, i32 -> vector<2x16xf32>
    %cst_45 = arith.constant 0.000000e+00 : f32
    %291 = vector.shape_cast %4 : vector<1x16xi1> to vector<1x16xi1>
    %292 = vector.broadcast %291 : vector<1x16xi1> to vector<2x16xi1>
    %293 = vector.broadcast %cst_45 : f32 to vector<2x16xf32>
    %294 = arith.select %292, %293, %290 : vector<2x16xi1>, vector<2x16xf32>
    %c1_i32_46 = arith.constant 1 : i32
    %295 = tpu.dynamic_rotate %268 by %c1_i32_46 dim 1 : vector<2x16xf32>, i32 -> vector<2x16xf32>
    %cst_47 = arith.constant 0.000000e+00 : f32
    %296 = vector.shape_cast %2 : vector<1x16xi1> to vector<1x16xi1>
    %297 = vector.broadcast %296 : vector<1x16xi1> to vector<2x16xi1>
    %298 = vector.broadcast %cst_47 : f32 to vector<2x16xf32>
    %299 = arith.select %297, %298, %295 : vector<2x16xi1>, vector<2x16xf32>
    %c15_i32_48 = arith.constant 15 : i32
    %300 = tpu.dynamic_rotate %268 by %c15_i32_48 dim 1 : vector<2x16xf32>, i32 -> vector<2x16xf32>
    %cst_49 = arith.constant 0.000000e+00 : f32
    %301 = vector.shape_cast %4 : vector<1x16xi1> to vector<1x16xi1>
    %302 = vector.broadcast %301 : vector<1x16xi1> to vector<2x16xi1>
    %303 = vector.broadcast %cst_49 : f32 to vector<2x16xf32>
    %304 = arith.select %302, %303, %300 : vector<2x16xi1>, vector<2x16xf32>
    %c1_i32_50 = arith.constant 1 : i32
    %305 = tpu.dynamic_rotate %276 by %c1_i32_50 dim 1 : vector<2x16xf32>, i32 -> vector<2x16xf32>
    %cst_51 = arith.constant 0.000000e+00 : f32
    %306 = vector.shape_cast %2 : vector<1x16xi1> to vector<1x16xi1>
    %307 = vector.broadcast %306 : vector<1x16xi1> to vector<2x16xi1>
    %308 = vector.broadcast %cst_51 : f32 to vector<2x16xf32>
    %309 = arith.select %307, %308, %305 : vector<2x16xi1>, vector<2x16xf32>
    %c15_i32_52 = arith.constant 15 : i32
    %310 = tpu.dynamic_rotate %276 by %c15_i32_52 dim 1 : vector<2x16xf32>, i32 -> vector<2x16xf32>
    %cst_53 = arith.constant 0.000000e+00 : f32
    %311 = vector.shape_cast %4 : vector<1x16xi1> to vector<1x16xi1>
    %312 = vector.broadcast %311 : vector<1x16xi1> to vector<2x16xi1>
    %313 = vector.broadcast %cst_53 : f32 to vector<2x16xf32>
    %314 = arith.select %312, %313, %310 : vector<2x16xi1>, vector<2x16xf32>
    %c1_i32_54 = arith.constant 1 : i32
    %315 = tpu.dynamic_rotate %284 by %c1_i32_54 dim 1 : vector<2x16xf32>, i32 -> vector<2x16xf32>
    %cst_55 = arith.constant 0.000000e+00 : f32
    %316 = vector.shape_cast %2 : vector<1x16xi1> to vector<1x16xi1>
    %317 = vector.broadcast %316 : vector<1x16xi1> to vector<2x16xi1>
    %318 = vector.broadcast %cst_55 : f32 to vector<2x16xf32>
    %319 = arith.select %317, %318, %315 : vector<2x16xi1>, vector<2x16xf32>
    %c15_i32_56 = arith.constant 15 : i32
    %320 = tpu.dynamic_rotate %284 by %c15_i32_56 dim 1 : vector<2x16xf32>, i32 -> vector<2x16xf32>
    %cst_57 = arith.constant 0.000000e+00 : f32
    %321 = vector.shape_cast %4 : vector<1x16xi1> to vector<1x16xi1>
    %322 = vector.broadcast %321 : vector<1x16xi1> to vector<2x16xi1>
    %323 = vector.broadcast %cst_57 : f32 to vector<2x16xf32>
    %324 = arith.select %322, %323, %320 : vector<2x16xi1>, vector<2x16xf32>
    %c0_58 = arith.constant 0 : index
    %325 = memref.load %arg5[%c0_58] : memref<48xf32, #tpu.memory_space<smem>>
    %326 = vector.broadcast %325 : f32 to vector<2x16xf32>
    %327 = arith.mulf %326, %289 : vector<2x16xf32>
    %c16_59 = arith.constant 16 : index
    %328 = memref.load %arg5[%c16_59] : memref<48xf32, #tpu.memory_space<smem>>
    %329 = vector.broadcast %328 : f32 to vector<2x16xf32>
    %330 = arith.mulf %329, %260 : vector<2x16xf32>
    %331 = arith.addf %327, %330 : vector<2x16xf32>
    %c32_60 = arith.constant 32 : index
    %332 = memref.load %arg5[%c32_60] : memref<48xf32, #tpu.memory_space<smem>>
    %333 = vector.broadcast %332 : f32 to vector<2x16xf32>
    %334 = arith.mulf %333, %294 : vector<2x16xf32>
    %335 = arith.addf %331, %334 : vector<2x16xf32>
    %c4_61 = arith.constant 4 : index
    %336 = memref.load %arg5[%c4_61] : memref<48xf32, #tpu.memory_space<smem>>
    %337 = vector.broadcast %336 : f32 to vector<2x16xf32>
    %338 = arith.mulf %337, %299 : vector<2x16xf32>
    %339 = arith.addf %335, %338 : vector<2x16xf32>
    %c20_62 = arith.constant 20 : index
    %340 = memref.load %arg5[%c20_62] : memref<48xf32, #tpu.memory_space<smem>>
    %341 = vector.broadcast %340 : f32 to vector<2x16xf32>
    %342 = arith.mulf %341, %268 : vector<2x16xf32>
    %343 = arith.addf %339, %342 : vector<2x16xf32>
    %c36_63 = arith.constant 36 : index
    %344 = memref.load %arg5[%c36_63] : memref<48xf32, #tpu.memory_space<smem>>
    %345 = vector.broadcast %344 : f32 to vector<2x16xf32>
    %346 = arith.mulf %345, %304 : vector<2x16xf32>
    %347 = arith.addf %343, %346 : vector<2x16xf32>
    %c8_64 = arith.constant 8 : index
    %348 = memref.load %arg5[%c8_64] : memref<48xf32, #tpu.memory_space<smem>>
    %349 = vector.broadcast %348 : f32 to vector<2x16xf32>
    %350 = arith.mulf %349, %309 : vector<2x16xf32>
    %351 = arith.addf %347, %350 : vector<2x16xf32>
    %c24_65 = arith.constant 24 : index
    %352 = memref.load %arg5[%c24_65] : memref<48xf32, #tpu.memory_space<smem>>
    %353 = vector.broadcast %352 : f32 to vector<2x16xf32>
    %354 = arith.mulf %353, %276 : vector<2x16xf32>
    %355 = arith.addf %351, %354 : vector<2x16xf32>
    %c40_66 = arith.constant 40 : index
    %356 = memref.load %arg5[%c40_66] : memref<48xf32, #tpu.memory_space<smem>>
    %357 = vector.broadcast %356 : f32 to vector<2x16xf32>
    %358 = arith.mulf %357, %314 : vector<2x16xf32>
    %359 = arith.addf %355, %358 : vector<2x16xf32>
    %c12_67 = arith.constant 12 : index
    %360 = memref.load %arg5[%c12_67] : memref<48xf32, #tpu.memory_space<smem>>
    %361 = vector.broadcast %360 : f32 to vector<2x16xf32>
    %362 = arith.mulf %361, %319 : vector<2x16xf32>
    %363 = arith.addf %359, %362 : vector<2x16xf32>
    %c28_68 = arith.constant 28 : index
    %364 = memref.load %arg5[%c28_68] : memref<48xf32, #tpu.memory_space<smem>>
    %365 = vector.broadcast %364 : f32 to vector<2x16xf32>
    %366 = arith.mulf %365, %284 : vector<2x16xf32>
    %367 = arith.addf %363, %366 : vector<2x16xf32>
    %c44_69 = arith.constant 44 : index
    %368 = memref.load %arg5[%c44_69] : memref<48xf32, #tpu.memory_space<smem>>
    %369 = vector.broadcast %368 : f32 to vector<2x16xf32>
    %370 = arith.mulf %369, %324 : vector<2x16xf32>
    %371 = arith.addf %367, %370 : vector<2x16xf32>
    %c0_70 = arith.constant 0 : index
    %372 = memref.load %arg6[%c0_70] : memref<4xf32, #tpu.memory_space<smem>>
    %373 = vector.broadcast %372 : f32 to vector<2x16xf32>
    %374 = arith.addf %371, %373 : vector<2x16xf32>
    %c1_71 = arith.constant 1 : index
    %375 = memref.load %arg5[%c1_71] : memref<48xf32, #tpu.memory_space<smem>>
    %376 = vector.broadcast %375 : f32 to vector<2x16xf32>
    %377 = arith.mulf %376, %289 : vector<2x16xf32>
    %c17_72 = arith.constant 17 : index
    %378 = memref.load %arg5[%c17_72] : memref<48xf32, #tpu.memory_space<smem>>
    %379 = vector.broadcast %378 : f32 to vector<2x16xf32>
    %380 = arith.mulf %379, %260 : vector<2x16xf32>
    %381 = arith.addf %377, %380 : vector<2x16xf32>
    %c33_73 = arith.constant 33 : index
    %382 = memref.load %arg5[%c33_73] : memref<48xf32, #tpu.memory_space<smem>>
    %383 = vector.broadcast %382 : f32 to vector<2x16xf32>
    %384 = arith.mulf %383, %294 : vector<2x16xf32>
    %385 = arith.addf %381, %384 : vector<2x16xf32>
    %c5_74 = arith.constant 5 : index
    %386 = memref.load %arg5[%c5_74] : memref<48xf32, #tpu.memory_space<smem>>
    %387 = vector.broadcast %386 : f32 to vector<2x16xf32>
    %388 = arith.mulf %387, %299 : vector<2x16xf32>
    %389 = arith.addf %385, %388 : vector<2x16xf32>
    %c21_75 = arith.constant 21 : index
    %390 = memref.load %arg5[%c21_75] : memref<48xf32, #tpu.memory_space<smem>>
    %391 = vector.broadcast %390 : f32 to vector<2x16xf32>
    %392 = arith.mulf %391, %268 : vector<2x16xf32>
    %393 = arith.addf %389, %392 : vector<2x16xf32>
    %c37_76 = arith.constant 37 : index
    %394 = memref.load %arg5[%c37_76] : memref<48xf32, #tpu.memory_space<smem>>
    %395 = vector.broadcast %394 : f32 to vector<2x16xf32>
    %396 = arith.mulf %395, %304 : vector<2x16xf32>
    %397 = arith.addf %393, %396 : vector<2x16xf32>
    %c9_77 = arith.constant 9 : index
    %398 = memref.load %arg5[%c9_77] : memref<48xf32, #tpu.memory_space<smem>>
    %399 = vector.broadcast %398 : f32 to vector<2x16xf32>
    %400 = arith.mulf %399, %309 : vector<2x16xf32>
    %401 = arith.addf %397, %400 : vector<2x16xf32>
    %c25_78 = arith.constant 25 : index
    %402 = memref.load %arg5[%c25_78] : memref<48xf32, #tpu.memory_space<smem>>
    %403 = vector.broadcast %402 : f32 to vector<2x16xf32>
    %404 = arith.mulf %403, %276 : vector<2x16xf32>
    %405 = arith.addf %401, %404 : vector<2x16xf32>
    %c41_79 = arith.constant 41 : index
    %406 = memref.load %arg5[%c41_79] : memref<48xf32, #tpu.memory_space<smem>>
    %407 = vector.broadcast %406 : f32 to vector<2x16xf32>
    %408 = arith.mulf %407, %314 : vector<2x16xf32>
    %409 = arith.addf %405, %408 : vector<2x16xf32>
    %c13_80 = arith.constant 13 : index
    %410 = memref.load %arg5[%c13_80] : memref<48xf32, #tpu.memory_space<smem>>
    %411 = vector.broadcast %410 : f32 to vector<2x16xf32>
    %412 = arith.mulf %411, %319 : vector<2x16xf32>
    %413 = arith.addf %409, %412 : vector<2x16xf32>
    %c29_81 = arith.constant 29 : index
    %414 = memref.load %arg5[%c29_81] : memref<48xf32, #tpu.memory_space<smem>>
    %415 = vector.broadcast %414 : f32 to vector<2x16xf32>
    %416 = arith.mulf %415, %284 : vector<2x16xf32>
    %417 = arith.addf %413, %416 : vector<2x16xf32>
    %c45_82 = arith.constant 45 : index
    %418 = memref.load %arg5[%c45_82] : memref<48xf32, #tpu.memory_space<smem>>
    %419 = vector.broadcast %418 : f32 to vector<2x16xf32>
    %420 = arith.mulf %419, %324 : vector<2x16xf32>
    %421 = arith.addf %417, %420 : vector<2x16xf32>
    %c1_83 = arith.constant 1 : index
    %422 = memref.load %arg6[%c1_83] : memref<4xf32, #tpu.memory_space<smem>>
    %423 = vector.broadcast %422 : f32 to vector<2x16xf32>
    %424 = arith.addf %421, %423 : vector<2x16xf32>
    %c2_84 = arith.constant 2 : index
    %425 = memref.load %arg5[%c2_84] : memref<48xf32, #tpu.memory_space<smem>>
    %426 = vector.broadcast %425 : f32 to vector<2x16xf32>
    %427 = arith.mulf %426, %289 : vector<2x16xf32>
    %c18_85 = arith.constant 18 : index
    %428 = memref.load %arg5[%c18_85] : memref<48xf32, #tpu.memory_space<smem>>
    %429 = vector.broadcast %428 : f32 to vector<2x16xf32>
    %430 = arith.mulf %429, %260 : vector<2x16xf32>
    %431 = arith.addf %427, %430 : vector<2x16xf32>
    %c34_86 = arith.constant 34 : index
    %432 = memref.load %arg5[%c34_86] : memref<48xf32, #tpu.memory_space<smem>>
    %433 = vector.broadcast %432 : f32 to vector<2x16xf32>
    %434 = arith.mulf %433, %294 : vector<2x16xf32>
    %435 = arith.addf %431, %434 : vector<2x16xf32>
    %c6_87 = arith.constant 6 : index
    %436 = memref.load %arg5[%c6_87] : memref<48xf32, #tpu.memory_space<smem>>
    %437 = vector.broadcast %436 : f32 to vector<2x16xf32>
    %438 = arith.mulf %437, %299 : vector<2x16xf32>
    %439 = arith.addf %435, %438 : vector<2x16xf32>
    %c22_88 = arith.constant 22 : index
    %440 = memref.load %arg5[%c22_88] : memref<48xf32, #tpu.memory_space<smem>>
    %441 = vector.broadcast %440 : f32 to vector<2x16xf32>
    %442 = arith.mulf %441, %268 : vector<2x16xf32>
    %443 = arith.addf %439, %442 : vector<2x16xf32>
    %c38_89 = arith.constant 38 : index
    %444 = memref.load %arg5[%c38_89] : memref<48xf32, #tpu.memory_space<smem>>
    %445 = vector.broadcast %444 : f32 to vector<2x16xf32>
    %446 = arith.mulf %445, %304 : vector<2x16xf32>
    %447 = arith.addf %443, %446 : vector<2x16xf32>
    %c10_90 = arith.constant 10 : index
    %448 = memref.load %arg5[%c10_90] : memref<48xf32, #tpu.memory_space<smem>>
    %449 = vector.broadcast %448 : f32 to vector<2x16xf32>
    %450 = arith.mulf %449, %309 : vector<2x16xf32>
    %451 = arith.addf %447, %450 : vector<2x16xf32>
    %c26_91 = arith.constant 26 : index
    %452 = memref.load %arg5[%c26_91] : memref<48xf32, #tpu.memory_space<smem>>
    %453 = vector.broadcast %452 : f32 to vector<2x16xf32>
    %454 = arith.mulf %453, %276 : vector<2x16xf32>
    %455 = arith.addf %451, %454 : vector<2x16xf32>
    %c42_92 = arith.constant 42 : index
    %456 = memref.load %arg5[%c42_92] : memref<48xf32, #tpu.memory_space<smem>>
    %457 = vector.broadcast %456 : f32 to vector<2x16xf32>
    %458 = arith.mulf %457, %314 : vector<2x16xf32>
    %459 = arith.addf %455, %458 : vector<2x16xf32>
    %c14_93 = arith.constant 14 : index
    %460 = memref.load %arg5[%c14_93] : memref<48xf32, #tpu.memory_space<smem>>
    %461 = vector.broadcast %460 : f32 to vector<2x16xf32>
    %462 = arith.mulf %461, %319 : vector<2x16xf32>
    %463 = arith.addf %459, %462 : vector<2x16xf32>
    %c30_94 = arith.constant 30 : index
    %464 = memref.load %arg5[%c30_94] : memref<48xf32, #tpu.memory_space<smem>>
    %465 = vector.broadcast %464 : f32 to vector<2x16xf32>
    %466 = arith.mulf %465, %284 : vector<2x16xf32>
    %467 = arith.addf %463, %466 : vector<2x16xf32>
    %c46_95 = arith.constant 46 : index
    %468 = memref.load %arg5[%c46_95] : memref<48xf32, #tpu.memory_space<smem>>
    %469 = vector.broadcast %468 : f32 to vector<2x16xf32>
    %470 = arith.mulf %469, %324 : vector<2x16xf32>
    %471 = arith.addf %467, %470 : vector<2x16xf32>
    %c2_96 = arith.constant 2 : index
    %472 = memref.load %arg6[%c2_96] : memref<4xf32, #tpu.memory_space<smem>>
    %473 = vector.broadcast %472 : f32 to vector<2x16xf32>
    %474 = arith.addf %471, %473 : vector<2x16xf32>
    %c3_97 = arith.constant 3 : index
    %475 = memref.load %arg5[%c3_97] : memref<48xf32, #tpu.memory_space<smem>>
    %476 = vector.broadcast %475 : f32 to vector<2x16xf32>
    %477 = arith.mulf %476, %289 : vector<2x16xf32>
    %c19_98 = arith.constant 19 : index
    %478 = memref.load %arg5[%c19_98] : memref<48xf32, #tpu.memory_space<smem>>
    %479 = vector.broadcast %478 : f32 to vector<2x16xf32>
    %480 = arith.mulf %479, %260 : vector<2x16xf32>
    %481 = arith.addf %477, %480 : vector<2x16xf32>
    %c35_99 = arith.constant 35 : index
    %482 = memref.load %arg5[%c35_99] : memref<48xf32, #tpu.memory_space<smem>>
    %483 = vector.broadcast %482 : f32 to vector<2x16xf32>
    %484 = arith.mulf %483, %294 : vector<2x16xf32>
    %485 = arith.addf %481, %484 : vector<2x16xf32>
    %c7_100 = arith.constant 7 : index
    %486 = memref.load %arg5[%c7_100] : memref<48xf32, #tpu.memory_space<smem>>
    %487 = vector.broadcast %486 : f32 to vector<2x16xf32>
    %488 = arith.mulf %487, %299 : vector<2x16xf32>
    %489 = arith.addf %485, %488 : vector<2x16xf32>
    %c23_101 = arith.constant 23 : index
    %490 = memref.load %arg5[%c23_101] : memref<48xf32, #tpu.memory_space<smem>>
    %491 = vector.broadcast %490 : f32 to vector<2x16xf32>
    %492 = arith.mulf %491, %268 : vector<2x16xf32>
    %493 = arith.addf %489, %492 : vector<2x16xf32>
    %c39_102 = arith.constant 39 : index
    %494 = memref.load %arg5[%c39_102] : memref<48xf32, #tpu.memory_space<smem>>
    %495 = vector.broadcast %494 : f32 to vector<2x16xf32>
    %496 = arith.mulf %495, %304 : vector<2x16xf32>
    %497 = arith.addf %493, %496 : vector<2x16xf32>
    %c11_103 = arith.constant 11 : index
    %498 = memref.load %arg5[%c11_103] : memref<48xf32, #tpu.memory_space<smem>>
    %499 = vector.broadcast %498 : f32 to vector<2x16xf32>
    %500 = arith.mulf %499, %309 : vector<2x16xf32>
    %501 = arith.addf %497, %500 : vector<2x16xf32>
    %c27_104 = arith.constant 27 : index
    %502 = memref.load %arg5[%c27_104] : memref<48xf32, #tpu.memory_space<smem>>
    %503 = vector.broadcast %502 : f32 to vector<2x16xf32>
    %504 = arith.mulf %503, %276 : vector<2x16xf32>
    %505 = arith.addf %501, %504 : vector<2x16xf32>
    %c43_105 = arith.constant 43 : index
    %506 = memref.load %arg5[%c43_105] : memref<48xf32, #tpu.memory_space<smem>>
    %507 = vector.broadcast %506 : f32 to vector<2x16xf32>
    %508 = arith.mulf %507, %314 : vector<2x16xf32>
    %509 = arith.addf %505, %508 : vector<2x16xf32>
    %c15_106 = arith.constant 15 : index
    %510 = memref.load %arg5[%c15_106] : memref<48xf32, #tpu.memory_space<smem>>
    %511 = vector.broadcast %510 : f32 to vector<2x16xf32>
    %512 = arith.mulf %511, %319 : vector<2x16xf32>
    %513 = arith.addf %509, %512 : vector<2x16xf32>
    %c31_107 = arith.constant 31 : index
    %514 = memref.load %arg5[%c31_107] : memref<48xf32, #tpu.memory_space<smem>>
    %515 = vector.broadcast %514 : f32 to vector<2x16xf32>
    %516 = arith.mulf %515, %284 : vector<2x16xf32>
    %517 = arith.addf %513, %516 : vector<2x16xf32>
    %c47_108 = arith.constant 47 : index
    %518 = memref.load %arg5[%c47_108] : memref<48xf32, #tpu.memory_space<smem>>
    %519 = vector.broadcast %518 : f32 to vector<2x16xf32>
    %520 = arith.mulf %519, %324 : vector<2x16xf32>
    %521 = arith.addf %517, %520 : vector<2x16xf32>
    %c3_109 = arith.constant 3 : index
    %522 = memref.load %arg6[%c3_109] : memref<4xf32, #tpu.memory_space<smem>>
    %523 = vector.broadcast %522 : f32 to vector<2x16xf32>
    %524 = arith.addf %521, %523 : vector<2x16xf32>
    %cst_110 = arith.constant dense<0.000000e+00> : vector<16xf32>
    %525 = vector.multi_reduction <add>, %374, %cst_110 [0] : vector<2x16xf32> to vector<16xf32>
    %526 = vector.shape_cast %525 : vector<16xf32> to vector<1x16xf32>
    %cst_111 = arith.constant dense<0.000000e+00> : vector<16xf32>
    %527 = vector.multi_reduction <add>, %424, %cst_111 [0] : vector<2x16xf32> to vector<16xf32>
    %528 = vector.shape_cast %527 : vector<16xf32> to vector<1x16xf32>
    %cst_112 = arith.constant dense<0.000000e+00> : vector<16xf32>
    %529 = vector.multi_reduction <add>, %474, %cst_112 [0] : vector<2x16xf32> to vector<16xf32>
    %530 = vector.shape_cast %529 : vector<16xf32> to vector<1x16xf32>
    %cst_113 = arith.constant dense<0.000000e+00> : vector<16xf32>
    %531 = vector.multi_reduction <add>, %524, %cst_113 [0] : vector<2x16xf32> to vector<16xf32>
    %532 = vector.shape_cast %531 : vector<16xf32> to vector<1x16xf32>
    %533 = arith.mulf %374, %374 : vector<2x16xf32>
    %cst_114 = arith.constant dense<0.000000e+00> : vector<16xf32>
    %534 = vector.multi_reduction <add>, %533, %cst_114 [0] : vector<2x16xf32> to vector<16xf32>
    %535 = vector.shape_cast %534 : vector<16xf32> to vector<1x16xf32>
    %536 = arith.mulf %424, %424 : vector<2x16xf32>
    %cst_115 = arith.constant dense<0.000000e+00> : vector<16xf32>
    %537 = vector.multi_reduction <add>, %536, %cst_115 [0] : vector<2x16xf32> to vector<16xf32>
    %538 = vector.shape_cast %537 : vector<16xf32> to vector<1x16xf32>
    %539 = arith.mulf %474, %474 : vector<2x16xf32>
    %cst_116 = arith.constant dense<0.000000e+00> : vector<16xf32>
    %540 = vector.multi_reduction <add>, %539, %cst_116 [0] : vector<2x16xf32> to vector<16xf32>
    %541 = vector.shape_cast %540 : vector<16xf32> to vector<1x16xf32>
    %542 = arith.mulf %524, %524 : vector<2x16xf32>
    %cst_117 = arith.constant dense<0.000000e+00> : vector<16xf32>
    %543 = vector.multi_reduction <add>, %542, %cst_117 [0] : vector<2x16xf32> to vector<16xf32>
    %544 = vector.shape_cast %543 : vector<16xf32> to vector<1x16xf32>
    %545 = tpu.concatenate %526, %528, %530, %532, %535, %538, %541, %544 in 0 : vector<1x16xf32>, vector<1x16xf32>, vector<1x16xf32>, vector<1x16xf32>, vector<1x16xf32>, vector<1x16xf32>, vector<1x16xf32>, vector<1x16xf32> -> vector<8x16xf32>
    %cst_118 = arith.constant dense<0.000000e+00> : vector<8xf32>
    %546 = vector.multi_reduction <add>, %545, %cst_118 [1] : vector<8x16xf32> to vector<8xf32>
    %547 = vector.shape_cast %546 : vector<8xf32> to vector<8x1xf32>
    %548 = vector.shape_cast %547 : vector<8x1xf32> to vector<1x8x1xf32>
    %c0_119 = arith.constant 0 : index
    %c0_120 = arith.constant 0 : index
    %c0_121 = arith.constant 0 : index
    %549 = vector.load %arg7[%c0_119, %c0_120, %c0_121] : memref<1x8x1xf32, #tpu.memory_space<vmem>>, vector<1x8x1xf32>
    tpu.vector_store %arg7[%c0_119, %c0_120, %c0_121], %548 {strides = array<i32>} : memref<1x8x1xf32, #tpu.memory_space<vmem>>, vector<1x8x1xf32>,
    return
  }
  func.func @transform_0(%arg0: i32) -> (i32, i32, i32) {
    %c0_i32 = arith.constant 0 : i32
    %c0_i32_0 = arith.constant 0 : i32
    %c0_i32_1 = arith.constant 0 : i32
    return %arg0, %c0_i32, %c0_i32_0 : i32, i32, i32
  }
  func.func @transform_1(%arg0: i32) -> i32 {
    %c0_i32 = arith.constant 0 : i32
    %c0_i32_0 = arith.constant 0 : i32
    return %c0_i32 : i32
  }
  func.func @transform_2(%arg0: i32) -> i32 {
    %c0_i32 = arith.constant 0 : i32
    %c0_i32_0 = arith.constant 0 : i32
    return %c0_i32 : i32
  }
  func.func @transform_3(%arg0: i32) -> i32 {
    %c0_i32 = arith.constant 0 : i32
    %c0_i32_0 = arith.constant 0 : i32
    return %c0_i32 : i32
  }
  func.func @transform_4(%arg0: i32) -> i32 {
    %c0_i32 = arith.constant 0 : i32
    %c0_i32_0 = arith.constant 0 : i32
    return %c0_i32 : i32
  }
  func.func @transform_5(%arg0: i32) -> i32 {
    %c0_i32 = arith.constant 0 : i32
    %c0_i32_0 = arith.constant 0 : i32
    return %c0_i32 : i32
  }
  func.func @transform_6(%arg0: i32) -> (i32, i32, i32) {
    %c0_i32 = arith.constant 0 : i32
    %c0_i32_0 = arith.constant 0 : i32
    %c0_i32_1 = arith.constant 0 : i32
    return %arg0, %c0_i32, %c0_i32_0 : i32, i32, i32
  }
}

module attributes {stable_mosaic.version = 11 : i64} {
  func.func @_final_kernel(%arg0: i32, %arg1: memref<2x4x16xf32, #tpu.memory_space<vmem>>, %arg2: memref<48xf32, #tpu.memory_space<smem>>, %arg3: memref<4xf32, #tpu.memory_space<smem>>, %arg4: memref<8xf32, #tpu.memory_space<smem>>, %arg5: memref<48xf32, #tpu.memory_space<smem>>, %arg6: memref<4xf32, #tpu.memory_space<smem>>, %arg7: memref<8xf32, #tpu.memory_space<smem>>, %arg8: memref<2x4x16xf32, #tpu.memory_space<vmem>>) attributes {dimension_semantics = [#tpu.dimension_semantics<parallel>], iteration_bounds = array<i64: 1>, scalar_prefetch = 0 : i64, scratch_operands = 0 : i64, tpu.core_type = #tpu.core_type<tc>, window_params = [{transform_indices = @transform_0, window_bounds = array<i64: 2, 4, 16>}, {transform_indices = @transform_1, window_bounds = array<i64: 48>}, {transform_indices = @transform_2, window_bounds = array<i64: 4>}, {transform_indices = @transform_3, window_bounds = array<i64: 8>}, {transform_indices = @transform_4, window_bounds = array<i64: 48>}, {transform_indices = @transform_5, window_bounds = array<i64: 4>}, {transform_indices = @transform_6, window_bounds = array<i64: 8>}, {transform_indices = @transform_7, window_bounds = array<i64: 2, 4, 16>}]} {
    %0 = tpu.iota {dimensions = array<i32: 1>} : vector<1x16xi32>
    %c0_i32 = arith.constant 0 : i32
    %1 = vector.broadcast %c0_i32 : i32 to vector<1x16xi32>
    %2 = arith.cmpi eq, %0, %1 : vector<1x16xi32>
    %c15_i32 = arith.constant 15 : i32
    %3 = vector.broadcast %c15_i32 : i32 to vector<1x16xi32>
    %4 = arith.cmpi eq, %0, %3 : vector<1x16xi32>
    %c0 = arith.constant 0 : index
    %c0_0 = arith.constant 0 : index
    %c0_1 = arith.constant 0 : index
    %5 = vector.load %arg1[%c0, %c0_0, %c0_1] : memref<2x4x16xf32, #tpu.memory_space<vmem>>, vector<2x1x16xf32>
    %6 = vector.shape_cast %5 : vector<2x1x16xf32> to vector<2x16xf32>
    %c0_2 = arith.constant 0 : index
    %c1 = arith.constant 1 : index
    %c0_3 = arith.constant 0 : index
    %7 = vector.load %arg1[%c0_2, %c1, %c0_3] : memref<2x4x16xf32, #tpu.memory_space<vmem>>, vector<2x1x16xf32>
    %8 = vector.shape_cast %7 : vector<2x1x16xf32> to vector<2x16xf32>
    %c0_4 = arith.constant 0 : index
    %c2 = arith.constant 2 : index
    %c0_5 = arith.constant 0 : index
    %9 = vector.load %arg1[%c0_4, %c2, %c0_5] : memref<2x4x16xf32, #tpu.memory_space<vmem>>, vector<2x1x16xf32>
    %10 = vector.shape_cast %9 : vector<2x1x16xf32> to vector<2x16xf32>
    %c0_6 = arith.constant 0 : index
    %c3 = arith.constant 3 : index
    %c0_7 = arith.constant 0 : index
    %11 = vector.load %arg1[%c0_6, %c3, %c0_7] : memref<2x4x16xf32, #tpu.memory_space<vmem>>, vector<2x1x16xf32>
    %12 = vector.shape_cast %11 : vector<2x1x16xf32> to vector<2x16xf32>
    %c1_i32 = arith.constant 1 : i32
    %13 = tpu.dynamic_rotate %6 by %c1_i32 dim 1 : vector<2x16xf32>, i32 -> vector<2x16xf32>
    %cst = arith.constant 0.000000e+00 : f32
    %14 = vector.shape_cast %2 : vector<1x16xi1> to vector<1x16xi1>
    %15 = vector.broadcast %14 : vector<1x16xi1> to vector<2x16xi1>
    %16 = vector.broadcast %cst : f32 to vector<2x16xf32>
    %17 = arith.select %15, %16, %13 : vector<2x16xi1>, vector<2x16xf32>
    %c15_i32_8 = arith.constant 15 : i32
    %18 = tpu.dynamic_rotate %6 by %c15_i32_8 dim 1 : vector<2x16xf32>, i32 -> vector<2x16xf32>
    %cst_9 = arith.constant 0.000000e+00 : f32
    %19 = vector.shape_cast %4 : vector<1x16xi1> to vector<1x16xi1>
    %20 = vector.broadcast %19 : vector<1x16xi1> to vector<2x16xi1>
    %21 = vector.broadcast %cst_9 : f32 to vector<2x16xf32>
    %22 = arith.select %20, %21, %18 : vector<2x16xi1>, vector<2x16xf32>
    %c1_i32_10 = arith.constant 1 : i32
    %23 = tpu.dynamic_rotate %8 by %c1_i32_10 dim 1 : vector<2x16xf32>, i32 -> vector<2x16xf32>
    %cst_11 = arith.constant 0.000000e+00 : f32
    %24 = vector.shape_cast %2 : vector<1x16xi1> to vector<1x16xi1>
    %25 = vector.broadcast %24 : vector<1x16xi1> to vector<2x16xi1>
    %26 = vector.broadcast %cst_11 : f32 to vector<2x16xf32>
    %27 = arith.select %25, %26, %23 : vector<2x16xi1>, vector<2x16xf32>
    %c15_i32_12 = arith.constant 15 : i32
    %28 = tpu.dynamic_rotate %8 by %c15_i32_12 dim 1 : vector<2x16xf32>, i32 -> vector<2x16xf32>
    %cst_13 = arith.constant 0.000000e+00 : f32
    %29 = vector.shape_cast %4 : vector<1x16xi1> to vector<1x16xi1>
    %30 = vector.broadcast %29 : vector<1x16xi1> to vector<2x16xi1>
    %31 = vector.broadcast %cst_13 : f32 to vector<2x16xf32>
    %32 = arith.select %30, %31, %28 : vector<2x16xi1>, vector<2x16xf32>
    %c1_i32_14 = arith.constant 1 : i32
    %33 = tpu.dynamic_rotate %10 by %c1_i32_14 dim 1 : vector<2x16xf32>, i32 -> vector<2x16xf32>
    %cst_15 = arith.constant 0.000000e+00 : f32
    %34 = vector.shape_cast %2 : vector<1x16xi1> to vector<1x16xi1>
    %35 = vector.broadcast %34 : vector<1x16xi1> to vector<2x16xi1>
    %36 = vector.broadcast %cst_15 : f32 to vector<2x16xf32>
    %37 = arith.select %35, %36, %33 : vector<2x16xi1>, vector<2x16xf32>
    %c15_i32_16 = arith.constant 15 : i32
    %38 = tpu.dynamic_rotate %10 by %c15_i32_16 dim 1 : vector<2x16xf32>, i32 -> vector<2x16xf32>
    %cst_17 = arith.constant 0.000000e+00 : f32
    %39 = vector.shape_cast %4 : vector<1x16xi1> to vector<1x16xi1>
    %40 = vector.broadcast %39 : vector<1x16xi1> to vector<2x16xi1>
    %41 = vector.broadcast %cst_17 : f32 to vector<2x16xf32>
    %42 = arith.select %40, %41, %38 : vector<2x16xi1>, vector<2x16xf32>
    %c1_i32_18 = arith.constant 1 : i32
    %43 = tpu.dynamic_rotate %12 by %c1_i32_18 dim 1 : vector<2x16xf32>, i32 -> vector<2x16xf32>
    %cst_19 = arith.constant 0.000000e+00 : f32
    %44 = vector.shape_cast %2 : vector<1x16xi1> to vector<1x16xi1>
    %45 = vector.broadcast %44 : vector<1x16xi1> to vector<2x16xi1>
    %46 = vector.broadcast %cst_19 : f32 to vector<2x16xf32>
    %47 = arith.select %45, %46, %43 : vector<2x16xi1>, vector<2x16xf32>
    %c15_i32_20 = arith.constant 15 : i32
    %48 = tpu.dynamic_rotate %12 by %c15_i32_20 dim 1 : vector<2x16xf32>, i32 -> vector<2x16xf32>
    %cst_21 = arith.constant 0.000000e+00 : f32
    %49 = vector.shape_cast %4 : vector<1x16xi1> to vector<1x16xi1>
    %50 = vector.broadcast %49 : vector<1x16xi1> to vector<2x16xi1>
    %51 = vector.broadcast %cst_21 : f32 to vector<2x16xf32>
    %52 = arith.select %50, %51, %48 : vector<2x16xi1>, vector<2x16xf32>
    %c0_22 = arith.constant 0 : index
    %53 = memref.load %arg2[%c0_22] : memref<48xf32, #tpu.memory_space<smem>>
    %54 = vector.broadcast %53 : f32 to vector<2x16xf32>
    %55 = arith.mulf %54, %17 : vector<2x16xf32>
    %c16 = arith.constant 16 : index
    %56 = memref.load %arg2[%c16] : memref<48xf32, #tpu.memory_space<smem>>
    %57 = vector.broadcast %56 : f32 to vector<2x16xf32>
    %58 = arith.mulf %57, %6 : vector<2x16xf32>
    %59 = arith.addf %55, %58 : vector<2x16xf32>
    %c32 = arith.constant 32 : index
    %60 = memref.load %arg2[%c32] : memref<48xf32, #tpu.memory_space<smem>>
    %61 = vector.broadcast %60 : f32 to vector<2x16xf32>
    %62 = arith.mulf %61, %22 : vector<2x16xf32>
    %63 = arith.addf %59, %62 : vector<2x16xf32>
    %c4 = arith.constant 4 : index
    %64 = memref.load %arg2[%c4] : memref<48xf32, #tpu.memory_space<smem>>
    %65 = vector.broadcast %64 : f32 to vector<2x16xf32>
    %66 = arith.mulf %65, %27 : vector<2x16xf32>
    %67 = arith.addf %63, %66 : vector<2x16xf32>
    %c20 = arith.constant 20 : index
    %68 = memref.load %arg2[%c20] : memref<48xf32, #tpu.memory_space<smem>>
    %69 = vector.broadcast %68 : f32 to vector<2x16xf32>
    %70 = arith.mulf %69, %8 : vector<2x16xf32>
    %71 = arith.addf %67, %70 : vector<2x16xf32>
    %c36 = arith.constant 36 : index
    %72 = memref.load %arg2[%c36] : memref<48xf32, #tpu.memory_space<smem>>
    %73 = vector.broadcast %72 : f32 to vector<2x16xf32>
    %74 = arith.mulf %73, %32 : vector<2x16xf32>
    %75 = arith.addf %71, %74 : vector<2x16xf32>
    %c8 = arith.constant 8 : index
    %76 = memref.load %arg2[%c8] : memref<48xf32, #tpu.memory_space<smem>>
    %77 = vector.broadcast %76 : f32 to vector<2x16xf32>
    %78 = arith.mulf %77, %37 : vector<2x16xf32>
    %79 = arith.addf %75, %78 : vector<2x16xf32>
    %c24 = arith.constant 24 : index
    %80 = memref.load %arg2[%c24] : memref<48xf32, #tpu.memory_space<smem>>
    %81 = vector.broadcast %80 : f32 to vector<2x16xf32>
    %82 = arith.mulf %81, %10 : vector<2x16xf32>
    %83 = arith.addf %79, %82 : vector<2x16xf32>
    %c40 = arith.constant 40 : index
    %84 = memref.load %arg2[%c40] : memref<48xf32, #tpu.memory_space<smem>>
    %85 = vector.broadcast %84 : f32 to vector<2x16xf32>
    %86 = arith.mulf %85, %42 : vector<2x16xf32>
    %87 = arith.addf %83, %86 : vector<2x16xf32>
    %c12 = arith.constant 12 : index
    %88 = memref.load %arg2[%c12] : memref<48xf32, #tpu.memory_space<smem>>
    %89 = vector.broadcast %88 : f32 to vector<2x16xf32>
    %90 = arith.mulf %89, %47 : vector<2x16xf32>
    %91 = arith.addf %87, %90 : vector<2x16xf32>
    %c28 = arith.constant 28 : index
    %92 = memref.load %arg2[%c28] : memref<48xf32, #tpu.memory_space<smem>>
    %93 = vector.broadcast %92 : f32 to vector<2x16xf32>
    %94 = arith.mulf %93, %12 : vector<2x16xf32>
    %95 = arith.addf %91, %94 : vector<2x16xf32>
    %c44 = arith.constant 44 : index
    %96 = memref.load %arg2[%c44] : memref<48xf32, #tpu.memory_space<smem>>
    %97 = vector.broadcast %96 : f32 to vector<2x16xf32>
    %98 = arith.mulf %97, %52 : vector<2x16xf32>
    %99 = arith.addf %95, %98 : vector<2x16xf32>
    %c0_23 = arith.constant 0 : index
    %100 = memref.load %arg3[%c0_23] : memref<4xf32, #tpu.memory_space<smem>>
    %101 = vector.broadcast %100 : f32 to vector<2x16xf32>
    %102 = arith.addf %99, %101 : vector<2x16xf32>
    %c1_24 = arith.constant 1 : index
    %103 = memref.load %arg2[%c1_24] : memref<48xf32, #tpu.memory_space<smem>>
    %104 = vector.broadcast %103 : f32 to vector<2x16xf32>
    %105 = arith.mulf %104, %17 : vector<2x16xf32>
    %c17 = arith.constant 17 : index
    %106 = memref.load %arg2[%c17] : memref<48xf32, #tpu.memory_space<smem>>
    %107 = vector.broadcast %106 : f32 to vector<2x16xf32>
    %108 = arith.mulf %107, %6 : vector<2x16xf32>
    %109 = arith.addf %105, %108 : vector<2x16xf32>
    %c33 = arith.constant 33 : index
    %110 = memref.load %arg2[%c33] : memref<48xf32, #tpu.memory_space<smem>>
    %111 = vector.broadcast %110 : f32 to vector<2x16xf32>
    %112 = arith.mulf %111, %22 : vector<2x16xf32>
    %113 = arith.addf %109, %112 : vector<2x16xf32>
    %c5 = arith.constant 5 : index
    %114 = memref.load %arg2[%c5] : memref<48xf32, #tpu.memory_space<smem>>
    %115 = vector.broadcast %114 : f32 to vector<2x16xf32>
    %116 = arith.mulf %115, %27 : vector<2x16xf32>
    %117 = arith.addf %113, %116 : vector<2x16xf32>
    %c21 = arith.constant 21 : index
    %118 = memref.load %arg2[%c21] : memref<48xf32, #tpu.memory_space<smem>>
    %119 = vector.broadcast %118 : f32 to vector<2x16xf32>
    %120 = arith.mulf %119, %8 : vector<2x16xf32>
    %121 = arith.addf %117, %120 : vector<2x16xf32>
    %c37 = arith.constant 37 : index
    %122 = memref.load %arg2[%c37] : memref<48xf32, #tpu.memory_space<smem>>
    %123 = vector.broadcast %122 : f32 to vector<2x16xf32>
    %124 = arith.mulf %123, %32 : vector<2x16xf32>
    %125 = arith.addf %121, %124 : vector<2x16xf32>
    %c9 = arith.constant 9 : index
    %126 = memref.load %arg2[%c9] : memref<48xf32, #tpu.memory_space<smem>>
    %127 = vector.broadcast %126 : f32 to vector<2x16xf32>
    %128 = arith.mulf %127, %37 : vector<2x16xf32>
    %129 = arith.addf %125, %128 : vector<2x16xf32>
    %c25 = arith.constant 25 : index
    %130 = memref.load %arg2[%c25] : memref<48xf32, #tpu.memory_space<smem>>
    %131 = vector.broadcast %130 : f32 to vector<2x16xf32>
    %132 = arith.mulf %131, %10 : vector<2x16xf32>
    %133 = arith.addf %129, %132 : vector<2x16xf32>
    %c41 = arith.constant 41 : index
    %134 = memref.load %arg2[%c41] : memref<48xf32, #tpu.memory_space<smem>>
    %135 = vector.broadcast %134 : f32 to vector<2x16xf32>
    %136 = arith.mulf %135, %42 : vector<2x16xf32>
    %137 = arith.addf %133, %136 : vector<2x16xf32>
    %c13 = arith.constant 13 : index
    %138 = memref.load %arg2[%c13] : memref<48xf32, #tpu.memory_space<smem>>
    %139 = vector.broadcast %138 : f32 to vector<2x16xf32>
    %140 = arith.mulf %139, %47 : vector<2x16xf32>
    %141 = arith.addf %137, %140 : vector<2x16xf32>
    %c29 = arith.constant 29 : index
    %142 = memref.load %arg2[%c29] : memref<48xf32, #tpu.memory_space<smem>>
    %143 = vector.broadcast %142 : f32 to vector<2x16xf32>
    %144 = arith.mulf %143, %12 : vector<2x16xf32>
    %145 = arith.addf %141, %144 : vector<2x16xf32>
    %c45 = arith.constant 45 : index
    %146 = memref.load %arg2[%c45] : memref<48xf32, #tpu.memory_space<smem>>
    %147 = vector.broadcast %146 : f32 to vector<2x16xf32>
    %148 = arith.mulf %147, %52 : vector<2x16xf32>
    %149 = arith.addf %145, %148 : vector<2x16xf32>
    %c1_25 = arith.constant 1 : index
    %150 = memref.load %arg3[%c1_25] : memref<4xf32, #tpu.memory_space<smem>>
    %151 = vector.broadcast %150 : f32 to vector<2x16xf32>
    %152 = arith.addf %149, %151 : vector<2x16xf32>
    %c2_26 = arith.constant 2 : index
    %153 = memref.load %arg2[%c2_26] : memref<48xf32, #tpu.memory_space<smem>>
    %154 = vector.broadcast %153 : f32 to vector<2x16xf32>
    %155 = arith.mulf %154, %17 : vector<2x16xf32>
    %c18 = arith.constant 18 : index
    %156 = memref.load %arg2[%c18] : memref<48xf32, #tpu.memory_space<smem>>
    %157 = vector.broadcast %156 : f32 to vector<2x16xf32>
    %158 = arith.mulf %157, %6 : vector<2x16xf32>
    %159 = arith.addf %155, %158 : vector<2x16xf32>
    %c34 = arith.constant 34 : index
    %160 = memref.load %arg2[%c34] : memref<48xf32, #tpu.memory_space<smem>>
    %161 = vector.broadcast %160 : f32 to vector<2x16xf32>
    %162 = arith.mulf %161, %22 : vector<2x16xf32>
    %163 = arith.addf %159, %162 : vector<2x16xf32>
    %c6 = arith.constant 6 : index
    %164 = memref.load %arg2[%c6] : memref<48xf32, #tpu.memory_space<smem>>
    %165 = vector.broadcast %164 : f32 to vector<2x16xf32>
    %166 = arith.mulf %165, %27 : vector<2x16xf32>
    %167 = arith.addf %163, %166 : vector<2x16xf32>
    %c22 = arith.constant 22 : index
    %168 = memref.load %arg2[%c22] : memref<48xf32, #tpu.memory_space<smem>>
    %169 = vector.broadcast %168 : f32 to vector<2x16xf32>
    %170 = arith.mulf %169, %8 : vector<2x16xf32>
    %171 = arith.addf %167, %170 : vector<2x16xf32>
    %c38 = arith.constant 38 : index
    %172 = memref.load %arg2[%c38] : memref<48xf32, #tpu.memory_space<smem>>
    %173 = vector.broadcast %172 : f32 to vector<2x16xf32>
    %174 = arith.mulf %173, %32 : vector<2x16xf32>
    %175 = arith.addf %171, %174 : vector<2x16xf32>
    %c10 = arith.constant 10 : index
    %176 = memref.load %arg2[%c10] : memref<48xf32, #tpu.memory_space<smem>>
    %177 = vector.broadcast %176 : f32 to vector<2x16xf32>
    %178 = arith.mulf %177, %37 : vector<2x16xf32>
    %179 = arith.addf %175, %178 : vector<2x16xf32>
    %c26 = arith.constant 26 : index
    %180 = memref.load %arg2[%c26] : memref<48xf32, #tpu.memory_space<smem>>
    %181 = vector.broadcast %180 : f32 to vector<2x16xf32>
    %182 = arith.mulf %181, %10 : vector<2x16xf32>
    %183 = arith.addf %179, %182 : vector<2x16xf32>
    %c42 = arith.constant 42 : index
    %184 = memref.load %arg2[%c42] : memref<48xf32, #tpu.memory_space<smem>>
    %185 = vector.broadcast %184 : f32 to vector<2x16xf32>
    %186 = arith.mulf %185, %42 : vector<2x16xf32>
    %187 = arith.addf %183, %186 : vector<2x16xf32>
    %c14 = arith.constant 14 : index
    %188 = memref.load %arg2[%c14] : memref<48xf32, #tpu.memory_space<smem>>
    %189 = vector.broadcast %188 : f32 to vector<2x16xf32>
    %190 = arith.mulf %189, %47 : vector<2x16xf32>
    %191 = arith.addf %187, %190 : vector<2x16xf32>
    %c30 = arith.constant 30 : index
    %192 = memref.load %arg2[%c30] : memref<48xf32, #tpu.memory_space<smem>>
    %193 = vector.broadcast %192 : f32 to vector<2x16xf32>
    %194 = arith.mulf %193, %12 : vector<2x16xf32>
    %195 = arith.addf %191, %194 : vector<2x16xf32>
    %c46 = arith.constant 46 : index
    %196 = memref.load %arg2[%c46] : memref<48xf32, #tpu.memory_space<smem>>
    %197 = vector.broadcast %196 : f32 to vector<2x16xf32>
    %198 = arith.mulf %197, %52 : vector<2x16xf32>
    %199 = arith.addf %195, %198 : vector<2x16xf32>
    %c2_27 = arith.constant 2 : index
    %200 = memref.load %arg3[%c2_27] : memref<4xf32, #tpu.memory_space<smem>>
    %201 = vector.broadcast %200 : f32 to vector<2x16xf32>
    %202 = arith.addf %199, %201 : vector<2x16xf32>
    %c3_28 = arith.constant 3 : index
    %203 = memref.load %arg2[%c3_28] : memref<48xf32, #tpu.memory_space<smem>>
    %204 = vector.broadcast %203 : f32 to vector<2x16xf32>
    %205 = arith.mulf %204, %17 : vector<2x16xf32>
    %c19 = arith.constant 19 : index
    %206 = memref.load %arg2[%c19] : memref<48xf32, #tpu.memory_space<smem>>
    %207 = vector.broadcast %206 : f32 to vector<2x16xf32>
    %208 = arith.mulf %207, %6 : vector<2x16xf32>
    %209 = arith.addf %205, %208 : vector<2x16xf32>
    %c35 = arith.constant 35 : index
    %210 = memref.load %arg2[%c35] : memref<48xf32, #tpu.memory_space<smem>>
    %211 = vector.broadcast %210 : f32 to vector<2x16xf32>
    %212 = arith.mulf %211, %22 : vector<2x16xf32>
    %213 = arith.addf %209, %212 : vector<2x16xf32>
    %c7 = arith.constant 7 : index
    %214 = memref.load %arg2[%c7] : memref<48xf32, #tpu.memory_space<smem>>
    %215 = vector.broadcast %214 : f32 to vector<2x16xf32>
    %216 = arith.mulf %215, %27 : vector<2x16xf32>
    %217 = arith.addf %213, %216 : vector<2x16xf32>
    %c23 = arith.constant 23 : index
    %218 = memref.load %arg2[%c23] : memref<48xf32, #tpu.memory_space<smem>>
    %219 = vector.broadcast %218 : f32 to vector<2x16xf32>
    %220 = arith.mulf %219, %8 : vector<2x16xf32>
    %221 = arith.addf %217, %220 : vector<2x16xf32>
    %c39 = arith.constant 39 : index
    %222 = memref.load %arg2[%c39] : memref<48xf32, #tpu.memory_space<smem>>
    %223 = vector.broadcast %222 : f32 to vector<2x16xf32>
    %224 = arith.mulf %223, %32 : vector<2x16xf32>
    %225 = arith.addf %221, %224 : vector<2x16xf32>
    %c11 = arith.constant 11 : index
    %226 = memref.load %arg2[%c11] : memref<48xf32, #tpu.memory_space<smem>>
    %227 = vector.broadcast %226 : f32 to vector<2x16xf32>
    %228 = arith.mulf %227, %37 : vector<2x16xf32>
    %229 = arith.addf %225, %228 : vector<2x16xf32>
    %c27 = arith.constant 27 : index
    %230 = memref.load %arg2[%c27] : memref<48xf32, #tpu.memory_space<smem>>
    %231 = vector.broadcast %230 : f32 to vector<2x16xf32>
    %232 = arith.mulf %231, %10 : vector<2x16xf32>
    %233 = arith.addf %229, %232 : vector<2x16xf32>
    %c43 = arith.constant 43 : index
    %234 = memref.load %arg2[%c43] : memref<48xf32, #tpu.memory_space<smem>>
    %235 = vector.broadcast %234 : f32 to vector<2x16xf32>
    %236 = arith.mulf %235, %42 : vector<2x16xf32>
    %237 = arith.addf %233, %236 : vector<2x16xf32>
    %c15 = arith.constant 15 : index
    %238 = memref.load %arg2[%c15] : memref<48xf32, #tpu.memory_space<smem>>
    %239 = vector.broadcast %238 : f32 to vector<2x16xf32>
    %240 = arith.mulf %239, %47 : vector<2x16xf32>
    %241 = arith.addf %237, %240 : vector<2x16xf32>
    %c31 = arith.constant 31 : index
    %242 = memref.load %arg2[%c31] : memref<48xf32, #tpu.memory_space<smem>>
    %243 = vector.broadcast %242 : f32 to vector<2x16xf32>
    %244 = arith.mulf %243, %12 : vector<2x16xf32>
    %245 = arith.addf %241, %244 : vector<2x16xf32>
    %c47 = arith.constant 47 : index
    %246 = memref.load %arg2[%c47] : memref<48xf32, #tpu.memory_space<smem>>
    %247 = vector.broadcast %246 : f32 to vector<2x16xf32>
    %248 = arith.mulf %247, %52 : vector<2x16xf32>
    %249 = arith.addf %245, %248 : vector<2x16xf32>
    %c3_29 = arith.constant 3 : index
    %250 = memref.load %arg3[%c3_29] : memref<4xf32, #tpu.memory_space<smem>>
    %251 = vector.broadcast %250 : f32 to vector<2x16xf32>
    %252 = arith.addf %249, %251 : vector<2x16xf32>
    %c0_30 = arith.constant 0 : index
    %253 = memref.load %arg4[%c0_30] : memref<8xf32, #tpu.memory_space<smem>>
    %254 = vector.broadcast %253 : f32 to vector<2x16xf32>
    %255 = arith.mulf %102, %254 : vector<2x16xf32>
    %c4_31 = arith.constant 4 : index
    %256 = memref.load %arg4[%c4_31] : memref<8xf32, #tpu.memory_space<smem>>
    %257 = vector.broadcast %256 : f32 to vector<2x16xf32>
    %258 = arith.addf %255, %257 : vector<2x16xf32>
    %cst_32 = arith.constant 0.000000e+00 : f32
    %259 = vector.broadcast %cst_32 : f32 to vector<2x16xf32>
    %260 = arith.maximumf %258, %259 : vector<2x16xf32>
    %c1_33 = arith.constant 1 : index
    %261 = memref.load %arg4[%c1_33] : memref<8xf32, #tpu.memory_space<smem>>
    %262 = vector.broadcast %261 : f32 to vector<2x16xf32>
    %263 = arith.mulf %152, %262 : vector<2x16xf32>
    %c5_34 = arith.constant 5 : index
    %264 = memref.load %arg4[%c5_34] : memref<8xf32, #tpu.memory_space<smem>>
    %265 = vector.broadcast %264 : f32 to vector<2x16xf32>
    %266 = arith.addf %263, %265 : vector<2x16xf32>
    %cst_35 = arith.constant 0.000000e+00 : f32
    %267 = vector.broadcast %cst_35 : f32 to vector<2x16xf32>
    %268 = arith.maximumf %266, %267 : vector<2x16xf32>
    %c2_36 = arith.constant 2 : index
    %269 = memref.load %arg4[%c2_36] : memref<8xf32, #tpu.memory_space<smem>>
    %270 = vector.broadcast %269 : f32 to vector<2x16xf32>
    %271 = arith.mulf %202, %270 : vector<2x16xf32>
    %c6_37 = arith.constant 6 : index
    %272 = memref.load %arg4[%c6_37] : memref<8xf32, #tpu.memory_space<smem>>
    %273 = vector.broadcast %272 : f32 to vector<2x16xf32>
    %274 = arith.addf %271, %273 : vector<2x16xf32>
    %cst_38 = arith.constant 0.000000e+00 : f32
    %275 = vector.broadcast %cst_38 : f32 to vector<2x16xf32>
    %276 = arith.maximumf %274, %275 : vector<2x16xf32>
    %c3_39 = arith.constant 3 : index
    %277 = memref.load %arg4[%c3_39] : memref<8xf32, #tpu.memory_space<smem>>
    %278 = vector.broadcast %277 : f32 to vector<2x16xf32>
    %279 = arith.mulf %252, %278 : vector<2x16xf32>
    %c7_40 = arith.constant 7 : index
    %280 = memref.load %arg4[%c7_40] : memref<8xf32, #tpu.memory_space<smem>>
    %281 = vector.broadcast %280 : f32 to vector<2x16xf32>
    %282 = arith.addf %279, %281 : vector<2x16xf32>
    %cst_41 = arith.constant 0.000000e+00 : f32
    %283 = vector.broadcast %cst_41 : f32 to vector<2x16xf32>
    %284 = arith.maximumf %282, %283 : vector<2x16xf32>
    %c1_i32_42 = arith.constant 1 : i32
    %285 = tpu.dynamic_rotate %260 by %c1_i32_42 dim 1 : vector<2x16xf32>, i32 -> vector<2x16xf32>
    %cst_43 = arith.constant 0.000000e+00 : f32
    %286 = vector.shape_cast %2 : vector<1x16xi1> to vector<1x16xi1>
    %287 = vector.broadcast %286 : vector<1x16xi1> to vector<2x16xi1>
    %288 = vector.broadcast %cst_43 : f32 to vector<2x16xf32>
    %289 = arith.select %287, %288, %285 : vector<2x16xi1>, vector<2x16xf32>
    %c15_i32_44 = arith.constant 15 : i32
    %290 = tpu.dynamic_rotate %260 by %c15_i32_44 dim 1 : vector<2x16xf32>, i32 -> vector<2x16xf32>
    %cst_45 = arith.constant 0.000000e+00 : f32
    %291 = vector.shape_cast %4 : vector<1x16xi1> to vector<1x16xi1>
    %292 = vector.broadcast %291 : vector<1x16xi1> to vector<2x16xi1>
    %293 = vector.broadcast %cst_45 : f32 to vector<2x16xf32>
    %294 = arith.select %292, %293, %290 : vector<2x16xi1>, vector<2x16xf32>
    %c1_i32_46 = arith.constant 1 : i32
    %295 = tpu.dynamic_rotate %268 by %c1_i32_46 dim 1 : vector<2x16xf32>, i32 -> vector<2x16xf32>
    %cst_47 = arith.constant 0.000000e+00 : f32
    %296 = vector.shape_cast %2 : vector<1x16xi1> to vector<1x16xi1>
    %297 = vector.broadcast %296 : vector<1x16xi1> to vector<2x16xi1>
    %298 = vector.broadcast %cst_47 : f32 to vector<2x16xf32>
    %299 = arith.select %297, %298, %295 : vector<2x16xi1>, vector<2x16xf32>
    %c15_i32_48 = arith.constant 15 : i32
    %300 = tpu.dynamic_rotate %268 by %c15_i32_48 dim 1 : vector<2x16xf32>, i32 -> vector<2x16xf32>
    %cst_49 = arith.constant 0.000000e+00 : f32
    %301 = vector.shape_cast %4 : vector<1x16xi1> to vector<1x16xi1>
    %302 = vector.broadcast %301 : vector<1x16xi1> to vector<2x16xi1>
    %303 = vector.broadcast %cst_49 : f32 to vector<2x16xf32>
    %304 = arith.select %302, %303, %300 : vector<2x16xi1>, vector<2x16xf32>
    %c1_i32_50 = arith.constant 1 : i32
    %305 = tpu.dynamic_rotate %276 by %c1_i32_50 dim 1 : vector<2x16xf32>, i32 -> vector<2x16xf32>
    %cst_51 = arith.constant 0.000000e+00 : f32
    %306 = vector.shape_cast %2 : vector<1x16xi1> to vector<1x16xi1>
    %307 = vector.broadcast %306 : vector<1x16xi1> to vector<2x16xi1>
    %308 = vector.broadcast %cst_51 : f32 to vector<2x16xf32>
    %309 = arith.select %307, %308, %305 : vector<2x16xi1>, vector<2x16xf32>
    %c15_i32_52 = arith.constant 15 : i32
    %310 = tpu.dynamic_rotate %276 by %c15_i32_52 dim 1 : vector<2x16xf32>, i32 -> vector<2x16xf32>
    %cst_53 = arith.constant 0.000000e+00 : f32
    %311 = vector.shape_cast %4 : vector<1x16xi1> to vector<1x16xi1>
    %312 = vector.broadcast %311 : vector<1x16xi1> to vector<2x16xi1>
    %313 = vector.broadcast %cst_53 : f32 to vector<2x16xf32>
    %314 = arith.select %312, %313, %310 : vector<2x16xi1>, vector<2x16xf32>
    %c1_i32_54 = arith.constant 1 : i32
    %315 = tpu.dynamic_rotate %284 by %c1_i32_54 dim 1 : vector<2x16xf32>, i32 -> vector<2x16xf32>
    %cst_55 = arith.constant 0.000000e+00 : f32
    %316 = vector.shape_cast %2 : vector<1x16xi1> to vector<1x16xi1>
    %317 = vector.broadcast %316 : vector<1x16xi1> to vector<2x16xi1>
    %318 = vector.broadcast %cst_55 : f32 to vector<2x16xf32>
    %319 = arith.select %317, %318, %315 : vector<2x16xi1>, vector<2x16xf32>
    %c15_i32_56 = arith.constant 15 : i32
    %320 = tpu.dynamic_rotate %284 by %c15_i32_56 dim 1 : vector<2x16xf32>, i32 -> vector<2x16xf32>
    %cst_57 = arith.constant 0.000000e+00 : f32
    %321 = vector.shape_cast %4 : vector<1x16xi1> to vector<1x16xi1>
    %322 = vector.broadcast %321 : vector<1x16xi1> to vector<2x16xi1>
    %323 = vector.broadcast %cst_57 : f32 to vector<2x16xf32>
    %324 = arith.select %322, %323, %320 : vector<2x16xi1>, vector<2x16xf32>
    %c0_58 = arith.constant 0 : index
    %325 = memref.load %arg5[%c0_58] : memref<48xf32, #tpu.memory_space<smem>>
    %326 = vector.broadcast %325 : f32 to vector<2x16xf32>
    %327 = arith.mulf %326, %289 : vector<2x16xf32>
    %c16_59 = arith.constant 16 : index
    %328 = memref.load %arg5[%c16_59] : memref<48xf32, #tpu.memory_space<smem>>
    %329 = vector.broadcast %328 : f32 to vector<2x16xf32>
    %330 = arith.mulf %329, %260 : vector<2x16xf32>
    %331 = arith.addf %327, %330 : vector<2x16xf32>
    %c32_60 = arith.constant 32 : index
    %332 = memref.load %arg5[%c32_60] : memref<48xf32, #tpu.memory_space<smem>>
    %333 = vector.broadcast %332 : f32 to vector<2x16xf32>
    %334 = arith.mulf %333, %294 : vector<2x16xf32>
    %335 = arith.addf %331, %334 : vector<2x16xf32>
    %c4_61 = arith.constant 4 : index
    %336 = memref.load %arg5[%c4_61] : memref<48xf32, #tpu.memory_space<smem>>
    %337 = vector.broadcast %336 : f32 to vector<2x16xf32>
    %338 = arith.mulf %337, %299 : vector<2x16xf32>
    %339 = arith.addf %335, %338 : vector<2x16xf32>
    %c20_62 = arith.constant 20 : index
    %340 = memref.load %arg5[%c20_62] : memref<48xf32, #tpu.memory_space<smem>>
    %341 = vector.broadcast %340 : f32 to vector<2x16xf32>
    %342 = arith.mulf %341, %268 : vector<2x16xf32>
    %343 = arith.addf %339, %342 : vector<2x16xf32>
    %c36_63 = arith.constant 36 : index
    %344 = memref.load %arg5[%c36_63] : memref<48xf32, #tpu.memory_space<smem>>
    %345 = vector.broadcast %344 : f32 to vector<2x16xf32>
    %346 = arith.mulf %345, %304 : vector<2x16xf32>
    %347 = arith.addf %343, %346 : vector<2x16xf32>
    %c8_64 = arith.constant 8 : index
    %348 = memref.load %arg5[%c8_64] : memref<48xf32, #tpu.memory_space<smem>>
    %349 = vector.broadcast %348 : f32 to vector<2x16xf32>
    %350 = arith.mulf %349, %309 : vector<2x16xf32>
    %351 = arith.addf %347, %350 : vector<2x16xf32>
    %c24_65 = arith.constant 24 : index
    %352 = memref.load %arg5[%c24_65] : memref<48xf32, #tpu.memory_space<smem>>
    %353 = vector.broadcast %352 : f32 to vector<2x16xf32>
    %354 = arith.mulf %353, %276 : vector<2x16xf32>
    %355 = arith.addf %351, %354 : vector<2x16xf32>
    %c40_66 = arith.constant 40 : index
    %356 = memref.load %arg5[%c40_66] : memref<48xf32, #tpu.memory_space<smem>>
    %357 = vector.broadcast %356 : f32 to vector<2x16xf32>
    %358 = arith.mulf %357, %314 : vector<2x16xf32>
    %359 = arith.addf %355, %358 : vector<2x16xf32>
    %c12_67 = arith.constant 12 : index
    %360 = memref.load %arg5[%c12_67] : memref<48xf32, #tpu.memory_space<smem>>
    %361 = vector.broadcast %360 : f32 to vector<2x16xf32>
    %362 = arith.mulf %361, %319 : vector<2x16xf32>
    %363 = arith.addf %359, %362 : vector<2x16xf32>
    %c28_68 = arith.constant 28 : index
    %364 = memref.load %arg5[%c28_68] : memref<48xf32, #tpu.memory_space<smem>>
    %365 = vector.broadcast %364 : f32 to vector<2x16xf32>
    %366 = arith.mulf %365, %284 : vector<2x16xf32>
    %367 = arith.addf %363, %366 : vector<2x16xf32>
    %c44_69 = arith.constant 44 : index
    %368 = memref.load %arg5[%c44_69] : memref<48xf32, #tpu.memory_space<smem>>
    %369 = vector.broadcast %368 : f32 to vector<2x16xf32>
    %370 = arith.mulf %369, %324 : vector<2x16xf32>
    %371 = arith.addf %367, %370 : vector<2x16xf32>
    %c0_70 = arith.constant 0 : index
    %372 = memref.load %arg6[%c0_70] : memref<4xf32, #tpu.memory_space<smem>>
    %373 = vector.broadcast %372 : f32 to vector<2x16xf32>
    %374 = arith.addf %371, %373 : vector<2x16xf32>
    %c1_71 = arith.constant 1 : index
    %375 = memref.load %arg5[%c1_71] : memref<48xf32, #tpu.memory_space<smem>>
    %376 = vector.broadcast %375 : f32 to vector<2x16xf32>
    %377 = arith.mulf %376, %289 : vector<2x16xf32>
    %c17_72 = arith.constant 17 : index
    %378 = memref.load %arg5[%c17_72] : memref<48xf32, #tpu.memory_space<smem>>
    %379 = vector.broadcast %378 : f32 to vector<2x16xf32>
    %380 = arith.mulf %379, %260 : vector<2x16xf32>
    %381 = arith.addf %377, %380 : vector<2x16xf32>
    %c33_73 = arith.constant 33 : index
    %382 = memref.load %arg5[%c33_73] : memref<48xf32, #tpu.memory_space<smem>>
    %383 = vector.broadcast %382 : f32 to vector<2x16xf32>
    %384 = arith.mulf %383, %294 : vector<2x16xf32>
    %385 = arith.addf %381, %384 : vector<2x16xf32>
    %c5_74 = arith.constant 5 : index
    %386 = memref.load %arg5[%c5_74] : memref<48xf32, #tpu.memory_space<smem>>
    %387 = vector.broadcast %386 : f32 to vector<2x16xf32>
    %388 = arith.mulf %387, %299 : vector<2x16xf32>
    %389 = arith.addf %385, %388 : vector<2x16xf32>
    %c21_75 = arith.constant 21 : index
    %390 = memref.load %arg5[%c21_75] : memref<48xf32, #tpu.memory_space<smem>>
    %391 = vector.broadcast %390 : f32 to vector<2x16xf32>
    %392 = arith.mulf %391, %268 : vector<2x16xf32>
    %393 = arith.addf %389, %392 : vector<2x16xf32>
    %c37_76 = arith.constant 37 : index
    %394 = memref.load %arg5[%c37_76] : memref<48xf32, #tpu.memory_space<smem>>
    %395 = vector.broadcast %394 : f32 to vector<2x16xf32>
    %396 = arith.mulf %395, %304 : vector<2x16xf32>
    %397 = arith.addf %393, %396 : vector<2x16xf32>
    %c9_77 = arith.constant 9 : index
    %398 = memref.load %arg5[%c9_77] : memref<48xf32, #tpu.memory_space<smem>>
    %399 = vector.broadcast %398 : f32 to vector<2x16xf32>
    %400 = arith.mulf %399, %309 : vector<2x16xf32>
    %401 = arith.addf %397, %400 : vector<2x16xf32>
    %c25_78 = arith.constant 25 : index
    %402 = memref.load %arg5[%c25_78] : memref<48xf32, #tpu.memory_space<smem>>
    %403 = vector.broadcast %402 : f32 to vector<2x16xf32>
    %404 = arith.mulf %403, %276 : vector<2x16xf32>
    %405 = arith.addf %401, %404 : vector<2x16xf32>
    %c41_79 = arith.constant 41 : index
    %406 = memref.load %arg5[%c41_79] : memref<48xf32, #tpu.memory_space<smem>>
    %407 = vector.broadcast %406 : f32 to vector<2x16xf32>
    %408 = arith.mulf %407, %314 : vector<2x16xf32>
    %409 = arith.addf %405, %408 : vector<2x16xf32>
    %c13_80 = arith.constant 13 : index
    %410 = memref.load %arg5[%c13_80] : memref<48xf32, #tpu.memory_space<smem>>
    %411 = vector.broadcast %410 : f32 to vector<2x16xf32>
    %412 = arith.mulf %411, %319 : vector<2x16xf32>
    %413 = arith.addf %409, %412 : vector<2x16xf32>
    %c29_81 = arith.constant 29 : index
    %414 = memref.load %arg5[%c29_81] : memref<48xf32, #tpu.memory_space<smem>>
    %415 = vector.broadcast %414 : f32 to vector<2x16xf32>
    %416 = arith.mulf %415, %284 : vector<2x16xf32>
    %417 = arith.addf %413, %416 : vector<2x16xf32>
    %c45_82 = arith.constant 45 : index
    %418 = memref.load %arg5[%c45_82] : memref<48xf32, #tpu.memory_space<smem>>
    %419 = vector.broadcast %418 : f32 to vector<2x16xf32>
    %420 = arith.mulf %419, %324 : vector<2x16xf32>
    %421 = arith.addf %417, %420 : vector<2x16xf32>
    %c1_83 = arith.constant 1 : index
    %422 = memref.load %arg6[%c1_83] : memref<4xf32, #tpu.memory_space<smem>>
    %423 = vector.broadcast %422 : f32 to vector<2x16xf32>
    %424 = arith.addf %421, %423 : vector<2x16xf32>
    %c2_84 = arith.constant 2 : index
    %425 = memref.load %arg5[%c2_84] : memref<48xf32, #tpu.memory_space<smem>>
    %426 = vector.broadcast %425 : f32 to vector<2x16xf32>
    %427 = arith.mulf %426, %289 : vector<2x16xf32>
    %c18_85 = arith.constant 18 : index
    %428 = memref.load %arg5[%c18_85] : memref<48xf32, #tpu.memory_space<smem>>
    %429 = vector.broadcast %428 : f32 to vector<2x16xf32>
    %430 = arith.mulf %429, %260 : vector<2x16xf32>
    %431 = arith.addf %427, %430 : vector<2x16xf32>
    %c34_86 = arith.constant 34 : index
    %432 = memref.load %arg5[%c34_86] : memref<48xf32, #tpu.memory_space<smem>>
    %433 = vector.broadcast %432 : f32 to vector<2x16xf32>
    %434 = arith.mulf %433, %294 : vector<2x16xf32>
    %435 = arith.addf %431, %434 : vector<2x16xf32>
    %c6_87 = arith.constant 6 : index
    %436 = memref.load %arg5[%c6_87] : memref<48xf32, #tpu.memory_space<smem>>
    %437 = vector.broadcast %436 : f32 to vector<2x16xf32>
    %438 = arith.mulf %437, %299 : vector<2x16xf32>
    %439 = arith.addf %435, %438 : vector<2x16xf32>
    %c22_88 = arith.constant 22 : index
    %440 = memref.load %arg5[%c22_88] : memref<48xf32, #tpu.memory_space<smem>>
    %441 = vector.broadcast %440 : f32 to vector<2x16xf32>
    %442 = arith.mulf %441, %268 : vector<2x16xf32>
    %443 = arith.addf %439, %442 : vector<2x16xf32>
    %c38_89 = arith.constant 38 : index
    %444 = memref.load %arg5[%c38_89] : memref<48xf32, #tpu.memory_space<smem>>
    %445 = vector.broadcast %444 : f32 to vector<2x16xf32>
    %446 = arith.mulf %445, %304 : vector<2x16xf32>
    %447 = arith.addf %443, %446 : vector<2x16xf32>
    %c10_90 = arith.constant 10 : index
    %448 = memref.load %arg5[%c10_90] : memref<48xf32, #tpu.memory_space<smem>>
    %449 = vector.broadcast %448 : f32 to vector<2x16xf32>
    %450 = arith.mulf %449, %309 : vector<2x16xf32>
    %451 = arith.addf %447, %450 : vector<2x16xf32>
    %c26_91 = arith.constant 26 : index
    %452 = memref.load %arg5[%c26_91] : memref<48xf32, #tpu.memory_space<smem>>
    %453 = vector.broadcast %452 : f32 to vector<2x16xf32>
    %454 = arith.mulf %453, %276 : vector<2x16xf32>
    %455 = arith.addf %451, %454 : vector<2x16xf32>
    %c42_92 = arith.constant 42 : index
    %456 = memref.load %arg5[%c42_92] : memref<48xf32, #tpu.memory_space<smem>>
    %457 = vector.broadcast %456 : f32 to vector<2x16xf32>
    %458 = arith.mulf %457, %314 : vector<2x16xf32>
    %459 = arith.addf %455, %458 : vector<2x16xf32>
    %c14_93 = arith.constant 14 : index
    %460 = memref.load %arg5[%c14_93] : memref<48xf32, #tpu.memory_space<smem>>
    %461 = vector.broadcast %460 : f32 to vector<2x16xf32>
    %462 = arith.mulf %461, %319 : vector<2x16xf32>
    %463 = arith.addf %459, %462 : vector<2x16xf32>
    %c30_94 = arith.constant 30 : index
    %464 = memref.load %arg5[%c30_94] : memref<48xf32, #tpu.memory_space<smem>>
    %465 = vector.broadcast %464 : f32 to vector<2x16xf32>
    %466 = arith.mulf %465, %284 : vector<2x16xf32>
    %467 = arith.addf %463, %466 : vector<2x16xf32>
    %c46_95 = arith.constant 46 : index
    %468 = memref.load %arg5[%c46_95] : memref<48xf32, #tpu.memory_space<smem>>
    %469 = vector.broadcast %468 : f32 to vector<2x16xf32>
    %470 = arith.mulf %469, %324 : vector<2x16xf32>
    %471 = arith.addf %467, %470 : vector<2x16xf32>
    %c2_96 = arith.constant 2 : index
    %472 = memref.load %arg6[%c2_96] : memref<4xf32, #tpu.memory_space<smem>>
    %473 = vector.broadcast %472 : f32 to vector<2x16xf32>
    %474 = arith.addf %471, %473 : vector<2x16xf32>
    %c3_97 = arith.constant 3 : index
    %475 = memref.load %arg5[%c3_97] : memref<48xf32, #tpu.memory_space<smem>>
    %476 = vector.broadcast %475 : f32 to vector<2x16xf32>
    %477 = arith.mulf %476, %289 : vector<2x16xf32>
    %c19_98 = arith.constant 19 : index
    %478 = memref.load %arg5[%c19_98] : memref<48xf32, #tpu.memory_space<smem>>
    %479 = vector.broadcast %478 : f32 to vector<2x16xf32>
    %480 = arith.mulf %479, %260 : vector<2x16xf32>
    %481 = arith.addf %477, %480 : vector<2x16xf32>
    %c35_99 = arith.constant 35 : index
    %482 = memref.load %arg5[%c35_99] : memref<48xf32, #tpu.memory_space<smem>>
    %483 = vector.broadcast %482 : f32 to vector<2x16xf32>
    %484 = arith.mulf %483, %294 : vector<2x16xf32>
    %485 = arith.addf %481, %484 : vector<2x16xf32>
    %c7_100 = arith.constant 7 : index
    %486 = memref.load %arg5[%c7_100] : memref<48xf32, #tpu.memory_space<smem>>
    %487 = vector.broadcast %486 : f32 to vector<2x16xf32>
    %488 = arith.mulf %487, %299 : vector<2x16xf32>
    %489 = arith.addf %485, %488 : vector<2x16xf32>
    %c23_101 = arith.constant 23 : index
    %490 = memref.load %arg5[%c23_101] : memref<48xf32, #tpu.memory_space<smem>>
    %491 = vector.broadcast %490 : f32 to vector<2x16xf32>
    %492 = arith.mulf %491, %268 : vector<2x16xf32>
    %493 = arith.addf %489, %492 : vector<2x16xf32>
    %c39_102 = arith.constant 39 : index
    %494 = memref.load %arg5[%c39_102] : memref<48xf32, #tpu.memory_space<smem>>
    %495 = vector.broadcast %494 : f32 to vector<2x16xf32>
    %496 = arith.mulf %495, %304 : vector<2x16xf32>
    %497 = arith.addf %493, %496 : vector<2x16xf32>
    %c11_103 = arith.constant 11 : index
    %498 = memref.load %arg5[%c11_103] : memref<48xf32, #tpu.memory_space<smem>>
    %499 = vector.broadcast %498 : f32 to vector<2x16xf32>
    %500 = arith.mulf %499, %309 : vector<2x16xf32>
    %501 = arith.addf %497, %500 : vector<2x16xf32>
    %c27_104 = arith.constant 27 : index
    %502 = memref.load %arg5[%c27_104] : memref<48xf32, #tpu.memory_space<smem>>
    %503 = vector.broadcast %502 : f32 to vector<2x16xf32>
    %504 = arith.mulf %503, %276 : vector<2x16xf32>
    %505 = arith.addf %501, %504 : vector<2x16xf32>
    %c43_105 = arith.constant 43 : index
    %506 = memref.load %arg5[%c43_105] : memref<48xf32, #tpu.memory_space<smem>>
    %507 = vector.broadcast %506 : f32 to vector<2x16xf32>
    %508 = arith.mulf %507, %314 : vector<2x16xf32>
    %509 = arith.addf %505, %508 : vector<2x16xf32>
    %c15_106 = arith.constant 15 : index
    %510 = memref.load %arg5[%c15_106] : memref<48xf32, #tpu.memory_space<smem>>
    %511 = vector.broadcast %510 : f32 to vector<2x16xf32>
    %512 = arith.mulf %511, %319 : vector<2x16xf32>
    %513 = arith.addf %509, %512 : vector<2x16xf32>
    %c31_107 = arith.constant 31 : index
    %514 = memref.load %arg5[%c31_107] : memref<48xf32, #tpu.memory_space<smem>>
    %515 = vector.broadcast %514 : f32 to vector<2x16xf32>
    %516 = arith.mulf %515, %284 : vector<2x16xf32>
    %517 = arith.addf %513, %516 : vector<2x16xf32>
    %c47_108 = arith.constant 47 : index
    %518 = memref.load %arg5[%c47_108] : memref<48xf32, #tpu.memory_space<smem>>
    %519 = vector.broadcast %518 : f32 to vector<2x16xf32>
    %520 = arith.mulf %519, %324 : vector<2x16xf32>
    %521 = arith.addf %517, %520 : vector<2x16xf32>
    %c3_109 = arith.constant 3 : index
    %522 = memref.load %arg6[%c3_109] : memref<4xf32, #tpu.memory_space<smem>>
    %523 = vector.broadcast %522 : f32 to vector<2x16xf32>
    %524 = arith.addf %521, %523 : vector<2x16xf32>
    %c0_110 = arith.constant 0 : index
    %525 = memref.load %arg7[%c0_110] : memref<8xf32, #tpu.memory_space<smem>>
    %526 = vector.broadcast %525 : f32 to vector<2x16xf32>
    %527 = arith.mulf %374, %526 : vector<2x16xf32>
    %c4_111 = arith.constant 4 : index
    %528 = memref.load %arg7[%c4_111] : memref<8xf32, #tpu.memory_space<smem>>
    %529 = vector.broadcast %528 : f32 to vector<2x16xf32>
    %530 = arith.addf %527, %529 : vector<2x16xf32>
    %531 = arith.addf %530, %6 : vector<2x16xf32>
    %cst_112 = arith.constant 0.000000e+00 : f32
    %532 = vector.broadcast %cst_112 : f32 to vector<2x16xf32>
    %533 = arith.maximumf %531, %532 : vector<2x16xf32>
    %c0_113 = arith.constant 0 : index
    %c0_114 = arith.constant 0 : index
    %c0_115 = arith.constant 0 : index
    %534 = vector.load %arg8[%c0_113, %c0_114, %c0_115] : memref<2x4x16xf32, #tpu.memory_space<vmem>>, vector<2x1x16xf32>
    %535 = vector.shape_cast %534 : vector<2x1x16xf32> to vector<2x16xf32>
    %536 = vector.shape_cast %533 : vector<2x16xf32> to vector<2x1x16xf32>
    tpu.vector_store %arg8[%c0_113, %c0_114, %c0_115], %536 {strides = array<i32>} : memref<2x4x16xf32, #tpu.memory_space<vmem>>, vector<2x1x16xf32>,
    %c1_116 = arith.constant 1 : index
    %537 = memref.load %arg7[%c1_116] : memref<8xf32, #tpu.memory_space<smem>>
    %538 = vector.broadcast %537 : f32 to vector<2x16xf32>
    %539 = arith.mulf %424, %538 : vector<2x16xf32>
    %c5_117 = arith.constant 5 : index
    %540 = memref.load %arg7[%c5_117] : memref<8xf32, #tpu.memory_space<smem>>
    %541 = vector.broadcast %540 : f32 to vector<2x16xf32>
    %542 = arith.addf %539, %541 : vector<2x16xf32>
    %543 = arith.addf %542, %8 : vector<2x16xf32>
    %cst_118 = arith.constant 0.000000e+00 : f32
    %544 = vector.broadcast %cst_118 : f32 to vector<2x16xf32>
    %545 = arith.maximumf %543, %544 : vector<2x16xf32>
    %c0_119 = arith.constant 0 : index
    %c1_120 = arith.constant 1 : index
    %c0_121 = arith.constant 0 : index
    %546 = vector.load %arg8[%c0_119, %c1_120, %c0_121] : memref<2x4x16xf32, #tpu.memory_space<vmem>>, vector<2x1x16xf32>
    %547 = vector.shape_cast %546 : vector<2x1x16xf32> to vector<2x16xf32>
    %548 = vector.shape_cast %545 : vector<2x16xf32> to vector<2x1x16xf32>
    tpu.vector_store %arg8[%c0_119, %c1_120, %c0_121], %548 {strides = array<i32>} : memref<2x4x16xf32, #tpu.memory_space<vmem>>, vector<2x1x16xf32>,
    %c2_122 = arith.constant 2 : index
    %549 = memref.load %arg7[%c2_122] : memref<8xf32, #tpu.memory_space<smem>>
    %550 = vector.broadcast %549 : f32 to vector<2x16xf32>
    %551 = arith.mulf %474, %550 : vector<2x16xf32>
    %c6_123 = arith.constant 6 : index
    %552 = memref.load %arg7[%c6_123] : memref<8xf32, #tpu.memory_space<smem>>
    %553 = vector.broadcast %552 : f32 to vector<2x16xf32>
    %554 = arith.addf %551, %553 : vector<2x16xf32>
    %555 = arith.addf %554, %10 : vector<2x16xf32>
    %cst_124 = arith.constant 0.000000e+00 : f32
    %556 = vector.broadcast %cst_124 : f32 to vector<2x16xf32>
    %557 = arith.maximumf %555, %556 : vector<2x16xf32>
    %c0_125 = arith.constant 0 : index
    %c2_126 = arith.constant 2 : index
    %c0_127 = arith.constant 0 : index
    %558 = vector.load %arg8[%c0_125, %c2_126, %c0_127] : memref<2x4x16xf32, #tpu.memory_space<vmem>>, vector<2x1x16xf32>
    %559 = vector.shape_cast %558 : vector<2x1x16xf32> to vector<2x16xf32>
    %560 = vector.shape_cast %557 : vector<2x16xf32> to vector<2x1x16xf32>
    tpu.vector_store %arg8[%c0_125, %c2_126, %c0_127], %560 {strides = array<i32>} : memref<2x4x16xf32, #tpu.memory_space<vmem>>, vector<2x1x16xf32>,
    %c3_128 = arith.constant 3 : index
    %561 = memref.load %arg7[%c3_128] : memref<8xf32, #tpu.memory_space<smem>>
    %562 = vector.broadcast %561 : f32 to vector<2x16xf32>
    %563 = arith.mulf %524, %562 : vector<2x16xf32>
    %c7_129 = arith.constant 7 : index
    %564 = memref.load %arg7[%c7_129] : memref<8xf32, #tpu.memory_space<smem>>
    %565 = vector.broadcast %564 : f32 to vector<2x16xf32>
    %566 = arith.addf %563, %565 : vector<2x16xf32>
    %567 = arith.addf %566, %12 : vector<2x16xf32>
    %cst_130 = arith.constant 0.000000e+00 : f32
    %568 = vector.broadcast %cst_130 : f32 to vector<2x16xf32>
    %569 = arith.maximumf %567, %568 : vector<2x16xf32>
    %c0_131 = arith.constant 0 : index
    %c3_132 = arith.constant 3 : index
    %c0_133 = arith.constant 0 : index
    %570 = vector.load %arg8[%c0_131, %c3_132, %c0_133] : memref<2x4x16xf32, #tpu.memory_space<vmem>>, vector<2x1x16xf32>
    %571 = vector.shape_cast %570 : vector<2x1x16xf32> to vector<2x16xf32>
    %572 = vector.shape_cast %569 : vector<2x16xf32> to vector<2x1x16xf32>
    tpu.vector_store %arg8[%c0_131, %c3_132, %c0_133], %572 {strides = array<i32>} : memref<2x4x16xf32, #tpu.memory_space<vmem>>, vector<2x1x16xf32>,
    return
  }
  func.func @transform_0(%arg0: i32) -> (i32, i32, i32) {
    %c0_i32 = arith.constant 0 : i32
    %c0_i32_0 = arith.constant 0 : i32
    %c0_i32_1 = arith.constant 0 : i32
    return %arg0, %c0_i32, %c0_i32_0 : i32, i32, i32
  }
  func.func @transform_1(%arg0: i32) -> i32 {
    %c0_i32 = arith.constant 0 : i32
    %c0_i32_0 = arith.constant 0 : i32
    return %c0_i32 : i32
  }
  func.func @transform_2(%arg0: i32) -> i32 {
    %c0_i32 = arith.constant 0 : i32
    %c0_i32_0 = arith.constant 0 : i32
    return %c0_i32 : i32
  }
  func.func @transform_3(%arg0: i32) -> i32 {
    %c0_i32 = arith.constant 0 : i32
    %c0_i32_0 = arith.constant 0 : i32
    return %c0_i32 : i32
  }
  func.func @transform_4(%arg0: i32) -> i32 {
    %c0_i32 = arith.constant 0 : i32
    %c0_i32_0 = arith.constant 0 : i32
    return %c0_i32 : i32
  }
  func.func @transform_5(%arg0: i32) -> i32 {
    %c0_i32 = arith.constant 0 : i32
    %c0_i32_0 = arith.constant 0 : i32
    return %c0_i32 : i32
  }
  func.func @transform_6(%arg0: i32) -> i32 {
    %c0_i32 = arith.constant 0 : i32
    %c0_i32_0 = arith.constant 0 : i32
    return %c0_i32 : i32
  }
  func.func @transform_7(%arg0: i32) -> (i32, i32, i32) {
    %c0_i32 = arith.constant 0 : i32
    %c0_i32_0 = arith.constant 0 : i32
    %c0_i32_1 = arith.constant 0 : i32
    return %arg0, %c0_i32, %c0_i32_0 : i32, i32, i32
  }
}

</mosaic_0001>

<llo_original>
// kernel: residual_block.3
$region0: #{residual_block.3}
  #allocation0 [shape = 'u32[]', space=smem, size = 0x4, offset = 0x4, fixed_abs, tag = 'smem constant byte address 0x4 - core index']
  #allocation1 [shape = 'u32[144,128]{1,0:T(1,128)}', space=vmem, size = 0x12000, scoped, tag = 'internal scratch']
  %s0 = inlined_call_operand.vmem [shape: f32[2,4,16], index: 0, kind: input, shape index: {}]
  %s1 = inlined_call_operand.vmem [shape: f32[48], index: 1, kind: input, shape index: {}]
  %s2 = inlined_call_operand.vmem [shape: f32[4], index: 2, kind: input, shape index: {}]
  %s3 = inlined_call_operand.vmem [shape: f32[1,8,1], index: 3, kind: output, shape index: {}]
  %s4 = sld [smem:[#allocation0]]
  $region30: #{residual_block.3} parent=0
    _
  %s6 = ssub.s32 1, %s4
  %s7 = scalar_select 0, %s6, %s4
  $region1: #{residual_block.3} parent=0
    #allocation2 [shape = 'u8[512]{0}', space=smem, size = 0x200, scoped, tag = 'input window, operand 1, single buffered']
    #allocation3 [shape = 's32[1]{0}', space=sflag, size = 0x4, scoped, tag = 'scoped memory for residual_block.3']
    #allocation4 [shape = 'u8[512]{0}', space=smem, size = 0x200, scoped, tag = 'input window, operand 2, single buffered']
    #allocation5 [shape = 's32[1]{0}', space=sflag, size = 0x4, scoped, tag = 'scoped memory for residual_block.3']
    %8 = vsyncpa [#allocation3], 0
    %9 = vsyncpa [#allocation5], 0
    // Predicated region
    $region2: #{residual_block.3} parent=1 // pred_check
      _
    $region3: #{residual_block.3} parent=1 // pred_check_branch
      %11 = sbr.rel (0) target = $region5
    $region4: #{residual_block.3} parent=1 // pred_region
      _
    $region5: #{residual_block.3} parent=1 // pred_fallthru
      _
    // Predicated region
    $region6: #{residual_block.3} parent=1 // pred_check
      _
    $region7: #{residual_block.3} parent=1 // pred_check_branch
      %13 = sbr.rel (0) target = $region9
    $region8: #{residual_block.3} parent=1 // pred_region
      %s15 = ssub.s32 16, 16
      %16 = vsyncadd [#allocation3], %s15
      %s18 = sshll.u32 %s1, 4
      %s19 = int_to_ptr.vmem [resolvable:$true] %s18
      %21 = dma.vmem_to_smem %s19, 16, [#allocation2], [#allocation3]
    $region9: #{residual_block.3} parent=1 // pred_fallthru
      _
    // Predicated region
    $region10: #{residual_block.3} parent=1 // pred_check
      _
    $region11: #{residual_block.3} parent=1 // pred_check_branch
      %23 = sbr.rel (0) target = $region13
    $region12: #{residual_block.3} parent=1 // pred_region
      %s25 = ssub.s32 16, 16
      %26 = vsyncadd [#allocation5], %s25
      %s28 = sshll.u32 %s2, 4
      %s29 = int_to_ptr.vmem [resolvable:$true] %s28
      %31 = dma.vmem_to_smem %s29, 16, [#allocation4], [#allocation5]
    $region13: #{residual_block.3} parent=1 // pred_fallthru
      _
    // Predicated region
    $region14: #{residual_block.3} parent=1 // pred_check
      _
    $region15: #{residual_block.3} parent=1 // pred_check_branch
      %33 = sbr.rel (0) target = $region17
    $region16: #{residual_block.3} parent=1 // pred_region
      %34 = dma.done [#allocation3], 16
    $region17: #{residual_block.3} parent=1 // pred_fallthru
      _
    // Predicated region
    $region18: #{residual_block.3} parent=1 // pred_check
      _
    $region19: #{residual_block.3} parent=1 // pred_check_branch
      %36 = sbr.rel (0) target = $region21
    $region20: #{residual_block.3} parent=1 // pred_region
      %37 = dma.done [#allocation5], 16
    $region21: #{residual_block.3} parent=1 // pred_fallthru
      _
    %38 = sfence
    %v39 = vlaneseq
    %v40 = vand.u32 %v39, 127
    %vm41 = vcmp.eq.s32.totalorder %v40, 0
    %vm42 = vcmp.eq.s32.totalorder %v40, 15
    %v43 = vld [vmem:[%s0] sm:$0x1]
    %v44 = vld [vmem:[%s0 + $0x4] sm:$0x1]
    %v45 = vld [vmem:[%s0 + $0x1] sm:$0x1]
    %v46 = vld [vmem:[%s0 + $0x5] sm:$0x1]
    %v47 = vld [vmem:[%s0 + $0x2] sm:$0x1]
    %v48 = vld [vmem:[%s0 + $0x6] sm:$0x1]
    %v49 = vld [vmem:[%s0 + $0x3] sm:$0x1]
    %v50 = vld [vmem:[%s0 + $0x7] sm:$0x1]
    %v53 = vrot.slane %v44, 7
    %vm54 = vcmask 1041409
    %v55 = vsel %vm54, %v53, %v43
    %vm57 = vcmask 1047680
    %58 = vrot.lane.b32.xlu0 %v55, 16
    %v59 = vpop.permute.xlu0 %58
    %v60 = vsel %vm57, %v59, %v55
    %61 = vrot.lane.b32.xlu0 %v60, 16
    %v62 = vpop.permute.xlu0 %61
    %v63 = vsel %vm57, %v62, %v55
    %v64 = vsel %vm41, 1, 0
    %vm65 = vcmp.eq.s32.totalorder %v64, 1
    %67 = vrot.lane.b32.xlu0 %v63, 113
    %v68 = vpop.permute.xlu0 %67
    %v70 = vsel %vm65, 0.0, %v68
    %v71 = vsel %vm42, 1, 0
    %vm72 = vcmp.eq.s32.totalorder %v71, 1
    %73 = vrot.lane.b32.xlu0 %v63, 127
    %v74 = vpop.permute.xlu0 %73
    %v76 = vsel %vm72, 0.0, %v74
    %v79 = vrot.slane %v46, 7
    %v80 = vsel %vm54, %v79, %v45
    %82 = vrot.lane.b32.xlu0 %v80, 16
    %v83 = vpop.permute.xlu0 %82
    %v84 = vsel %vm57, %v83, %v80
    %85 = vrot.lane.b32.xlu0 %v84, 16
    %v86 = vpop.permute.xlu0 %85
    %v87 = vsel %vm57, %v86, %v80
    %89 = vrot.lane.b32.xlu0 %v87, 113
    %v90 = vpop.permute.xlu0 %89
    %v92 = vsel %vm65, 0.0, %v90
    %93 = vrot.lane.b32.xlu0 %v87, 127
    %v94 = vpop.permute.xlu0 %93
    %v96 = vsel %vm72, 0.0, %v94
    %v99 = vrot.slane %v48, 7
    %v100 = vsel %vm54, %v99, %v47
    %102 = vrot.lane.b32.xlu0 %v100, 16
    %v103 = vpop.permute.xlu0 %102
    %v104 = vsel %vm57, %v103, %v100
    %105 = vrot.lane.b32.xlu0 %v104, 16
    %v106 = vpop.permute.xlu0 %105
    %v107 = vsel %vm57, %v106, %v100
    %109 = vrot.lane.b32.xlu0 %v107, 113
    %v110 = vpop.permute.xlu0 %109
    %v112 = vsel %vm65, 0.0, %v110
    %113 = vrot.lane.b32.xlu0 %v107, 127
    %v114 = vpop.permute.xlu0 %113
    %v116 = vsel %vm72, 0.0, %v114
    %v119 = vrot.slane %v50, 7
    %v120 = vsel %vm54, %v119, %v49
    %122 = vrot.lane.b32.xlu0 %v120, 16
    %v123 = vpop.permute.xlu0 %122
    %v124 = vsel %vm57, %v123, %v120
    %125 = vrot.lane.b32.xlu0 %v124, 16
    %v126 = vpop.permute.xlu0 %125
    %v127 = vsel %vm57, %v126, %v120
    %129 = vrot.lane.b32.xlu0 %v127, 113
    %v130 = vpop.permute.xlu0 %129
    %v132 = vsel %vm65, 0.0, %v130
    %133 = vrot.lane.b32.xlu0 %v127, 127
    %v134 = vpop.permute.xlu0 %133
    %v136 = vsel %vm72, 0.0, %v134
    %s137 = sld [smem:[#allocation2]]
    %v138 = vstv %s137
    %v139 = vmul.f32 %v138, %v70
    %s140 = sld [smem:[#allocation2 + $0x10]]
    %v141 = vstv %s140
    %v142 = vmul.f32 %v141, %v43
    %v143 = vmul.f32 %v141, %v44
    %v146 = vrot.slane %v143, 7
    %v147 = vsel %vm54, %v146, %v142
    %v149 = vadd.f32 %v139, %v147
    %s150 = sld [smem:[#allocation2 + $0x20]]
    %v151 = vstv %s150
    %v152 = vmul.f32 %v151, %v76
    %v153 = vadd.f32 %v149, %v152
    %s154 = sld [smem:[#allocation2 + $0x4]]
    %v155 = vstv %s154
    %v156 = vmul.f32 %v155, %v92
    %v157 = vadd.f32 %v153, %v156
    %s158 = sld [smem:[#allocation2 + $0x14]]
    %v159 = vstv %s158
    %v160 = vmul.f32 %v159, %v45
    %v161 = vmul.f32 %v159, %v46
    %v164 = vrot.slane %v161, 7
    %v165 = vsel %vm54, %v164, %v160
    %v167 = vadd.f32 %v157, %v165
    %s168 = sld [smem:[#allocation2 + $0x24]]
    %v169 = vstv %s168
    %v170 = vmul.f32 %v169, %v96
    %v171 = vadd.f32 %v167, %v170
    %s172 = sld [smem:[#allocation2 + $0x8]]
    %v173 = vstv %s172
    %v174 = vmul.f32 %v173, %v112
    %v175 = vadd.f32 %v171, %v174
    %s176 = sld [smem:[#allocation2 + $0x18]]
    %v177 = vstv %s176
    %v178 = vmul.f32 %v177, %v47
    %v179 = vmul.f32 %v177, %v48
    %v182 = vrot.slane %v179, 7
    %v183 = vsel %vm54, %v182, %v178
    %v185 = vadd.f32 %v175, %v183
    %s186 = sld [smem:[#allocation2 + $0x28]]
    %v187 = vstv %s186
    %v188 = vmul.f32 %v187, %v116
    %v189 = vadd.f32 %v185, %v188
    %s190 = sld [smem:[#allocation2 + $0xc]]
    %v191 = vstv %s190
    %v192 = vmul.f32 %v191, %v132
    %v193 = vadd.f32 %v189, %v192
    %s194 = sld [smem:[#allocation2 + $0x1c]]
    %v195 = vstv %s194
    %v196 = vmul.f32 %v195, %v49
    %v197 = vmul.f32 %v195, %v50
    %v200 = vrot.slane %v197, 7
    %v201 = vsel %vm54, %v200, %v196
    %v203 = vadd.f32 %v193, %v201
    %s204 = sld [smem:[#allocation2 + $0x2c]]
    %v205 = vstv %s204
    %v206 = vmul.f32 %v205, %v136
    %v207 = vadd.f32 %v203, %v206
    %s208 = sld [smem:[#allocation4]]
    %v209 = vstv %s208
    %v210 = vadd.f32 %v207, %v209
    %s211 = sld [smem:[#allocation2 + $0x1]]
    %v212 = vstv %s211
    %v213 = vmul.f32 %v212, %v70
    %s214 = sld [smem:[#allocation2 + $0x11]]
    %v215 = vstv %s214
    %v216 = vmul.f32 %v215, %v43
    %v217 = vmul.f32 %v215, %v44
    %v220 = vrot.slane %v217, 7
    %v221 = vsel %vm54, %v220, %v216
    %v223 = vadd.f32 %v213, %v221
    %s224 = sld [smem:[#allocation2 + $0x21]]
    %v225 = vstv %s224
    %v226 = vmul.f32 %v225, %v76
    %v227 = vadd.f32 %v223, %v226
    %s228 = sld [smem:[#allocation2 + $0x5]]
    %v229 = vstv %s228
    %v230 = vmul.f32 %v229, %v92
    %v231 = vadd.f32 %v227, %v230
    %s232 = sld [smem:[#allocation2 + $0x15]]
    %v233 = vstv %s232
    %v234 = vmul.f32 %v233, %v45
    %v235 = vmul.f32 %v233, %v46
    %v238 = vrot.slane %v235, 7
    %v239 = vsel %vm54, %v238, %v234
    %v241 = vadd.f32 %v231, %v239
    %s242 = sld [smem:[#allocation2 + $0x25]]
    %v243 = vstv %s242
    %v244 = vmul.f32 %v243, %v96
    %v245 = vadd.f32 %v241, %v244
    %s246 = sld [smem:[#allocation2 + $0x9]]
    %v247 = vstv %s246
    %v248 = vmul.f32 %v247, %v112
    %v249 = vadd.f32 %v245, %v248
    %s250 = sld [smem:[#allocation2 + $0x19]]
    %v251 = vstv %s250
    %v252 = vmul.f32 %v251, %v47
    %v253 = vmul.f32 %v251, %v48
    %v256 = vrot.slane %v253, 7
    %v257 = vsel %vm54, %v256, %v252
    %v259 = vadd.f32 %v249, %v257
    %s260 = sld [smem:[#allocation2 + $0x29]]
    %v261 = vstv %s260
    %v262 = vmul.f32 %v261, %v116
    %v263 = vadd.f32 %v259, %v262
    %s264 = sld [smem:[#allocation2 + $0xd]]
    %v265 = vstv %s264
    %v266 = vmul.f32 %v265, %v132
    %v267 = vadd.f32 %v263, %v266
    %s268 = sld [smem:[#allocation2 + $0x1d]]
    %v269 = vstv %s268
    %v270 = vmul.f32 %v269, %v49
    %v271 = vmul.f32 %v269, %v50
    %v274 = vrot.slane %v271, 7
    %v275 = vsel %vm54, %v274, %v270
    %v277 = vadd.f32 %v267, %v275
    %s278 = sld [smem:[#allocation2 + $0x2d]]
    %v279 = vstv %s278
    %v280 = vmul.f32 %v279, %v136
    %v281 = vadd.f32 %v277, %v280
    %s282 = sld [smem:[#allocation4 + $0x1]]
    %v283 = vstv %s282
    %v284 = vadd.f32 %v281, %v283
    %s285 = sld [smem:[#allocation2 + $0x2]]
    %v286 = vstv %s285
    %v287 = vmul.f32 %v286, %v70
    %s288 = sld [smem:[#allocation2 + $0x12]]
    %v289 = vstv %s288
    %v290 = vmul.f32 %v289, %v43
    %v291 = vmul.f32 %v289, %v44
    %v294 = vrot.slane %v291, 7
    %v295 = vsel %vm54, %v294, %v290
    %v297 = vadd.f32 %v287, %v295
    %s298 = sld [smem:[#allocation2 + $0x22]]
    %v299 = vstv %s298
    %v300 = vmul.f32 %v299, %v76
    %v301 = vadd.f32 %v297, %v300
    %s302 = sld [smem:[#allocation2 + $0x6]]
    %v303 = vstv %s302
    %v304 = vmul.f32 %v303, %v92
    %v305 = vadd.f32 %v301, %v304
    %s306 = sld [smem:[#allocation2 + $0x16]]
    %v307 = vstv %s306
    %v308 = vmul.f32 %v307, %v45
    %v309 = vmul.f32 %v307, %v46
    %v312 = vrot.slane %v309, 7
    %v313 = vsel %vm54, %v312, %v308
    %v315 = vadd.f32 %v305, %v313
    %s316 = sld [smem:[#allocation2 + $0x26]]
    %v317 = vstv %s316
    %v318 = vmul.f32 %v317, %v96
    %v319 = vadd.f32 %v315, %v318
    %s320 = sld [smem:[#allocation2 + $0xa]]
    %v321 = vstv %s320
    %v322 = vmul.f32 %v321, %v112
    %v323 = vadd.f32 %v319, %v322
    %s324 = sld [smem:[#allocation2 + $0x1a]]
    %v325 = vstv %s324
    %v326 = vmul.f32 %v325, %v47
    %v327 = vmul.f32 %v325, %v48
    %v330 = vrot.slane %v327, 7
    %v331 = vsel %vm54, %v330, %v326
    %v333 = vadd.f32 %v323, %v331
    %s334 = sld [smem:[#allocation2 + $0x2a]]
    %v335 = vstv %s334
    %v336 = vmul.f32 %v335, %v116
    %v337 = vadd.f32 %v333, %v336
    %s338 = sld [smem:[#allocation2 + $0xe]]
    %v339 = vstv %s338
    %v340 = vmul.f32 %v339, %v132
    %v341 = vadd.f32 %v337, %v340
    %s342 = sld [smem:[#allocation2 + $0x1e]]
    %v343 = vstv %s342
    %v344 = vmul.f32 %v343, %v49
    %v345 = vmul.f32 %v343, %v50
    %v348 = vrot.slane %v345, 7
    %v349 = vsel %vm54, %v348, %v344
    %v351 = vadd.f32 %v341, %v349
    %s352 = sld [smem:[#allocation2 + $0x2e]]
    %v353 = vstv %s352
    %v354 = vmul.f32 %v353, %v136
    %v355 = vadd.f32 %v351, %v354
    %s356 = sld [smem:[#allocation4 + $0x2]]
    %v357 = vstv %s356
    %v358 = vadd.f32 %v355, %v357
    %s359 = sld [smem:[#allocation2 + $0x3]]
    %v360 = vstv %s359
    %v361 = vmul.f32 %v360, %v70
    %s362 = sld [smem:[#allocation2 + $0x13]]
    %v363 = vstv %s362
    %v364 = vmul.f32 %v363, %v43
    %v365 = vmul.f32 %v363, %v44
    %v368 = vrot.slane %v365, 7
    %v369 = vsel %vm54, %v368, %v364
    %v371 = vadd.f32 %v361, %v369
    %s372 = sld [smem:[#allocation2 + $0x23]]
    %v373 = vstv %s372
    %v374 = vmul.f32 %v373, %v76
    %v375 = vadd.f32 %v371, %v374
    %s376 = sld [smem:[#allocation2 + $0x7]]
    %v377 = vstv %s376
    %v378 = vmul.f32 %v377, %v92
    %v379 = vadd.f32 %v375, %v378
    %s380 = sld [smem:[#allocation2 + $0x17]]
    %v381 = vstv %s380
    %v382 = vmul.f32 %v381, %v45
    %v383 = vmul.f32 %v381, %v46
    %v386 = vrot.slane %v383, 7
    %v387 = vsel %vm54, %v386, %v382
    %v389 = vadd.f32 %v379, %v387
    %s390 = sld [smem:[#allocation2 + $0x27]]
    %v391 = vstv %s390
    %v392 = vmul.f32 %v391, %v96
    %v393 = vadd.f32 %v389, %v392
    %s394 = sld [smem:[#allocation2 + $0xb]]
    %v395 = vstv %s394
    %v396 = vmul.f32 %v395, %v112
    %v397 = vadd.f32 %v393, %v396
    %s398 = sld [smem:[#allocation2 + $0x1b]]
    %v399 = vstv %s398
    %v400 = vmul.f32 %v399, %v47
    %v401 = vmul.f32 %v399, %v48
    %v404 = vrot.slane %v401, 7
    %v405 = vsel %vm54, %v404, %v400
    %v407 = vadd.f32 %v397, %v405
    %s408 = sld [smem:[#allocation2 + $0x2b]]
    %v409 = vstv %s408
    %v410 = vmul.f32 %v409, %v116
    %v411 = vadd.f32 %v407, %v410
    %s412 = sld [smem:[#allocation2 + $0xf]]
    %v413 = vstv %s412
    %v414 = vmul.f32 %v413, %v132
    %v415 = vadd.f32 %v411, %v414
    %s416 = sld [smem:[#allocation2 + $0x1f]]
    %v417 = vstv %s416
    %v418 = vmul.f32 %v417, %v49
    %v419 = vmul.f32 %v417, %v50
    %v422 = vrot.slane %v419, 7
    %v423 = vsel %vm54, %v422, %v418
    %v425 = vadd.f32 %v415, %v423
    %s426 = sld [smem:[#allocation2 + $0x2f]]
    %v427 = vstv %s426
    %v428 = vmul.f32 %v427, %v136
    %v429 = vadd.f32 %v425, %v428
    %s430 = sld [smem:[#allocation4 + $0x3]]
    %v431 = vstv %s430
    %v432 = vadd.f32 %v429, %v431
    %vm433 = vcmask 123904
    %v434 = vsel %vm433, %v210, 0.0
    %v435 = vrot.slane %v434, 4
    %v436 = vadd.f32 %v434, %v435
    %v437 = vrot.slane %v436, 2
    %v438 = vadd.f32 %v436, %v437
    %v439 = vrot.slane %v438, 1
    %v440 = vadd.f32 %v438, %v439
    %v441 = vsel %vm433, %v284, 0.0
    %v442 = vrot.slane %v441, 4
    %v443 = vadd.f32 %v441, %v442
    %v444 = vrot.slane %v443, 2
    %v445 = vadd.f32 %v443, %v444
    %v446 = vrot.slane %v445, 1
    %v447 = vadd.f32 %v445, %v446
    %v448 = vsel %vm433, %v358, 0.0
    %v449 = vrot.slane %v448, 4
    %v450 = vadd.f32 %v448, %v449
    %v451 = vrot.slane %v450, 2
    %v452 = vadd.f32 %v450, %v451
    %v453 = vrot.slane %v452, 1
    %v454 = vadd.f32 %v452, %v453
    %v455 = vsel %vm433, %v432, 0.0
    %v456 = vrot.slane %v455, 4
    %v457 = vadd.f32 %v455, %v456
    %v458 = vrot.slane %v457, 2
    %v459 = vadd.f32 %v457, %v458
    %v460 = vrot.slane %v459, 1
    %v461 = vadd.f32 %v459, %v460
    %v462 = vmul.f32 %v210, %v210
    %v463 = vsel %vm433, %v462, 0.0
    %v464 = vrot.slane %v463, 4
    %v465 = vadd.f32 %v463, %v464
    %v466 = vrot.slane %v465, 2
    %v467 = vadd.f32 %v465, %v466
    %v468 = vrot.slane %v467, 1
    %v469 = vadd.f32 %v467, %v468
    %v470 = vmul.f32 %v284, %v284
    %v471 = vsel %vm433, %v470, 0.0
    %v472 = vrot.slane %v471, 4
    %v473 = vadd.f32 %v471, %v472
    %v474 = vrot.slane %v473, 2
    %v475 = vadd.f32 %v473, %v474
    %v476 = vrot.slane %v475, 1
    %v477 = vadd.f32 %v475, %v476
    %v478 = vmul.f32 %v358, %v358
    %v479 = vsel %vm433, %v478, 0.0
    %v480 = vrot.slane %v479, 4
    %v481 = vadd.f32 %v479, %v480
    %v482 = vrot.slane %v481, 2
    %v483 = vadd.f32 %v481, %v482
    %v484 = vrot.slane %v483, 1
    %v485 = vadd.f32 %v483, %v484
    %v486 = vmul.f32 %v432, %v432
    %v487 = vsel %vm433, %v486, 0.0
    %v488 = vrot.slane %v487, 4
    %v489 = vadd.f32 %v487, %v488
    %v490 = vrot.slane %v489, 2
    %v491 = vadd.f32 %v489, %v490
    %v492 = vrot.slane %v491, 1
    %v493 = vadd.f32 %v491, %v492
    %vm494 = vcmask 1040384
    %v495 = vsel %vm494, %v440, %v447
    %vm496 = vcmask 1041408
    %v497 = vsel %vm496, %v495, %v454
    %vm498 = vcmask 1042432
    %v499 = vsel %vm498, %v497, %v461
    %vm500 = vcmask 1043456
    %v501 = vsel %vm500, %v499, %v469
    %vm502 = vcmask 1044480
    %v503 = vsel %vm502, %v501, %v477
    %vm504 = vcmask 1045504
    %v505 = vsel %vm504, %v503, %v485
    %vm506 = vcmask 1046528
    %v507 = vsel %vm506, %v505, %v493
    %vm508 = vcmask 130048
    %v509 = vsel %vm508, %v507, 0.0
    %510 = vadd.xlane.f32.xlu0 %v509
    %v511 = vpop.xlane.xlu0 %510
    %vm512 = vcmask 7168
    %513 = vst.msk [vmem:[%s3] sm:$0xff] %vm512, %v511
    // Predicated region
    $region22: #{residual_block.3} parent=1 // pred_check
      _
    $region23: #{residual_block.3} parent=1 // pred_check_branch
      %515 = sbr.rel (0) target = $region25
    $region24: #{residual_block.3} parent=1 // pred_region
      _
    $region25: #{residual_block.3} parent=1 // pred_fallthru
      _
    // Predicated region
    $region26: #{residual_block.3} parent=1 // pred_check
      _
    $region27: #{residual_block.3} parent=1 // pred_check_branch
      %517 = sbr.rel (0) target = $region29
    $region28: #{residual_block.3} parent=1 // pred_region
      _
    $region29: #{residual_block.3} parent=1 // pred_fallthru
      _
    %518 = vsyncpa [#allocation3], 1
    %519 = vsyncpa [#allocation5], 1

// kernel: residual_block.4
$region0: #{residual_block.4}
  #allocation0 [shape = 'u32[]', space=smem, size = 0x4, offset = 0x4, fixed_abs, tag = 'smem constant byte address 0x4 - core index']
  #allocation1 [shape = 'u32[144,128]{1,0:T(1,128)}', space=vmem, size = 0x12000, scoped, tag = 'internal scratch']
  %s0 = inlined_call_operand.vmem [shape: f32[2,4,16], index: 0, kind: input, shape index: {}]
  %s1 = inlined_call_operand.vmem [shape: f32[48], index: 1, kind: input, shape index: {}]
  %s2 = inlined_call_operand.vmem [shape: f32[4], index: 2, kind: input, shape index: {}]
  %s3 = inlined_call_operand.vmem [shape: f32[8], index: 3, kind: input, shape index: {}]
  %s4 = inlined_call_operand.vmem [shape: f32[48], index: 4, kind: input, shape index: {}]
  %s5 = inlined_call_operand.vmem [shape: f32[4], index: 5, kind: input, shape index: {}]
  %s6 = inlined_call_operand.vmem [shape: f32[1,8,1], index: 6, kind: output, shape index: {}]
  %s7 = sld [smem:[#allocation0]]
  $region54: #{residual_block.4} parent=0
    _
  %s9 = ssub.s32 1, %s7
  %s10 = scalar_select 0, %s9, %s7
  $region1: #{residual_block.4} parent=0
    #allocation2 [shape = 'u8[512]{0}', space=smem, size = 0x200, scoped, tag = 'input window, operand 1, single buffered']
    #allocation3 [shape = 's32[1]{0}', space=sflag, size = 0x4, scoped, tag = 'scoped memory for residual_block.4']
    #allocation4 [shape = 'u8[512]{0}', space=smem, size = 0x200, scoped, tag = 'input window, operand 2, single buffered']
    #allocation5 [shape = 's32[1]{0}', space=sflag, size = 0x4, scoped, tag = 'scoped memory for residual_block.4']
    #allocation6 [shape = 'u8[512]{0}', space=smem, size = 0x200, scoped, tag = 'input window, operand 3, single buffered']
    #allocation7 [shape = 'u8[512]{0}', space=smem, size = 0x200, scoped, tag = 'input window, operand 4, single buffered']
    #allocation8 [shape = 's32[1]{0}', space=sflag, size = 0x4, scoped, tag = 'scoped memory for residual_block.4']
    #allocation9 [shape = 'u8[512]{0}', space=smem, size = 0x200, scoped, tag = 'input window, operand 5, single buffered']
    %11 = vsyncpa [#allocation3], 0
    %12 = vsyncpa [#allocation5], 0
    %13 = vsyncpa [#allocation8], 0
    // Predicated region
    $region2: #{residual_block.4} parent=1 // pred_check
      _
    $region3: #{residual_block.4} parent=1 // pred_check_branch
      %15 = sbr.rel (0) target = $region5
    $region4: #{residual_block.4} parent=1 // pred_region
      _
    $region5: #{residual_block.4} parent=1 // pred_fallthru
      _
    // Predicated region
    $region6: #{residual_block.4} parent=1 // pred_check
      _
    $region7: #{residual_block.4} parent=1 // pred_check_branch
      %17 = sbr.rel (0) target = $region9
    $region8: #{residual_block.4} parent=1 // pred_region
      %s19 = ssub.s32 16, 16
      %20 = vsyncadd [#allocation3], %s19
      %s22 = sshll.u32 %s1, 4
      %s23 = int_to_ptr.vmem [resolvable:$true] %s22
      %25 = dma.vmem_to_smem %s23, 16, [#allocation2], [#allocation3]
    $region9: #{residual_block.4} parent=1 // pred_fallthru
      _
    // Predicated region
    $region10: #{residual_block.4} parent=1 // pred_check
      _
    $region11: #{residual_block.4} parent=1 // pred_check_branch
      %27 = sbr.rel (0) target = $region13
    $region12: #{residual_block.4} parent=1 // pred_region
      %s29 = ssub.s32 16, 16
      %30 = vsyncadd [#allocation5], %s29
      %s32 = sshll.u32 %s2, 4
      %s33 = int_to_ptr.vmem [resolvable:$true] %s32
      %35 = dma.vmem_to_smem %s33, 16, [#allocation4], [#allocation5]
    $region13: #{residual_block.4} parent=1 // pred_fallthru
      _
    // Predicated region
    $region14: #{residual_block.4} parent=1 // pred_check
      _
    $region15: #{residual_block.4} parent=1 // pred_check_branch
      %37 = sbr.rel (0) target = $region17
    $region16: #{residual_block.4} parent=1 // pred_region
      %s39 = ssub.s32 16, 16
      %40 = vsyncadd [#allocation5], %s39
      %s42 = sshll.u32 %s3, 4
      %s43 = int_to_ptr.vmem [resolvable:$true] %s42
      %45 = dma.vmem_to_smem %s43, 16, [#allocation6], [#allocation5]
    $region17: #{residual_block.4} parent=1 // pred_fallthru
      _
    // Predicated region
    $region18: #{residual_block.4} parent=1 // pred_check
      _
    $region19: #{residual_block.4} parent=1 // pred_check_branch
      %47 = sbr.rel (0) target = $region21
    $region20: #{residual_block.4} parent=1 // pred_region
      %s49 = ssub.s32 16, 16
      %50 = vsyncadd [#allocation8], %s49
      %s52 = sshll.u32 %s4, 4
      %s53 = int_to_ptr.vmem [resolvable:$true] %s52
      %55 = dma.vmem_to_smem %s53, 16, [#allocation7], [#allocation8]
    $region21: #{residual_block.4} parent=1 // pred_fallthru
      _
    // Predicated region
    $region22: #{residual_block.4} parent=1 // pred_check
      _
    $region23: #{residual_block.4} parent=1 // pred_check_branch
      %57 = sbr.rel (0) target = $region25
    $region24: #{residual_block.4} parent=1 // pred_region
      %s59 = ssub.s32 16, 16
      %60 = vsyncadd [#allocation8], %s59
      %s62 = sshll.u32 %s5, 4
      %s63 = int_to_ptr.vmem [resolvable:$true] %s62
      %65 = dma.vmem_to_smem %s63, 16, [#allocation9], [#allocation8]
    $region25: #{residual_block.4} parent=1 // pred_fallthru
      _
    // Predicated region
    $region26: #{residual_block.4} parent=1 // pred_check
      _
    $region27: #{residual_block.4} parent=1 // pred_check_branch
      %67 = sbr.rel (0) target = $region29
    $region28: #{residual_block.4} parent=1 // pred_region
      %68 = dma.done [#allocation3], 16
    $region29: #{residual_block.4} parent=1 // pred_fallthru
      _
    // Predicated region
    $region30: #{residual_block.4} parent=1 // pred_check
      _
    $region31: #{residual_block.4} parent=1 // pred_check_branch
      %70 = sbr.rel (0) target = $region33
    $region32: #{residual_block.4} parent=1 // pred_region
      %71 = dma.done [#allocation5], 16
    $region33: #{residual_block.4} parent=1 // pred_fallthru
      _
    // Predicated region
    $region34: #{residual_block.4} parent=1 // pred_check
      _
    $region35: #{residual_block.4} parent=1 // pred_check_branch
      %73 = sbr.rel (0) target = $region37
    $region36: #{residual_block.4} parent=1 // pred_region
      %74 = dma.done [#allocation5], 16
    $region37: #{residual_block.4} parent=1 // pred_fallthru
      _
    // Predicated region
    $region38: #{residual_block.4} parent=1 // pred_check
      _
    $region39: #{residual_block.4} parent=1 // pred_check_branch
      %76 = sbr.rel (0) target = $region41
    $region40: #{residual_block.4} parent=1 // pred_region
      %77 = dma.done [#allocation8], 16
    $region41: #{residual_block.4} parent=1 // pred_fallthru
      _
    // Predicated region
    $region42: #{residual_block.4} parent=1 // pred_check
      _
    $region43: #{residual_block.4} parent=1 // pred_check_branch
      %79 = sbr.rel (0) target = $region45
    $region44: #{residual_block.4} parent=1 // pred_region
      %80 = dma.done [#allocation8], 16
    $region45: #{residual_block.4} parent=1 // pred_fallthru
      _
    %81 = sfence
    %v82 = vlaneseq
    %v83 = vand.u32 %v82, 127
    %vm84 = vcmp.eq.s32.totalorder %v83, 0
    %vm85 = vcmp.eq.s32.totalorder %v83, 15
    %v86 = vld [vmem:[%s0] sm:$0x1]
    %v87 = vld [vmem:[%s0 + $0x4] sm:$0x1]
    %v88 = vld [vmem:[%s0 + $0x1] sm:$0x1]
    %v89 = vld [vmem:[%s0 + $0x5] sm:$0x1]
    %v90 = vld [vmem:[%s0 + $0x2] sm:$0x1]
    %v91 = vld [vmem:[%s0 + $0x6] sm:$0x1]
    %v92 = vld [vmem:[%s0 + $0x3] sm:$0x1]
    %v93 = vld [vmem:[%s0 + $0x7] sm:$0x1]
    %v96 = vrot.slane %v87, 7
    %vm97 = vcmask 1041409
    %v98 = vsel %vm97, %v96, %v86
    %vm100 = vcmask 1047680
    %101 = vrot.lane.b32.xlu0 %v98, 16
    %v102 = vpop.permute.xlu0 %101
    %v103 = vsel %vm100, %v102, %v98
    %104 = vrot.lane.b32.xlu0 %v103, 16
    %v105 = vpop.permute.xlu0 %104
    %v106 = vsel %vm100, %v105, %v98
    %v107 = vsel %vm84, 1, 0
    %vm108 = vcmp.eq.s32.totalorder %v107, 1
    %110 = vrot.lane.b32.xlu0 %v106, 113
    %v111 = vpop.permute.xlu0 %110
    %v113 = vsel %vm108, 0.0, %v111
    %v114 = vsel %vm85, 1, 0
    %vm115 = vcmp.eq.s32.totalorder %v114, 1
    %116 = vrot.lane.b32.xlu0 %v106, 127
    %v117 = vpop.permute.xlu0 %116
    %v119 = vsel %vm115, 0.0, %v117
    %v122 = vrot.slane %v89, 7
    %v123 = vsel %vm97, %v122, %v88
    %125 = vrot.lane.b32.xlu0 %v123, 16
    %v126 = vpop.permute.xlu0 %125
    %v127 = vsel %vm100, %v126, %v123
    %128 = vrot.lane.b32.xlu0 %v127, 16
    %v129 = vpop.permute.xlu0 %128
    %v130 = vsel %vm100, %v129, %v123
    %132 = vrot.lane.b32.xlu0 %v130, 113
    %v133 = vpop.permute.xlu0 %132
    %v135 = vsel %vm108, 0.0, %v133
    %136 = vrot.lane.b32.xlu0 %v130, 127
    %v137 = vpop.permute.xlu0 %136
    %v139 = vsel %vm115, 0.0, %v137
    %v142 = vrot.slane %v91, 7
    %v143 = vsel %vm97, %v142, %v90
    %145 = vrot.lane.b32.xlu0 %v143, 16
    %v146 = vpop.permute.xlu0 %145
    %v147 = vsel %vm100, %v146, %v143
    %148 = vrot.lane.b32.xlu0 %v147, 16
    %v149 = vpop.permute.xlu0 %148
    %v150 = vsel %vm100, %v149, %v143
    %152 = vrot.lane.b32.xlu0 %v150, 113
    %v153 = vpop.permute.xlu0 %152
    %v155 = vsel %vm108, 0.0, %v153
    %156 = vrot.lane.b32.xlu0 %v150, 127
    %v157 = vpop.permute.xlu0 %156
    %v159 = vsel %vm115, 0.0, %v157
    %v162 = vrot.slane %v93, 7
    %v163 = vsel %vm97, %v162, %v92
    %165 = vrot.lane.b32.xlu0 %v163, 16
    %v166 = vpop.permute.xlu0 %165
    %v167 = vsel %vm100, %v166, %v163
    %168 = vrot.lane.b32.xlu0 %v167, 16
    %v169 = vpop.permute.xlu0 %168
    %v170 = vsel %vm100, %v169, %v163
    %172 = vrot.lane.b32.xlu0 %v170, 113
    %v173 = vpop.permute.xlu0 %172
    %v175 = vsel %vm108, 0.0, %v173
    %176 = vrot.lane.b32.xlu0 %v170, 127
    %v177 = vpop.permute.xlu0 %176
    %v179 = vsel %vm115, 0.0, %v177
    %s180 = sld [smem:[#allocation2]]
    %v181 = vstv %s180
    %v182 = vmul.f32 %v181, %v113
    %s183 = sld [smem:[#allocation2 + $0x10]]
    %v184 = vstv %s183
    %v185 = vmul.f32 %v184, %v86
    %v186 = vmul.f32 %v184, %v87
    %v189 = vrot.slane %v186, 7
    %v190 = vsel %vm97, %v189, %v185
    %v192 = vadd.f32 %v182, %v190
    %s193 = sld [smem:[#allocation2 + $0x20]]
    %v194 = vstv %s193
    %v195 = vmul.f32 %v194, %v119
    %v196 = vadd.f32 %v192, %v195
    %s197 = sld [smem:[#allocation2 + $0x4]]
    %v198 = vstv %s197
    %v199 = vmul.f32 %v198, %v135
    %v200 = vadd.f32 %v196, %v199
    %s201 = sld [smem:[#allocation2 + $0x14]]
    %v202 = vstv %s201
    %v203 = vmul.f32 %v202, %v88
    %v204 = vmul.f32 %v202, %v89
    %v207 = vrot.slane %v204, 7
    %v208 = vsel %vm97, %v207, %v203
    %v210 = vadd.f32 %v200, %v208
    %s211 = sld [smem:[#allocation2 + $0x24]]
    %v212 = vstv %s211
    %v213 = vmul.f32 %v212, %v139
    %v214 = vadd.f32 %v210, %v213
    %s215 = sld [smem:[#allocation2 + $0x8]]
    %v216 = vstv %s215
    %v217 = vmul.f32 %v216, %v155
    %v218 = vadd.f32 %v214, %v217
    %s219 = sld [smem:[#allocation2 + $0x18]]
    %v220 = vstv %s219
    %v221 = vmul.f32 %v220, %v90
    %v222 = vmul.f32 %v220, %v91
    %v225 = vrot.slane %v222, 7
    %v226 = vsel %vm97, %v225, %v221
    %v228 = vadd.f32 %v218, %v226
    %s229 = sld [smem:[#allocation2 + $0x28]]
    %v230 = vstv %s229
    %v231 = vmul.f32 %v230, %v159
    %v232 = vadd.f32 %v228, %v231
    %s233 = sld [smem:[#allocation2 + $0xc]]
    %v234 = vstv %s233
    %v235 = vmul.f32 %v234, %v175
    %v236 = vadd.f32 %v232, %v235
    %s237 = sld [smem:[#allocation2 + $0x1c]]
    %v238 = vstv %s237
    %v239 = vmul.f32 %v238, %v92
    %v240 = vmul.f32 %v238, %v93
    %v243 = vrot.slane %v240, 7
    %v244 = vsel %vm97, %v243, %v239
    %v246 = vadd.f32 %v236, %v244
    %s247 = sld [smem:[#allocation2 + $0x2c]]
    %v248 = vstv %s247
    %v249 = vmul.f32 %v248, %v179
    %v250 = vadd.f32 %v246, %v249
    %s251 = sld [smem:[#allocation4]]
    %v252 = vstv %s251
    %v253 = vadd.f32 %v250, %v252
    %s254 = sld [smem:[#allocation2 + $0x1]]
    %v255 = vstv %s254
    %v256 = vmul.f32 %v255, %v113
    %s257 = sld [smem:[#allocation2 + $0x11]]
    %v258 = vstv %s257
    %v259 = vmul.f32 %v258, %v86
    %v260 = vmul.f32 %v258, %v87
    %v263 = vrot.slane %v260, 7
    %v264 = vsel %vm97, %v263, %v259
    %v266 = vadd.f32 %v256, %v264
    %s267 = sld [smem:[#allocation2 + $0x21]]
    %v268 = vstv %s267
    %v269 = vmul.f32 %v268, %v119
    %v270 = vadd.f32 %v266, %v269
    %s271 = sld [smem:[#allocation2 + $0x5]]
    %v272 = vstv %s271
    %v273 = vmul.f32 %v272, %v135
    %v274 = vadd.f32 %v270, %v273
    %s275 = sld [smem:[#allocation2 + $0x15]]
    %v276 = vstv %s275
    %v277 = vmul.f32 %v276, %v88
    %v278 = vmul.f32 %v276, %v89
    %v281 = vrot.slane %v278, 7
    %v282 = vsel %vm97, %v281, %v277
    %v284 = vadd.f32 %v274, %v282
    %s285 = sld [smem:[#allocation2 + $0x25]]
    %v286 = vstv %s285
    %v287 = vmul.f32 %v286, %v139
    %v288 = vadd.f32 %v284, %v287
    %s289 = sld [smem:[#allocation2 + $0x9]]
    %v290 = vstv %s289
    %v291 = vmul.f32 %v290, %v155
    %v292 = vadd.f32 %v288, %v291
    %s293 = sld [smem:[#allocation2 + $0x19]]
    %v294 = vstv %s293
    %v295 = vmul.f32 %v294, %v90
    %v296 = vmul.f32 %v294, %v91
    %v299 = vrot.slane %v296, 7
    %v300 = vsel %vm97, %v299, %v295
    %v302 = vadd.f32 %v292, %v300
    %s303 = sld [smem:[#allocation2 + $0x29]]
    %v304 = vstv %s303
    %v305 = vmul.f32 %v304, %v159
    %v306 = vadd.f32 %v302, %v305
    %s307 = sld [smem:[#allocation2 + $0xd]]
    %v308 = vstv %s307
    %v309 = vmul.f32 %v308, %v175
    %v310 = vadd.f32 %v306, %v309
    %s311 = sld [smem:[#allocation2 + $0x1d]]
    %v312 = vstv %s311
    %v313 = vmul.f32 %v312, %v92
    %v314 = vmul.f32 %v312, %v93
    %v317 = vrot.slane %v314, 7
    %v318 = vsel %vm97, %v317, %v313
    %v320 = vadd.f32 %v310, %v318
    %s321 = sld [smem:[#allocation2 + $0x2d]]
    %v322 = vstv %s321
    %v323 = vmul.f32 %v322, %v179
    %v324 = vadd.f32 %v320, %v323
    %s325 = sld [smem:[#allocation4 + $0x1]]
    %v326 = vstv %s325
    %v327 = vadd.f32 %v324, %v326
    %s328 = sld [smem:[#allocation2 + $0x2]]
    %v329 = vstv %s328
    %v330 = vmul.f32 %v329, %v113
    %s331 = sld [smem:[#allocation2 + $0x12]]
    %v332 = vstv %s331
    %v333 = vmul.f32 %v332, %v86
    %v334 = vmul.f32 %v332, %v87
    %v337 = vrot.slane %v334, 7
    %v338 = vsel %vm97, %v337, %v333
    %v340 = vadd.f32 %v330, %v338
    %s341 = sld [smem:[#allocation2 + $0x22]]
    %v342 = vstv %s341
    %v343 = vmul.f32 %v342, %v119
    %v344 = vadd.f32 %v340, %v343
    %s345 = sld [smem:[#allocation2 + $0x6]]
    %v346 = vstv %s345
    %v347 = vmul.f32 %v346, %v135
    %v348 = vadd.f32 %v344, %v347
    %s349 = sld [smem:[#allocation2 + $0x16]]
    %v350 = vstv %s349
    %v351 = vmul.f32 %v350, %v88
    %v352 = vmul.f32 %v350, %v89
    %v355 = vrot.slane %v352, 7
    %v356 = vsel %vm97, %v355, %v351
    %v358 = vadd.f32 %v348, %v356
    %s359 = sld [smem:[#allocation2 + $0x26]]
    %v360 = vstv %s359
    %v361 = vmul.f32 %v360, %v139
    %v362 = vadd.f32 %v358, %v361
    %s363 = sld [smem:[#allocation2 + $0xa]]
    %v364 = vstv %s363
    %v365 = vmul.f32 %v364, %v155
    %v366 = vadd.f32 %v362, %v365
    %s367 = sld [smem:[#allocation2 + $0x1a]]
    %v368 = vstv %s367
    %v369 = vmul.f32 %v368, %v90
    %v370 = vmul.f32 %v368, %v91
    %v373 = vrot.slane %v370, 7
    %v374 = vsel %vm97, %v373, %v369
    %v376 = vadd.f32 %v366, %v374
    %s377 = sld [smem:[#allocation2 + $0x2a]]
    %v378 = vstv %s377
    %v379 = vmul.f32 %v378, %v159
    %v380 = vadd.f32 %v376, %v379
    %s381 = sld [smem:[#allocation2 + $0xe]]
    %v382 = vstv %s381
    %v383 = vmul.f32 %v382, %v175
    %v384 = vadd.f32 %v380, %v383
    %s385 = sld [smem:[#allocation2 + $0x1e]]
    %v386 = vstv %s385
    %v387 = vmul.f32 %v386, %v92
    %v388 = vmul.f32 %v386, %v93
    %v391 = vrot.slane %v388, 7
    %v392 = vsel %vm97, %v391, %v387
    %v394 = vadd.f32 %v384, %v392
    %s395 = sld [smem:[#allocation2 + $0x2e]]
    %v396 = vstv %s395
    %v397 = vmul.f32 %v396, %v179
    %v398 = vadd.f32 %v394, %v397
    %s399 = sld [smem:[#allocation4 + $0x2]]
    %v400 = vstv %s399
    %v401 = vadd.f32 %v398, %v400
    %s402 = sld [smem:[#allocation2 + $0x3]]
    %v403 = vstv %s402
    %v404 = vmul.f32 %v403, %v113
    %s405 = sld [smem:[#allocation2 + $0x13]]
    %v406 = vstv %s405
    %v407 = vmul.f32 %v406, %v86
    %v408 = vmul.f32 %v406, %v87
    %v411 = vrot.slane %v408, 7
    %v412 = vsel %vm97, %v411, %v407
    %v414 = vadd.f32 %v404, %v412
    %s415 = sld [smem:[#allocation2 + $0x23]]
    %v416 = vstv %s415
    %v417 = vmul.f32 %v416, %v119
    %v418 = vadd.f32 %v414, %v417
    %s419 = sld [smem:[#allocation2 + $0x7]]
    %v420 = vstv %s419
    %v421 = vmul.f32 %v420, %v135
    %v422 = vadd.f32 %v418, %v421
    %s423 = sld [smem:[#allocation2 + $0x17]]
    %v424 = vstv %s423
    %v425 = vmul.f32 %v424, %v88
    %v426 = vmul.f32 %v424, %v89
    %v429 = vrot.slane %v426, 7
    %v430 = vsel %vm97, %v429, %v425
    %v432 = vadd.f32 %v422, %v430
    %s433 = sld [smem:[#allocation2 + $0x27]]
    %v434 = vstv %s433
    %v435 = vmul.f32 %v434, %v139
    %v436 = vadd.f32 %v432, %v435
    %s437 = sld [smem:[#allocation2 + $0xb]]
    %v438 = vstv %s437
    %v439 = vmul.f32 %v438, %v155
    %v440 = vadd.f32 %v436, %v439
    %s441 = sld [smem:[#allocation2 + $0x1b]]
    %v442 = vstv %s441
    %v443 = vmul.f32 %v442, %v90
    %v444 = vmul.f32 %v442, %v91
    %v447 = vrot.slane %v444, 7
    %v448 = vsel %vm97, %v447, %v443
    %v450 = vadd.f32 %v440, %v448
    %s451 = sld [smem:[#allocation2 + $0x2b]]
    %v452 = vstv %s451
    %v453 = vmul.f32 %v452, %v159
    %v454 = vadd.f32 %v450, %v453
    %s455 = sld [smem:[#allocation2 + $0xf]]
    %v456 = vstv %s455
    %v457 = vmul.f32 %v456, %v175
    %v458 = vadd.f32 %v454, %v457
    %s459 = sld [smem:[#allocation2 + $0x1f]]
    %v460 = vstv %s459
    %v461 = vmul.f32 %v460, %v92
    %v462 = vmul.f32 %v460, %v93
    %v465 = vrot.slane %v462, 7
    %v466 = vsel %vm97, %v465, %v461
    %v468 = vadd.f32 %v458, %v466
    %s469 = sld [smem:[#allocation2 + $0x2f]]
    %v470 = vstv %s469
    %v471 = vmul.f32 %v470, %v179
    %v472 = vadd.f32 %v468, %v471
    %s473 = sld [smem:[#allocation4 + $0x3]]
    %v474 = vstv %s473
    %v475 = vadd.f32 %v472, %v474
    %s476 = sld [smem:[#allocation6]]
    %v477 = vstv %s476
    %v478 = vmul.f32 %v253, %v477
    %s479 = sld [smem:[#allocation6 + $0x4]]
    %v480 = vstv %s479
    %v481 = vadd.f32 %v478, %v480
    %v482 = vmax.f32 %v481, 0.0
    %s483 = sld [smem:[#allocation6 + $0x1]]
    %v484 = vstv %s483
    %v485 = vmul.f32 %v327, %v484
    %s486 = sld [smem:[#allocation6 + $0x5]]
    %v487 = vstv %s486
    %v488 = vadd.f32 %v485, %v487
    %v489 = vmax.f32 %v488, 0.0
    %s490 = sld [smem:[#allocation6 + $0x2]]
    %v491 = vstv %s490
    %v492 = vmul.f32 %v401, %v491
    %s493 = sld [smem:[#allocation6 + $0x6]]
    %v494 = vstv %s493
    %v495 = vadd.f32 %v492, %v494
    %v496 = vmax.f32 %v495, 0.0
    %s497 = sld [smem:[#allocation6 + $0x3]]
    %v498 = vstv %s497
    %v499 = vmul.f32 %v475, %v498
    %s500 = sld [smem:[#allocation6 + $0x7]]
    %v501 = vstv %s500
    %v502 = vadd.f32 %v499, %v501
    %v503 = vmax.f32 %v502, 0.0
    %504 = vrot.lane.b32.xlu0 %v482, 16
    %v505 = vpop.permute.xlu0 %504
    %v506 = vsel %vm100, %v505, %v482
    %507 = vrot.lane.b32.xlu0 %v506, 16
    %v508 = vpop.permute.xlu0 %507
    %v509 = vsel %vm100, %v508, %v482
    %511 = vrot.lane.b32.xlu0 %v509, 113
    %v512 = vpop.permute.xlu0 %511
    %v514 = vsel %vm108, 0.0, %v512
    %515 = vrot.lane.b32.xlu0 %v509, 127
    %v516 = vpop.permute.xlu0 %515
    %v518 = vsel %vm115, 0.0, %v516
    %519 = vrot.lane.b32.xlu0 %v489, 16
    %v520 = vpop.permute.xlu0 %519
    %v521 = vsel %vm100, %v520, %v489
    %522 = vrot.lane.b32.xlu0 %v521, 16
    %v523 = vpop.permute.xlu0 %522
    %v524 = vsel %vm100, %v523, %v489
    %526 = vrot.lane.b32.xlu0 %v524, 113
    %v527 = vpop.permute.xlu0 %526
    %v529 = vsel %vm108, 0.0, %v527
    %530 = vrot.lane.b32.xlu0 %v524, 127
    %v531 = vpop.permute.xlu0 %530
    %v533 = vsel %vm115, 0.0, %v531
    %534 = vrot.lane.b32.xlu0 %v496, 16
    %v535 = vpop.permute.xlu0 %534
    %v536 = vsel %vm100, %v535, %v496
    %537 = vrot.lane.b32.xlu0 %v536, 16
    %v538 = vpop.permute.xlu0 %537
    %v539 = vsel %vm100, %v538, %v496
    %541 = vrot.lane.b32.xlu0 %v539, 113
    %v542 = vpop.permute.xlu0 %541
    %v544 = vsel %vm108, 0.0, %v542
    %545 = vrot.lane.b32.xlu0 %v539, 127
    %v546 = vpop.permute.xlu0 %545
    %v548 = vsel %vm115, 0.0, %v546
    %549 = vrot.lane.b32.xlu0 %v503, 16
    %v550 = vpop.permute.xlu0 %549
    %v551 = vsel %vm100, %v550, %v503
    %552 = vrot.lane.b32.xlu0 %v551, 16
    %v553 = vpop.permute.xlu0 %552
    %v554 = vsel %vm100, %v553, %v503
    %556 = vrot.lane.b32.xlu0 %v554, 113
    %v557 = vpop.permute.xlu0 %556
    %v559 = vsel %vm108, 0.0, %v557
    %560 = vrot.lane.b32.xlu0 %v554, 127
    %v561 = vpop.permute.xlu0 %560
    %v563 = vsel %vm115, 0.0, %v561
    %s564 = sld [smem:[#allocation7]]
    %v565 = vstv %s564
    %v566 = vmul.f32 %v565, %v514
    %s567 = sld [smem:[#allocation7 + $0x10]]
    %v568 = vstv %s567
    %v569 = vmul.f32 %v568, %v482
    %v570 = vadd.f32 %v566, %v569
    %s571 = sld [smem:[#allocation7 + $0x20]]
    %v572 = vstv %s571
    %v573 = vmul.f32 %v572, %v518
    %v574 = vadd.f32 %v570, %v573
    %s575 = sld [smem:[#allocation7 + $0x4]]
    %v576 = vstv %s575
    %v577 = vmul.f32 %v576, %v529
    %v578 = vadd.f32 %v574, %v577
    %s579 = sld [smem:[#allocation7 + $0x14]]
    %v580 = vstv %s579
    %v581 = vmul.f32 %v580, %v489
    %v582 = vadd.f32 %v578, %v581
    %s583 = sld [smem:[#allocation7 + $0x24]]
    %v584 = vstv %s583
    %v585 = vmul.f32 %v584, %v533
    %v586 = vadd.f32 %v582, %v585
    %s587 = sld [smem:[#allocation7 + $0x8]]
    %v588 = vstv %s587
    %v589 = vmul.f32 %v588, %v544
    %v590 = vadd.f32 %v586, %v589
    %s591 = sld [smem:[#allocation7 + $0x18]]
    %v592 = vstv %s591
    %v593 = vmul.f32 %v592, %v496
    %v594 = vadd.f32 %v590, %v593
    %s595 = sld [smem:[#allocation7 + $0x28]]
    %v596 = vstv %s595
    %v597 = vmul.f32 %v596, %v548
    %v598 = vadd.f32 %v594, %v597
    %s599 = sld [smem:[#allocation7 + $0xc]]
    %v600 = vstv %s599
    %v601 = vmul.f32 %v600, %v559
    %v602 = vadd.f32 %v598, %v601
    %s603 = sld [smem:[#allocation7 + $0x1c]]
    %v604 = vstv %s603
    %v605 = vmul.f32 %v604, %v503
    %v606 = vadd.f32 %v602, %v605
    %s607 = sld [smem:[#allocation7 + $0x2c]]
    %v608 = vstv %s607
    %v609 = vmul.f32 %v608, %v563
    %v610 = vadd.f32 %v606, %v609
    %s611 = sld [smem:[#allocation9]]
    %v612 = vstv %s611
    %v613 = vadd.f32 %v610, %v612
    %s614 = sld [smem:[#allocation7 + $0x1]]
    %v615 = vstv %s614
    %v616 = vmul.f32 %v615, %v514
    %s617 = sld [smem:[#allocation7 + $0x11]]
    %v618 = vstv %s617
    %v619 = vmul.f32 %v618, %v482
    %v620 = vadd.f32 %v616, %v619
    %s621 = sld [smem:[#allocation7 + $0x21]]
    %v622 = vstv %s621
    %v623 = vmul.f32 %v622, %v518
    %v624 = vadd.f32 %v620, %v623
    %s625 = sld [smem:[#allocation7 + $0x5]]
    %v626 = vstv %s625
    %v627 = vmul.f32 %v626, %v529
    %v628 = vadd.f32 %v624, %v627
    %s629 = sld [smem:[#allocation7 + $0x15]]
    %v630 = vstv %s629
    %v631 = vmul.f32 %v630, %v489
    %v632 = vadd.f32 %v628, %v631
    %s633 = sld [smem:[#allocation7 + $0x25]]
    %v634 = vstv %s633
    %v635 = vmul.f32 %v634, %v533
    %v636 = vadd.f32 %v632, %v635
    %s637 = sld [smem:[#allocation7 + $0x9]]
    %v638 = vstv %s637
    %v639 = vmul.f32 %v638, %v544
    %v640 = vadd.f32 %v636, %v639
    %s641 = sld [smem:[#allocation7 + $0x19]]
    %v642 = vstv %s641
    %v643 = vmul.f32 %v642, %v496
    %v644 = vadd.f32 %v640, %v643
    %s645 = sld [smem:[#allocation7 + $0x29]]
    %v646 = vstv %s645
    %v647 = vmul.f32 %v646, %v548
    %v648 = vadd.f32 %v644, %v647
    %s649 = sld [smem:[#allocation7 + $0xd]]
    %v650 = vstv %s649
    %v651 = vmul.f32 %v650, %v559
    %v652 = vadd.f32 %v648, %v651
    %s653 = sld [smem:[#allocation7 + $0x1d]]
    %v654 = vstv %s653
    %v655 = vmul.f32 %v654, %v503
    %v656 = vadd.f32 %v652, %v655
    %s657 = sld [smem:[#allocation7 + $0x2d]]
    %v658 = vstv %s657
    %v659 = vmul.f32 %v658, %v563
    %v660 = vadd.f32 %v656, %v659
    %s661 = sld [smem:[#allocation9 + $0x1]]
    %v662 = vstv %s661
    %v663 = vadd.f32 %v660, %v662
    %s664 = sld [smem:[#allocation7 + $0x2]]
    %v665 = vstv %s664
    %v666 = vmul.f32 %v665, %v514
    %s667 = sld [smem:[#allocation7 + $0x12]]
    %v668 = vstv %s667
    %v669 = vmul.f32 %v668, %v482
    %v670 = vadd.f32 %v666, %v669
    %s671 = sld [smem:[#allocation7 + $0x22]]
    %v672 = vstv %s671
    %v673 = vmul.f32 %v672, %v518
    %v674 = vadd.f32 %v670, %v673
    %s675 = sld [smem:[#allocation7 + $0x6]]
    %v676 = vstv %s675
    %v677 = vmul.f32 %v676, %v529
    %v678 = vadd.f32 %v674, %v677
    %s679 = sld [smem:[#allocation7 + $0x16]]
    %v680 = vstv %s679
    %v681 = vmul.f32 %v680, %v489
    %v682 = vadd.f32 %v678, %v681
    %s683 = sld [smem:[#allocation7 + $0x26]]
    %v684 = vstv %s683
    %v685 = vmul.f32 %v684, %v533
    %v686 = vadd.f32 %v682, %v685
    %s687 = sld [smem:[#allocation7 + $0xa]]
    %v688 = vstv %s687
    %v689 = vmul.f32 %v688, %v544
    %v690 = vadd.f32 %v686, %v689
    %s691 = sld [smem:[#allocation7 + $0x1a]]
    %v692 = vstv %s691
    %v693 = vmul.f32 %v692, %v496
    %v694 = vadd.f32 %v690, %v693
    %s695 = sld [smem:[#allocation7 + $0x2a]]
    %v696 = vstv %s695
    %v697 = vmul.f32 %v696, %v548
    %v698 = vadd.f32 %v694, %v697
    %s699 = sld [smem:[#allocation7 + $0xe]]
    %v700 = vstv %s699
    %v701 = vmul.f32 %v700, %v559
    %v702 = vadd.f32 %v698, %v701
    %s703 = sld [smem:[#allocation7 + $0x1e]]
    %v704 = vstv %s703
    %v705 = vmul.f32 %v704, %v503
    %v706 = vadd.f32 %v702, %v705
    %s707 = sld [smem:[#allocation7 + $0x2e]]
    %v708 = vstv %s707
    %v709 = vmul.f32 %v708, %v563
    %v710 = vadd.f32 %v706, %v709
    %s711 = sld [smem:[#allocation9 + $0x2]]
    %v712 = vstv %s711
    %v713 = vadd.f32 %v710, %v712
    %s714 = sld [smem:[#allocation7 + $0x3]]
    %v715 = vstv %s714
    %v716 = vmul.f32 %v715, %v514
    %s717 = sld [smem:[#allocation7 + $0x13]]
    %v718 = vstv %s717
    %v719 = vmul.f32 %v718, %v482
    %v720 = vadd.f32 %v716, %v719
    %s721 = sld [smem:[#allocation7 + $0x23]]
    %v722 = vstv %s721
    %v723 = vmul.f32 %v722, %v518
    %v724 = vadd.f32 %v720, %v723
    %s725 = sld [smem:[#allocation7 + $0x7]]
    %v726 = vstv %s725
    %v727 = vmul.f32 %v726, %v529
    %v728 = vadd.f32 %v724, %v727
    %s729 = sld [smem:[#allocation7 + $0x17]]
    %v730 = vstv %s729
    %v731 = vmul.f32 %v730, %v489
    %v732 = vadd.f32 %v728, %v731
    %s733 = sld [smem:[#allocation7 + $0x27]]
    %v734 = vstv %s733
    %v735 = vmul.f32 %v734, %v533
    %v736 = vadd.f32 %v732, %v735
    %s737 = sld [smem:[#allocation7 + $0xb]]
    %v738 = vstv %s737
    %v739 = vmul.f32 %v738, %v544
    %v740 = vadd.f32 %v736, %v739
    %s741 = sld [smem:[#allocation7 + $0x1b]]
    %v742 = vstv %s741
    %v743 = vmul.f32 %v742, %v496
    %v744 = vadd.f32 %v740, %v743
    %s745 = sld [smem:[#allocation7 + $0x2b]]
    %v746 = vstv %s745
    %v747 = vmul.f32 %v746, %v548
    %v748 = vadd.f32 %v744, %v747
    %s749 = sld [smem:[#allocation7 + $0xf]]
    %v750 = vstv %s749
    %v751 = vmul.f32 %v750, %v559
    %v752 = vadd.f32 %v748, %v751
    %s753 = sld [smem:[#allocation7 + $0x1f]]
    %v754 = vstv %s753
    %v755 = vmul.f32 %v754, %v503
    %v756 = vadd.f32 %v752, %v755
    %s757 = sld [smem:[#allocation7 + $0x2f]]
    %v758 = vstv %s757
    %v759 = vmul.f32 %v758, %v563
    %v760 = vadd.f32 %v756, %v759
    %s761 = sld [smem:[#allocation9 + $0x3]]
    %v762 = vstv %s761
    %v763 = vadd.f32 %v760, %v762
    %vm764 = vcmask 123904
    %v765 = vsel %vm764, %v613, 0.0
    %v766 = vrot.slane %v765, 4
    %v767 = vadd.f32 %v765, %v766
    %v768 = vrot.slane %v767, 2
    %v769 = vadd.f32 %v767, %v768
    %v770 = vrot.slane %v769, 1
    %v771 = vadd.f32 %v769, %v770
    %v772 = vsel %vm764, %v663, 0.0
    %v773 = vrot.slane %v772, 4
    %v774 = vadd.f32 %v772, %v773
    %v775 = vrot.slane %v774, 2
    %v776 = vadd.f32 %v774, %v775
    %v777 = vrot.slane %v776, 1
    %v778 = vadd.f32 %v776, %v777
    %v779 = vsel %vm764, %v713, 0.0
    %v780 = vrot.slane %v779, 4
    %v781 = vadd.f32 %v779, %v780
    %v782 = vrot.slane %v781, 2
    %v783 = vadd.f32 %v781, %v782
    %v784 = vrot.slane %v783, 1
    %v785 = vadd.f32 %v783, %v784
    %v786 = vsel %vm764, %v763, 0.0
    %v787 = vrot.slane %v786, 4
    %v788 = vadd.f32 %v786, %v787
    %v789 = vrot.slane %v788, 2
    %v790 = vadd.f32 %v788, %v789
    %v791 = vrot.slane %v790, 1
    %v792 = vadd.f32 %v790, %v791
    %v793 = vmul.f32 %v613, %v613
    %v794 = vsel %vm764, %v793, 0.0
    %v795 = vrot.slane %v794, 4
    %v796 = vadd.f32 %v794, %v795
    %v797 = vrot.slane %v796, 2
    %v798 = vadd.f32 %v796, %v797
    %v799 = vrot.slane %v798, 1
    %v800 = vadd.f32 %v798, %v799
    %v801 = vmul.f32 %v663, %v663
    %v802 = vsel %vm764, %v801, 0.0
    %v803 = vrot.slane %v802, 4
    %v804 = vadd.f32 %v802, %v803
    %v805 = vrot.slane %v804, 2
    %v806 = vadd.f32 %v804, %v805
    %v807 = vrot.slane %v806, 1
    %v808 = vadd.f32 %v806, %v807
    %v809 = vmul.f32 %v713, %v713
    %v810 = vsel %vm764, %v809, 0.0
    %v811 = vrot.slane %v810, 4
    %v812 = vadd.f32 %v810, %v811
    %v813 = vrot.slane %v812, 2
    %v814 = vadd.f32 %v812, %v813
    %v815 = vrot.slane %v814, 1
    %v816 = vadd.f32 %v814, %v815
    %v817 = vmul.f32 %v763, %v763
    %v818 = vsel %vm764, %v817, 0.0
    %v819 = vrot.slane %v818, 4
    %v820 = vadd.f32 %v818, %v819
    %v821 = vrot.slane %v820, 2
    %v822 = vadd.f32 %v820, %v821
    %v823 = vrot.slane %v822, 1
    %v824 = vadd.f32 %v822, %v823
    %vm825 = vcmask 1040384
    %v826 = vsel %vm825, %v771, %v778
    %vm827 = vcmask 1041408
    %v828 = vsel %vm827, %v826, %v785
    %vm829 = vcmask 1042432
    %v830 = vsel %vm829, %v828, %v792
    %vm831 = vcmask 1043456
    %v832 = vsel %vm831, %v830, %v800
    %vm833 = vcmask 1044480
    %v834 = vsel %vm833, %v832, %v808
    %vm835 = vcmask 1045504
    %v836 = vsel %vm835, %v834, %v816
    %vm837 = vcmask 1046528
    %v838 = vsel %vm837, %v836, %v824
    %vm839 = vcmask 130048
    %v840 = vsel %vm839, %v838, 0.0
    %841 = vadd.xlane.f32.xlu0 %v840
    %v842 = vpop.xlane.xlu0 %841
    %vm843 = vcmask 7168
    %844 = vst.msk [vmem:[%s6] sm:$0xff] %vm843, %v842
    // Predicated region
    $region46: #{residual_block.4} parent=1 // pred_check
      _
    $region47: #{residual_block.4} parent=1 // pred_check_branch
      %846 = sbr.rel (0) target = $region49
    $region48: #{residual_block.4} parent=1 // pred_region
      _
    $region49: #{residual_block.4} parent=1 // pred_fallthru
      _
    // Predicated region
    $region50: #{residual_block.4} parent=1 // pred_check
      _
    $region51: #{residual_block.4} parent=1 // pred_check_branch
      %848 = sbr.rel (0) target = $region53
    $region52: #{residual_block.4} parent=1 // pred_region
      _
    $region53: #{residual_block.4} parent=1 // pred_fallthru
      _
    %849 = vsyncpa [#allocation3], 1
    %850 = vsyncpa [#allocation5], 1
    %851 = vsyncpa [#allocation8], 1

// kernel: residual_block.5
$region0: #{residual_block.5}
  #allocation0 [shape = 'u32[]', space=smem, size = 0x4, offset = 0x4, fixed_abs, tag = 'smem constant byte address 0x4 - core index']
  #allocation1 [shape = 'u32[144,128]{1,0:T(1,128)}', space=vmem, size = 0x12000, scoped, tag = 'internal scratch']
  %s0 = inlined_call_operand.vmem [shape: f32[2,4,16], index: 0, kind: input, shape index: {}]
  %s1 = inlined_call_operand.vmem [shape: f32[48], index: 1, kind: input, shape index: {}]
  %s2 = inlined_call_operand.vmem [shape: f32[4], index: 2, kind: input, shape index: {}]
  %s3 = inlined_call_operand.vmem [shape: f32[8], index: 3, kind: input, shape index: {}]
  %s4 = inlined_call_operand.vmem [shape: f32[48], index: 4, kind: input, shape index: {}]
  %s5 = inlined_call_operand.vmem [shape: f32[4], index: 5, kind: input, shape index: {}]
  %s6 = inlined_call_operand.vmem [shape: f32[8], index: 6, kind: input, shape index: {}]
  %s7 = inlined_call_operand.hbm [shape: f32[2,4,16], index: 7, kind: output, shape index: {}]
  %s8 = sld [smem:[#allocation0]]
  $region62: #{residual_block.5} parent=0
    _
  %s10 = ssub.s32 1, %s8
  %s11 = scalar_select 0, %s10, %s8
  $region1: #{residual_block.5} parent=0
    #allocation2 [shape = 'u8[512]{0}', space=smem, size = 0x200, scoped, tag = 'input window, operand 1, single buffered']
    #allocation3 [shape = 's32[1]{0}', space=sflag, size = 0x4, scoped, tag = 'scoped memory for residual_block.5']
    #allocation4 [shape = 's32[1]{0}', space=sflag, size = 0x4, scoped, tag = 'scoped memory for residual_block.5']
    #allocation5 [shape = 'u8[512]{0}', space=smem, size = 0x200, scoped, tag = 'input window, operand 2, single buffered']
    #allocation6 [shape = 's32[1]{0}', space=sflag, size = 0x4, scoped, tag = 'scoped memory for residual_block.5']
    #allocation7 [shape = 'u8[512]{0}', space=smem, size = 0x200, scoped, tag = 'input window, operand 3, single buffered']
    #allocation8 [shape = 'u8[512]{0}', space=smem, size = 0x200, scoped, tag = 'input window, operand 4, single buffered']
    #allocation9 [shape = 's32[1]{0}', space=sflag, size = 0x4, scoped, tag = 'scoped memory for residual_block.5']
    #allocation10 [shape = 'u8[512]{0}', space=smem, size = 0x200, scoped, tag = 'input window, operand 5, single buffered']
    #allocation11 [shape = 'u8[512]{0}', space=smem, size = 0x200, scoped, tag = 'input window, operand 6, single buffered']
    #allocation12 [shape = 's32[1]{0}', space=sflag, size = 0x4, scoped, tag = 'scoped memory for residual_block.5']
    #allocation13 [shape = 'u8[4096]{0}', space=vmem, size = 0x1000, scoped, tag = 'output window, operand 0, single buffered']
    %12 = vsyncpa [#allocation4], 0
    %13 = vsyncpa [#allocation6], 0
    %14 = vsyncpa [#allocation9], 0
    %15 = vsyncpa [#allocation12], 0
    %16 = vsyncpa [#allocation3], 0
    // Predicated region
    $region2: #{residual_block.5} parent=1 // pred_check
      _
    $region3: #{residual_block.5} parent=1 // pred_check_branch
      %18 = sbr.rel (0) target = $region5
    $region4: #{residual_block.5} parent=1 // pred_region
      _
    $region5: #{residual_block.5} parent=1 // pred_fallthru
      _
    // Predicated region
    $region6: #{residual_block.5} parent=1 // pred_check
      _
    $region7: #{residual_block.5} parent=1 // pred_check_branch
      %20 = sbr.rel (0) target = $region9
    $region8: #{residual_block.5} parent=1 // pred_region
      %s22 = ssub.s32 16, 16
      %23 = vsyncadd [#allocation4], %s22
      %s25 = sshll.u32 %s1, 4
      %s26 = int_to_ptr.vmem [resolvable:$true] %s25
      %28 = dma.vmem_to_smem %s26, 16, [#allocation2], [#allocation4]
    $region9: #{residual_block.5} parent=1 // pred_fallthru
      _
    // Predicated region
    $region10: #{residual_block.5} parent=1 // pred_check
      _
    $region11: #{residual_block.5} parent=1 // pred_check_branch
      %30 = sbr.rel (0) target = $region13
    $region12: #{residual_block.5} parent=1 // pred_region
      %s32 = ssub.s32 16, 16
      %33 = vsyncadd [#allocation6], %s32
      %s35 = sshll.u32 %s2, 4
      %s36 = int_to_ptr.vmem [resolvable:$true] %s35
      %38 = dma.vmem_to_smem %s36, 16, [#allocation5], [#allocation6]
    $region13: #{residual_block.5} parent=1 // pred_fallthru
      _
    // Predicated region
    $region14: #{residual_block.5} parent=1 // pred_check
      _
    $region15: #{residual_block.5} parent=1 // pred_check_branch
      %40 = sbr.rel (0) target = $region17
    $region16: #{residual_block.5} parent=1 // pred_region
      %s42 = ssub.s32 16, 16
      %43 = vsyncadd [#allocation6], %s42
      %s45 = sshll.u32 %s3, 4
      %s46 = int_to_ptr.vmem [resolvable:$true] %s45
      %48 = dma.vmem_to_smem %s46, 16, [#allocation7], [#allocation6]
    $region17: #{residual_block.5} parent=1 // pred_fallthru
      _
    // Predicated region
    $region18: #{residual_block.5} parent=1 // pred_check
      _
    $region19: #{residual_block.5} parent=1 // pred_check_branch
      %50 = sbr.rel (0) target = $region21
    $region20: #{residual_block.5} parent=1 // pred_region
      %s52 = ssub.s32 16, 16
      %53 = vsyncadd [#allocation9], %s52
      %s55 = sshll.u32 %s4, 4
      %s56 = int_to_ptr.vmem [resolvable:$true] %s55
      %58 = dma.vmem_to_smem %s56, 16, [#allocation8], [#allocation9]
    $region21: #{residual_block.5} parent=1 // pred_fallthru
      _
    // Predicated region
    $region22: #{residual_block.5} parent=1 // pred_check
      _
    $region23: #{residual_block.5} parent=1 // pred_check_branch
      %60 = sbr.rel (0) target = $region25
    $region24: #{residual_block.5} parent=1 // pred_region
      %s62 = ssub.s32 16, 16
      %63 = vsyncadd [#allocation9], %s62
      %s65 = sshll.u32 %s5, 4
      %s66 = int_to_ptr.vmem [resolvable:$true] %s65
      %68 = dma.vmem_to_smem %s66, 16, [#allocation10], [#allocation9]
    $region25: #{residual_block.5} parent=1 // pred_fallthru
      _
    // Predicated region
    $region26: #{residual_block.5} parent=1 // pred_check
      _
    $region27: #{residual_block.5} parent=1 // pred_check_branch
      %70 = sbr.rel (0) target = $region29
    $region28: #{residual_block.5} parent=1 // pred_region
      %s72 = ssub.s32 16, 16
      %73 = vsyncadd [#allocation12], %s72
      %s75 = sshll.u32 %s6, 4
      %s76 = int_to_ptr.vmem [resolvable:$true] %s75
      %78 = dma.vmem_to_smem %s76, 16, [#allocation11], [#allocation12]
    $region29: #{residual_block.5} parent=1 // pred_fallthru
      _
    // Predicated region
    $region30: #{residual_block.5} parent=1 // pred_check
      _
    $region31: #{residual_block.5} parent=1 // pred_check_branch
      %80 = sbr.rel (0) target = $region33
    $region32: #{residual_block.5} parent=1 // pred_region
      %81 = dma.done [#allocation4], 16
    $region33: #{residual_block.5} parent=1 // pred_fallthru
      _
    // Predicated region
    $region34: #{residual_block.5} parent=1 // pred_check
      _
    $region35: #{residual_block.5} parent=1 // pred_check_branch
      %83 = sbr.rel (0) target = $region37
    $region36: #{residual_block.5} parent=1 // pred_region
      %84 = dma.done [#allocation6], 16
    $region37: #{residual_block.5} parent=1 // pred_fallthru
      _
    // Predicated region
    $region38: #{residual_block.5} parent=1 // pred_check
      _
    $region39: #{residual_block.5} parent=1 // pred_check_branch
      %86 = sbr.rel (0) target = $region41
    $region40: #{residual_block.5} parent=1 // pred_region
      %87 = dma.done [#allocation6], 16
    $region41: #{residual_block.5} parent=1 // pred_fallthru
      _
    // Predicated region
    $region42: #{residual_block.5} parent=1 // pred_check
      _
    $region43: #{residual_block.5} parent=1 // pred_check_branch
      %89 = sbr.rel (0) target = $region45
    $region44: #{residual_block.5} parent=1 // pred_region
      %90 = dma.done [#allocation9], 16
    $region45: #{residual_block.5} parent=1 // pred_fallthru
      _
    // Predicated region
    $region46: #{residual_block.5} parent=1 // pred_check
      _
    $region47: #{residual_block.5} parent=1 // pred_check_branch
      %92 = sbr.rel (0) target = $region49
    $region48: #{residual_block.5} parent=1 // pred_region
      %93 = dma.done [#allocation9], 16
    $region49: #{residual_block.5} parent=1 // pred_fallthru
      _
    // Predicated region
    $region50: #{residual_block.5} parent=1 // pred_check
      _
    $region51: #{residual_block.5} parent=1 // pred_check_branch
      %95 = sbr.rel (0) target = $region53
    $region52: #{residual_block.5} parent=1 // pred_region
      %96 = dma.done [#allocation12], 16
    $region53: #{residual_block.5} parent=1 // pred_fallthru
      _
    %97 = sfence
    %v98 = vlaneseq
    %v99 = vand.u32 %v98, 127
    %vm100 = vcmp.eq.s32.totalorder %v99, 0
    %vm101 = vcmp.eq.s32.totalorder %v99, 15
    %v102 = vld [vmem:[%s0] sm:$0x1]
    %v103 = vld [vmem:[%s0 + $0x4] sm:$0x1]
    %v104 = vld [vmem:[%s0 + $0x1] sm:$0x1]
    %v105 = vld [vmem:[%s0 + $0x5] sm:$0x1]
    %v106 = vld [vmem:[%s0 + $0x2] sm:$0x1]
    %v107 = vld [vmem:[%s0 + $0x6] sm:$0x1]
    %v108 = vld [vmem:[%s0 + $0x3] sm:$0x1]
    %v109 = vld [vmem:[%s0 + $0x7] sm:$0x1]
    %v112 = vrot.slane %v103, 7
    %vm113 = vcmask 1041409
    %v114 = vsel %vm113, %v112, %v102
    %vm116 = vcmask 1047680
    %117 = vrot.lane.b32.xlu0 %v114, 16
    %v118 = vpop.permute.xlu0 %117
    %v119 = vsel %vm116, %v118, %v114
    %120 = vrot.lane.b32.xlu0 %v119, 16
    %v121 = vpop.permute.xlu0 %120
    %v122 = vsel %vm116, %v121, %v114
    %v123 = vsel %vm100, 1, 0
    %vm124 = vcmp.eq.s32.totalorder %v123, 1
    %126 = vrot.lane.b32.xlu0 %v122, 113
    %v127 = vpop.permute.xlu0 %126
    %v129 = vsel %vm124, 0.0, %v127
    %v130 = vsel %vm101, 1, 0
    %vm131 = vcmp.eq.s32.totalorder %v130, 1
    %132 = vrot.lane.b32.xlu0 %v122, 127
    %v133 = vpop.permute.xlu0 %132
    %v135 = vsel %vm131, 0.0, %v133
    %v138 = vrot.slane %v105, 7
    %v139 = vsel %vm113, %v138, %v104
    %141 = vrot.lane.b32.xlu0 %v139, 16
    %v142 = vpop.permute.xlu0 %141
    %v143 = vsel %vm116, %v142, %v139
    %144 = vrot.lane.b32.xlu0 %v143, 16
    %v145 = vpop.permute.xlu0 %144
    %v146 = vsel %vm116, %v145, %v139
    %148 = vrot.lane.b32.xlu0 %v146, 113
    %v149 = vpop.permute.xlu0 %148
    %v151 = vsel %vm124, 0.0, %v149
    %152 = vrot.lane.b32.xlu0 %v146, 127
    %v153 = vpop.permute.xlu0 %152
    %v155 = vsel %vm131, 0.0, %v153
    %v158 = vrot.slane %v107, 7
    %v159 = vsel %vm113, %v158, %v106
    %161 = vrot.lane.b32.xlu0 %v159, 16
    %v162 = vpop.permute.xlu0 %161
    %v163 = vsel %vm116, %v162, %v159
    %164 = vrot.lane.b32.xlu0 %v163, 16
    %v165 = vpop.permute.xlu0 %164
    %v166 = vsel %vm116, %v165, %v159
    %168 = vrot.lane.b32.xlu0 %v166, 113
    %v169 = vpop.permute.xlu0 %168
    %v171 = vsel %vm124, 0.0, %v169
    %172 = vrot.lane.b32.xlu0 %v166, 127
    %v173 = vpop.permute.xlu0 %172
    %v175 = vsel %vm131, 0.0, %v173
    %v178 = vrot.slane %v109, 7
    %v179 = vsel %vm113, %v178, %v108
    %181 = vrot.lane.b32.xlu0 %v179, 16
    %v182 = vpop.permute.xlu0 %181
    %v183 = vsel %vm116, %v182, %v179
    %184 = vrot.lane.b32.xlu0 %v183, 16
    %v185 = vpop.permute.xlu0 %184
    %v186 = vsel %vm116, %v185, %v179
    %188 = vrot.lane.b32.xlu0 %v186, 113
    %v189 = vpop.permute.xlu0 %188
    %v191 = vsel %vm124, 0.0, %v189
    %192 = vrot.lane.b32.xlu0 %v186, 127
    %v193 = vpop.permute.xlu0 %192
    %v195 = vsel %vm131, 0.0, %v193
    %s196 = sld [smem:[#allocation2]]
    %v197 = vstv %s196
    %v198 = vmul.f32 %v197, %v129
    %s199 = sld [smem:[#allocation2 + $0x10]]
    %v200 = vstv %s199
    %v201 = vmul.f32 %v200, %v102
    %v202 = vmul.f32 %v200, %v103
    %v205 = vrot.slane %v202, 7
    %v206 = vsel %vm113, %v205, %v201
    %v208 = vadd.f32 %v198, %v206
    %s209 = sld [smem:[#allocation2 + $0x20]]
    %v210 = vstv %s209
    %v211 = vmul.f32 %v210, %v135
    %v212 = vadd.f32 %v208, %v211
    %s213 = sld [smem:[#allocation2 + $0x4]]
    %v214 = vstv %s213
    %v215 = vmul.f32 %v214, %v151
    %v216 = vadd.f32 %v212, %v215
    %s217 = sld [smem:[#allocation2 + $0x14]]
    %v218 = vstv %s217
    %v219 = vmul.f32 %v218, %v104
    %v220 = vmul.f32 %v218, %v105
    %v223 = vrot.slane %v220, 7
    %v224 = vsel %vm113, %v223, %v219
    %v226 = vadd.f32 %v216, %v224
    %s227 = sld [smem:[#allocation2 + $0x24]]
    %v228 = vstv %s227
    %v229 = vmul.f32 %v228, %v155
    %v230 = vadd.f32 %v226, %v229
    %s231 = sld [smem:[#allocation2 + $0x8]]
    %v232 = vstv %s231
    %v233 = vmul.f32 %v232, %v171
    %v234 = vadd.f32 %v230, %v233
    %s235 = sld [smem:[#allocation2 + $0x18]]
    %v236 = vstv %s235
    %v237 = vmul.f32 %v236, %v106
    %v238 = vmul.f32 %v236, %v107
    %v241 = vrot.slane %v238, 7
    %v242 = vsel %vm113, %v241, %v237
    %v244 = vadd.f32 %v234, %v242
    %s245 = sld [smem:[#allocation2 + $0x28]]
    %v246 = vstv %s245
    %v247 = vmul.f32 %v246, %v175
    %v248 = vadd.f32 %v244, %v247
    %s249 = sld [smem:[#allocation2 + $0xc]]
    %v250 = vstv %s249
    %v251 = vmul.f32 %v250, %v191
    %v252 = vadd.f32 %v248, %v251
    %s253 = sld [smem:[#allocation2 + $0x1c]]
    %v254 = vstv %s253
    %v255 = vmul.f32 %v254, %v108
    %v256 = vmul.f32 %v254, %v109
    %v259 = vrot.slane %v256, 7
    %v260 = vsel %vm113, %v259, %v255
    %v262 = vadd.f32 %v252, %v260
    %s263 = sld [smem:[#allocation2 + $0x2c]]
    %v264 = vstv %s263
    %v265 = vmul.f32 %v264, %v195
    %v266 = vadd.f32 %v262, %v265
    %s267 = sld [smem:[#allocation5]]
    %v268 = vstv %s267
    %v269 = vadd.f32 %v266, %v268
    %s270 = sld [smem:[#allocation2 + $0x1]]
    %v271 = vstv %s270
    %v272 = vmul.f32 %v271, %v129
    %s273 = sld [smem:[#allocation2 + $0x11]]
    %v274 = vstv %s273
    %v275 = vmul.f32 %v274, %v102
    %v276 = vmul.f32 %v274, %v103
    %v279 = vrot.slane %v276, 7
    %v280 = vsel %vm113, %v279, %v275
    %v282 = vadd.f32 %v272, %v280
    %s283 = sld [smem:[#allocation2 + $0x21]]
    %v284 = vstv %s283
    %v285 = vmul.f32 %v284, %v135
    %v286 = vadd.f32 %v282, %v285
    %s287 = sld [smem:[#allocation2 + $0x5]]
    %v288 = vstv %s287
    %v289 = vmul.f32 %v288, %v151
    %v290 = vadd.f32 %v286, %v289
    %s291 = sld [smem:[#allocation2 + $0x15]]
    %v292 = vstv %s291
    %v293 = vmul.f32 %v292, %v104
    %v294 = vmul.f32 %v292, %v105
    %v297 = vrot.slane %v294, 7
    %v298 = vsel %vm113, %v297, %v293
    %v300 = vadd.f32 %v290, %v298
    %s301 = sld [smem:[#allocation2 + $0x25]]
    %v302 = vstv %s301
    %v303 = vmul.f32 %v302, %v155
    %v304 = vadd.f32 %v300, %v303
    %s305 = sld [smem:[#allocation2 + $0x9]]
    %v306 = vstv %s305
    %v307 = vmul.f32 %v306, %v171
    %v308 = vadd.f32 %v304, %v307
    %s309 = sld [smem:[#allocation2 + $0x19]]
    %v310 = vstv %s309
    %v311 = vmul.f32 %v310, %v106
    %v312 = vmul.f32 %v310, %v107
    %v315 = vrot.slane %v312, 7
    %v316 = vsel %vm113, %v315, %v311
    %v318 = vadd.f32 %v308, %v316
    %s319 = sld [smem:[#allocation2 + $0x29]]
    %v320 = vstv %s319
    %v321 = vmul.f32 %v320, %v175
    %v322 = vadd.f32 %v318, %v321
    %s323 = sld [smem:[#allocation2 + $0xd]]
    %v324 = vstv %s323
    %v325 = vmul.f32 %v324, %v191
    %v326 = vadd.f32 %v322, %v325
    %s327 = sld [smem:[#allocation2 + $0x1d]]
    %v328 = vstv %s327
    %v329 = vmul.f32 %v328, %v108
    %v330 = vmul.f32 %v328, %v109
    %v333 = vrot.slane %v330, 7
    %v334 = vsel %vm113, %v333, %v329
    %v336 = vadd.f32 %v326, %v334
    %s337 = sld [smem:[#allocation2 + $0x2d]]
    %v338 = vstv %s337
    %v339 = vmul.f32 %v338, %v195
    %v340 = vadd.f32 %v336, %v339
    %s341 = sld [smem:[#allocation5 + $0x1]]
    %v342 = vstv %s341
    %v343 = vadd.f32 %v340, %v342
    %s344 = sld [smem:[#allocation2 + $0x2]]
    %v345 = vstv %s344
    %v346 = vmul.f32 %v345, %v129
    %s347 = sld [smem:[#allocation2 + $0x12]]
    %v348 = vstv %s347
    %v349 = vmul.f32 %v348, %v102
    %v350 = vmul.f32 %v348, %v103
    %v353 = vrot.slane %v350, 7
    %v354 = vsel %vm113, %v353, %v349
    %v356 = vadd.f32 %v346, %v354
    %s357 = sld [smem:[#allocation2 + $0x22]]
    %v358 = vstv %s357
    %v359 = vmul.f32 %v358, %v135
    %v360 = vadd.f32 %v356, %v359
    %s361 = sld [smem:[#allocation2 + $0x6]]
    %v362 = vstv %s361
    %v363 = vmul.f32 %v362, %v151
    %v364 = vadd.f32 %v360, %v363
    %s365 = sld [smem:[#allocation2 + $0x16]]
    %v366 = vstv %s365
    %v367 = vmul.f32 %v366, %v104
    %v368 = vmul.f32 %v366, %v105
    %v371 = vrot.slane %v368, 7
    %v372 = vsel %vm113, %v371, %v367
    %v374 = vadd.f32 %v364, %v372
    %s375 = sld [smem:[#allocation2 + $0x26]]
    %v376 = vstv %s375
    %v377 = vmul.f32 %v376, %v155
    %v378 = vadd.f32 %v374, %v377
    %s379 = sld [smem:[#allocation2 + $0xa]]
    %v380 = vstv %s379
    %v381 = vmul.f32 %v380, %v171
    %v382 = vadd.f32 %v378, %v381
    %s383 = sld [smem:[#allocation2 + $0x1a]]
    %v384 = vstv %s383
    %v385 = vmul.f32 %v384, %v106
    %v386 = vmul.f32 %v384, %v107
    %v389 = vrot.slane %v386, 7
    %v390 = vsel %vm113, %v389, %v385
    %v392 = vadd.f32 %v382, %v390
    %s393 = sld [smem:[#allocation2 + $0x2a]]
    %v394 = vstv %s393
    %v395 = vmul.f32 %v394, %v175
    %v396 = vadd.f32 %v392, %v395
    %s397 = sld [smem:[#allocation2 + $0xe]]
    %v398 = vstv %s397
    %v399 = vmul.f32 %v398, %v191
    %v400 = vadd.f32 %v396, %v399
    %s401 = sld [smem:[#allocation2 + $0x1e]]
    %v402 = vstv %s401
    %v403 = vmul.f32 %v402, %v108
    %v404 = vmul.f32 %v402, %v109
    %v407 = vrot.slane %v404, 7
    %v408 = vsel %vm113, %v407, %v403
    %v410 = vadd.f32 %v400, %v408
    %s411 = sld [smem:[#allocation2 + $0x2e]]
    %v412 = vstv %s411
    %v413 = vmul.f32 %v412, %v195
    %v414 = vadd.f32 %v410, %v413
    %s415 = sld [smem:[#allocation5 + $0x2]]
    %v416 = vstv %s415
    %v417 = vadd.f32 %v414, %v416
    %s418 = sld [smem:[#allocation2 + $0x3]]
    %v419 = vstv %s418
    %v420 = vmul.f32 %v419, %v129
    %s421 = sld [smem:[#allocation2 + $0x13]]
    %v422 = vstv %s421
    %v423 = vmul.f32 %v422, %v102
    %v424 = vmul.f32 %v422, %v103
    %v427 = vrot.slane %v424, 7
    %v428 = vsel %vm113, %v427, %v423
    %v430 = vadd.f32 %v420, %v428
    %s431 = sld [smem:[#allocation2 + $0x23]]
    %v432 = vstv %s431
    %v433 = vmul.f32 %v432, %v135
    %v434 = vadd.f32 %v430, %v433
    %s435 = sld [smem:[#allocation2 + $0x7]]
    %v436 = vstv %s435
    %v437 = vmul.f32 %v436, %v151
    %v438 = vadd.f32 %v434, %v437
    %s439 = sld [smem:[#allocation2 + $0x17]]
    %v440 = vstv %s439
    %v441 = vmul.f32 %v440, %v104
    %v442 = vmul.f32 %v440, %v105
    %v445 = vrot.slane %v442, 7
    %v446 = vsel %vm113, %v445, %v441
    %v448 = vadd.f32 %v438, %v446
    %s449 = sld [smem:[#allocation2 + $0x27]]
    %v450 = vstv %s449
    %v451 = vmul.f32 %v450, %v155
    %v452 = vadd.f32 %v448, %v451
    %s453 = sld [smem:[#allocation2 + $0xb]]
    %v454 = vstv %s453
    %v455 = vmul.f32 %v454, %v171
    %v456 = vadd.f32 %v452, %v455
    %s457 = sld [smem:[#allocation2 + $0x1b]]
    %v458 = vstv %s457
    %v459 = vmul.f32 %v458, %v106
    %v460 = vmul.f32 %v458, %v107
    %v463 = vrot.slane %v460, 7
    %v464 = vsel %vm113, %v463, %v459
    %v466 = vadd.f32 %v456, %v464
    %s467 = sld [smem:[#allocation2 + $0x2b]]
    %v468 = vstv %s467
    %v469 = vmul.f32 %v468, %v175
    %v470 = vadd.f32 %v466, %v469
    %s471 = sld [smem:[#allocation2 + $0xf]]
    %v472 = vstv %s471
    %v473 = vmul.f32 %v472, %v191
    %v474 = vadd.f32 %v470, %v473
    %s475 = sld [smem:[#allocation2 + $0x1f]]
    %v476 = vstv %s475
    %v477 = vmul.f32 %v476, %v108
    %v478 = vmul.f32 %v476, %v109
    %v481 = vrot.slane %v478, 7
    %v482 = vsel %vm113, %v481, %v477
    %v484 = vadd.f32 %v474, %v482
    %s485 = sld [smem:[#allocation2 + $0x2f]]
    %v486 = vstv %s485
    %v487 = vmul.f32 %v486, %v195
    %v488 = vadd.f32 %v484, %v487
    %s489 = sld [smem:[#allocation5 + $0x3]]
    %v490 = vstv %s489
    %v491 = vadd.f32 %v488, %v490
    %s492 = sld [smem:[#allocation7]]
    %v493 = vstv %s492
    %v494 = vmul.f32 %v269, %v493
    %s495 = sld [smem:[#allocation7 + $0x4]]
    %v496 = vstv %s495
    %v497 = vadd.f32 %v494, %v496
    %v498 = vmax.f32 %v497, 0.0
    %s499 = sld [smem:[#allocation7 + $0x1]]
    %v500 = vstv %s499
    %v501 = vmul.f32 %v343, %v500
    %s502 = sld [smem:[#allocation7 + $0x5]]
    %v503 = vstv %s502
    %v504 = vadd.f32 %v501, %v503
    %v505 = vmax.f32 %v504, 0.0
    %s506 = sld [smem:[#allocation7 + $0x2]]
    %v507 = vstv %s506
    %v508 = vmul.f32 %v417, %v507
    %s509 = sld [smem:[#allocation7 + $0x6]]
    %v510 = vstv %s509
    %v511 = vadd.f32 %v508, %v510
    %v512 = vmax.f32 %v511, 0.0
    %s513 = sld [smem:[#allocation7 + $0x3]]
    %v514 = vstv %s513
    %v515 = vmul.f32 %v491, %v514
    %s516 = sld [smem:[#allocation7 + $0x7]]
    %v517 = vstv %s516
    %v518 = vadd.f32 %v515, %v517
    %v519 = vmax.f32 %v518, 0.0
    %520 = vrot.lane.b32.xlu0 %v498, 16
    %v521 = vpop.permute.xlu0 %520
    %v522 = vsel %vm116, %v521, %v498
    %523 = vrot.lane.b32.xlu0 %v522, 16
    %v524 = vpop.permute.xlu0 %523
    %v525 = vsel %vm116, %v524, %v498
    %527 = vrot.lane.b32.xlu0 %v525, 113
    %v528 = vpop.permute.xlu0 %527
    %v530 = vsel %vm124, 0.0, %v528
    %531 = vrot.lane.b32.xlu0 %v525, 127
    %v532 = vpop.permute.xlu0 %531
    %v534 = vsel %vm131, 0.0, %v532
    %535 = vrot.lane.b32.xlu0 %v505, 16
    %v536 = vpop.permute.xlu0 %535
    %v537 = vsel %vm116, %v536, %v505
    %538 = vrot.lane.b32.xlu0 %v537, 16
    %v539 = vpop.permute.xlu0 %538
    %v540 = vsel %vm116, %v539, %v505
    %542 = vrot.lane.b32.xlu0 %v540, 113
    %v543 = vpop.permute.xlu0 %542
    %v545 = vsel %vm124, 0.0, %v543
    %546 = vrot.lane.b32.xlu0 %v540, 127
    %v547 = vpop.permute.xlu0 %546
    %v549 = vsel %vm131, 0.0, %v547
    %550 = vrot.lane.b32.xlu0 %v512, 16
    %v551 = vpop.permute.xlu0 %550
    %v552 = vsel %vm116, %v551, %v512
    %553 = vrot.lane.b32.xlu0 %v552, 16
    %v554 = vpop.permute.xlu0 %553
    %v555 = vsel %vm116, %v554, %v512
    %557 = vrot.lane.b32.xlu0 %v555, 113
    %v558 = vpop.permute.xlu0 %557
    %v560 = vsel %vm124, 0.0, %v558
    %561 = vrot.lane.b32.xlu0 %v555, 127
    %v562 = vpop.permute.xlu0 %561
    %v564 = vsel %vm131, 0.0, %v562
    %565 = vrot.lane.b32.xlu0 %v519, 16
    %v566 = vpop.permute.xlu0 %565
    %v567 = vsel %vm116, %v566, %v519
    %568 = vrot.lane.b32.xlu0 %v567, 16
    %v569 = vpop.permute.xlu0 %568
    %v570 = vsel %vm116, %v569, %v519
    %572 = vrot.lane.b32.xlu0 %v570, 113
    %v573 = vpop.permute.xlu0 %572
    %v575 = vsel %vm124, 0.0, %v573
    %576 = vrot.lane.b32.xlu0 %v570, 127
    %v577 = vpop.permute.xlu0 %576
    %v579 = vsel %vm131, 0.0, %v577
    %s580 = sld [smem:[#allocation8]]
    %v581 = vstv %s580
    %v582 = vmul.f32 %v581, %v530
    %s583 = sld [smem:[#allocation8 + $0x10]]
    %v584 = vstv %s583
    %v585 = vmul.f32 %v584, %v498
    %v586 = vadd.f32 %v582, %v585
    %s587 = sld [smem:[#allocation8 + $0x20]]
    %v588 = vstv %s587
    %v589 = vmul.f32 %v588, %v534
    %v590 = vadd.f32 %v586, %v589
    %s591 = sld [smem:[#allocation8 + $0x4]]
    %v592 = vstv %s591
    %v593 = vmul.f32 %v592, %v545
    %v594 = vadd.f32 %v590, %v593
    %s595 = sld [smem:[#allocation8 + $0x14]]
    %v596 = vstv %s595
    %v597 = vmul.f32 %v596, %v505
    %v598 = vadd.f32 %v594, %v597
    %s599 = sld [smem:[#allocation8 + $0x24]]
    %v600 = vstv %s599
    %v601 = vmul.f32 %v600, %v549
    %v602 = vadd.f32 %v598, %v601
    %s603 = sld [smem:[#allocation8 + $0x8]]
    %v604 = vstv %s603
    %v605 = vmul.f32 %v604, %v560
    %v606 = vadd.f32 %v602, %v605
    %s607 = sld [smem:[#allocation8 + $0x18]]
    %v608 = vstv %s607
    %v609 = vmul.f32 %v608, %v512
    %v610 = vadd.f32 %v606, %v609
    %s611 = sld [smem:[#allocation8 + $0x28]]
    %v612 = vstv %s611
    %v613 = vmul.f32 %v612, %v564
    %v614 = vadd.f32 %v610, %v613
    %s615 = sld [smem:[#allocation8 + $0xc]]
    %v616 = vstv %s615
    %v617 = vmul.f32 %v616, %v575
    %v618 = vadd.f32 %v614, %v617
    %s619 = sld [smem:[#allocation8 + $0x1c]]
    %v620 = vstv %s619
    %v621 = vmul.f32 %v620, %v519
    %v622 = vadd.f32 %v618, %v621
    %s623 = sld [smem:[#allocation8 + $0x2c]]
    %v624 = vstv %s623
    %v625 = vmul.f32 %v624, %v579
    %v626 = vadd.f32 %v622, %v625
    %s627 = sld [smem:[#allocation10]]
    %v628 = vstv %s627
    %v629 = vadd.f32 %v626, %v628
    %s630 = sld [smem:[#allocation8 + $0x1]]
    %v631 = vstv %s630
    %v632 = vmul.f32 %v631, %v530
    %s633 = sld [smem:[#allocation8 + $0x11]]
    %v634 = vstv %s633
    %v635 = vmul.f32 %v634, %v498
    %v636 = vadd.f32 %v632, %v635
    %s637 = sld [smem:[#allocation8 + $0x21]]
    %v638 = vstv %s637
    %v639 = vmul.f32 %v638, %v534
    %v640 = vadd.f32 %v636, %v639
    %s641 = sld [smem:[#allocation8 + $0x5]]
    %v642 = vstv %s641
    %v643 = vmul.f32 %v642, %v545
    %v644 = vadd.f32 %v640, %v643
    %s645 = sld [smem:[#allocation8 + $0x15]]
    %v646 = vstv %s645
    %v647 = vmul.f32 %v646, %v505
    %v648 = vadd.f32 %v644, %v647
    %s649 = sld [smem:[#allocation8 + $0x25]]
    %v650 = vstv %s649
    %v651 = vmul.f32 %v650, %v549
    %v652 = vadd.f32 %v648, %v651
    %s653 = sld [smem:[#allocation8 + $0x9]]
    %v654 = vstv %s653
    %v655 = vmul.f32 %v654, %v560
    %v656 = vadd.f32 %v652, %v655
    %s657 = sld [smem:[#allocation8 + $0x19]]
    %v658 = vstv %s657
    %v659 = vmul.f32 %v658, %v512
    %v660 = vadd.f32 %v656, %v659
    %s661 = sld [smem:[#allocation8 + $0x29]]
    %v662 = vstv %s661
    %v663 = vmul.f32 %v662, %v564
    %v664 = vadd.f32 %v660, %v663
    %s665 = sld [smem:[#allocation8 + $0xd]]
    %v666 = vstv %s665
    %v667 = vmul.f32 %v666, %v575
    %v668 = vadd.f32 %v664, %v667
    %s669 = sld [smem:[#allocation8 + $0x1d]]
    %v670 = vstv %s669
    %v671 = vmul.f32 %v670, %v519
    %v672 = vadd.f32 %v668, %v671
    %s673 = sld [smem:[#allocation8 + $0x2d]]
    %v674 = vstv %s673
    %v675 = vmul.f32 %v674, %v579
    %v676 = vadd.f32 %v672, %v675
    %s677 = sld [smem:[#allocation10 + $0x1]]
    %v678 = vstv %s677
    %v679 = vadd.f32 %v676, %v678
    %s680 = sld [smem:[#allocation8 + $0x2]]
    %v681 = vstv %s680
    %v682 = vmul.f32 %v681, %v530
    %s683 = sld [smem:[#allocation8 + $0x12]]
    %v684 = vstv %s683
    %v685 = vmul.f32 %v684, %v498
    %v686 = vadd.f32 %v682, %v685
    %s687 = sld [smem:[#allocation8 + $0x22]]
    %v688 = vstv %s687
    %v689 = vmul.f32 %v688, %v534
    %v690 = vadd.f32 %v686, %v689
    %s691 = sld [smem:[#allocation8 + $0x6]]
    %v692 = vstv %s691
    %v693 = vmul.f32 %v692, %v545
    %v694 = vadd.f32 %v690, %v693
    %s695 = sld [smem:[#allocation8 + $0x16]]
    %v696 = vstv %s695
    %v697 = vmul.f32 %v696, %v505
    %v698 = vadd.f32 %v694, %v697
    %s699 = sld [smem:[#allocation8 + $0x26]]
    %v700 = vstv %s699
    %v701 = vmul.f32 %v700, %v549
    %v702 = vadd.f32 %v698, %v701
    %s703 = sld [smem:[#allocation8 + $0xa]]
    %v704 = vstv %s703
    %v705 = vmul.f32 %v704, %v560
    %v706 = vadd.f32 %v702, %v705
    %s707 = sld [smem:[#allocation8 + $0x1a]]
    %v708 = vstv %s707
    %v709 = vmul.f32 %v708, %v512
    %v710 = vadd.f32 %v706, %v709
    %s711 = sld [smem:[#allocation8 + $0x2a]]
    %v712 = vstv %s711
    %v713 = vmul.f32 %v712, %v564
    %v714 = vadd.f32 %v710, %v713
    %s715 = sld [smem:[#allocation8 + $0xe]]
    %v716 = vstv %s715
    %v717 = vmul.f32 %v716, %v575
    %v718 = vadd.f32 %v714, %v717
    %s719 = sld [smem:[#allocation8 + $0x1e]]
    %v720 = vstv %s719
    %v721 = vmul.f32 %v720, %v519
    %v722 = vadd.f32 %v718, %v721
    %s723 = sld [smem:[#allocation8 + $0x2e]]
    %v724 = vstv %s723
    %v725 = vmul.f32 %v724, %v579
    %v726 = vadd.f32 %v722, %v725
    %s727 = sld [smem:[#allocation10 + $0x2]]
    %v728 = vstv %s727
    %v729 = vadd.f32 %v726, %v728
    %s730 = sld [smem:[#allocation8 + $0x3]]
    %v731 = vstv %s730
    %v732 = vmul.f32 %v731, %v530
    %s733 = sld [smem:[#allocation8 + $0x13]]
    %v734 = vstv %s733
    %v735 = vmul.f32 %v734, %v498
    %v736 = vadd.f32 %v732, %v735
    %s737 = sld [smem:[#allocation8 + $0x23]]
    %v738 = vstv %s737
    %v739 = vmul.f32 %v738, %v534
    %v740 = vadd.f32 %v736, %v739
    %s741 = sld [smem:[#allocation8 + $0x7]]
    %v742 = vstv %s741
    %v743 = vmul.f32 %v742, %v545
    %v744 = vadd.f32 %v740, %v743
    %s745 = sld [smem:[#allocation8 + $0x17]]
    %v746 = vstv %s745
    %v747 = vmul.f32 %v746, %v505
    %v748 = vadd.f32 %v744, %v747
    %s749 = sld [smem:[#allocation8 + $0x27]]
    %v750 = vstv %s749
    %v751 = vmul.f32 %v750, %v549
    %v752 = vadd.f32 %v748, %v751
    %s753 = sld [smem:[#allocation8 + $0xb]]
    %v754 = vstv %s753
    %v755 = vmul.f32 %v754, %v560
    %v756 = vadd.f32 %v752, %v755
    %s757 = sld [smem:[#allocation8 + $0x1b]]
    %v758 = vstv %s757
    %v759 = vmul.f32 %v758, %v512
    %v760 = vadd.f32 %v756, %v759
    %s761 = sld [smem:[#allocation8 + $0x2b]]
    %v762 = vstv %s761
    %v763 = vmul.f32 %v762, %v564
    %v764 = vadd.f32 %v760, %v763
    %s765 = sld [smem:[#allocation8 + $0xf]]
    %v766 = vstv %s765
    %v767 = vmul.f32 %v766, %v575
    %v768 = vadd.f32 %v764, %v767
    %s769 = sld [smem:[#allocation8 + $0x1f]]
    %v770 = vstv %s769
    %v771 = vmul.f32 %v770, %v519
    %v772 = vadd.f32 %v768, %v771
    %s773 = sld [smem:[#allocation8 + $0x2f]]
    %v774 = vstv %s773
    %v775 = vmul.f32 %v774, %v579
    %v776 = vadd.f32 %v772, %v775
    %s777 = sld [smem:[#allocation10 + $0x3]]
    %v778 = vstv %s777
    %v779 = vadd.f32 %v776, %v778
    %s780 = sld [smem:[#allocation11]]
    %v781 = vstv %s780
    %v782 = vmul.f32 %v629, %v781
    %s783 = sld [smem:[#allocation11 + $0x4]]
    %v784 = vstv %s783
    %v785 = vadd.f32 %v782, %v784
    %v786 = vadd.f32 %v785, %v114
    %v787 = vmax.f32 %v786, 0.0
    %v790 = vunpack.c.l.s4 1966171168
    %v791 = vunpack.c.0.s8 %v790
    %v792 = vlaneseq
    %v793 = vshrl.u32 %v792, 7
    %v794 = vsub.s32 %v791, %v793
    %v795 = vrot.slane %v787, %v794
    %v796 = vcombine.high %v795, %v795
    %v798 = vunpack.c.l.s4 1966171168
    %v799 = vunpack.c.0.s8 %v798
    %v800 = vlaneseq
    %v801 = vshrl.u32 %v800, 7
    %v802 = vsub.s32 %v799, %v801
    %v803 = vrot.slane %v795, %v802
    %v805 = vunpack.c.l.s4 1966171168
    %v806 = vunpack.c.0.s8 %v805
    %v807 = vlaneseq
    %v808 = vshrl.u32 %v807, 7
    %v809 = vsub.s32 %v806, %v808
    %v810 = vrot.slane %v796, %v809
    %vm813 = vcmask 122880
    %814 = vst.msk [vmem:[#allocation13] sm:$0x1] %vm813, %v803
    %815 = vst.msk [vmem:[#allocation13 + $0x4] sm:$0x1] %vm813, %v810
    %s816 = sld [smem:[#allocation11 + $0x1]]
    %v817 = vstv %s816
    %v818 = vmul.f32 %v679, %v817
    %s819 = sld [smem:[#allocation11 + $0x5]]
    %v820 = vstv %s819
    %v821 = vadd.f32 %v818, %v820
    %v822 = vadd.f32 %v821, %v139
    %v823 = vmax.f32 %v822, 0.0
    %v826 = vunpack.c.l.s4 1966171168
    %v827 = vunpack.c.0.s8 %v826
    %v828 = vlaneseq
    %v829 = vshrl.u32 %v828, 7
    %v830 = vsub.s32 %v827, %v829
    %v831 = vrot.slane %v823, %v830
    %v832 = vcombine.high %v831, %v831
    %v834 = vunpack.c.l.s4 1966171168
    %v835 = vunpack.c.0.s8 %v834
    %v836 = vlaneseq
    %v837 = vshrl.u32 %v836, 7
    %v838 = vsub.s32 %v835, %v837
    %v839 = vrot.slane %v831, %v838
    %v841 = vunpack.c.l.s4 1966171168
    %v842 = vunpack.c.0.s8 %v841
    %v843 = vlaneseq
    %v844 = vshrl.u32 %v843, 7
    %v845 = vsub.s32 %v842, %v844
    %v846 = vrot.slane %v832, %v845
    %849 = vst.msk [vmem:[#allocation13 + $0x1] sm:$0x1] %vm813, %v839
    %850 = vst.msk [vmem:[#allocation13 + $0x5] sm:$0x1] %vm813, %v846
    %s851 = sld [smem:[#allocation11 + $0x2]]
    %v852 = vstv %s851
    %v853 = vmul.f32 %v729, %v852
    %s854 = sld [smem:[#allocation11 + $0x6]]
    %v855 = vstv %s854
    %v856 = vadd.f32 %v853, %v855
    %v857 = vadd.f32 %v856, %v159
    %v858 = vmax.f32 %v857, 0.0
    %v861 = vunpack.c.l.s4 1966171168
    %v862 = vunpack.c.0.s8 %v861
    %v863 = vlaneseq
    %v864 = vshrl.u32 %v863, 7
    %v865 = vsub.s32 %v862, %v864
    %v866 = vrot.slane %v858, %v865
    %v867 = vcombine.high %v866, %v866
    %v869 = vunpack.c.l.s4 1966171168
    %v870 = vunpack.c.0.s8 %v869
    %v871 = vlaneseq
    %v872 = vshrl.u32 %v871, 7
    %v873 = vsub.s32 %v870, %v872
    %v874 = vrot.slane %v866, %v873
    %v876 = vunpack.c.l.s4 1966171168
    %v877 = vunpack.c.0.s8 %v876
    %v878 = vlaneseq
    %v879 = vshrl.u32 %v878, 7
    %v880 = vsub.s32 %v877, %v879
    %v881 = vrot.slane %v867, %v880
    %884 = vst.msk [vmem:[#allocation13 + $0x2] sm:$0x1] %vm813, %v874
    %885 = vst.msk [vmem:[#allocation13 + $0x6] sm:$0x1] %vm813, %v881
    %s886 = sld [smem:[#allocation11 + $0x3]]
    %v887 = vstv %s886
    %v888 = vmul.f32 %v779, %v887
    %s889 = sld [smem:[#allocation11 + $0x7]]
    %v890 = vstv %s889
    %v891 = vadd.f32 %v888, %v890
    %v892 = vadd.f32 %v891, %v179
    %v893 = vmax.f32 %v892, 0.0
    %v896 = vunpack.c.l.s4 1966171168
    %v897 = vunpack.c.0.s8 %v896
    %v898 = vlaneseq
    %v899 = vshrl.u32 %v898, 7
    %v900 = vsub.s32 %v897, %v899
    %v901 = vrot.slane %v893, %v900
    %v902 = vcombine.high %v901, %v901
    %v904 = vunpack.c.l.s4 1966171168
    %v905 = vunpack.c.0.s8 %v904
    %v906 = vlaneseq
    %v907 = vshrl.u32 %v906, 7
    %v908 = vsub.s32 %v905, %v907
    %v909 = vrot.slane %v901, %v908
    %v911 = vunpack.c.l.s4 1966171168
    %v912 = vunpack.c.0.s8 %v911
    %v913 = vlaneseq
    %v914 = vshrl.u32 %v913, 7
    %v915 = vsub.s32 %v912, %v914
    %v916 = vrot.slane %v902, %v915
    %919 = vst.msk [vmem:[#allocation13 + $0x3] sm:$0x1] %vm813, %v909
    %920 = vst.msk [vmem:[#allocation13 + $0x7] sm:$0x1] %vm813, %v916
    // Predicated region
    $region54: #{residual_block.5} parent=1 // pred_check
      _
    $region55: #{residual_block.5} parent=1 // pred_check_branch
      %922 = sbr.rel (0) target = $region57
    $region56: #{residual_block.5} parent=1 // pred_region
      %s924 = ssub.s32 128, 128
      %925 = vsyncadd [#allocation3], %s924
      %s926 = sshll.u32 [#allocation13], 4
      %s927 = int_to_ptr.vmem [resolvable:$true] %s926
      %932 = dma.vmem_to_hbm [thread:$0]  %s927, 128, %s7, [#allocation3], 64, 64, 4
    $region57: #{residual_block.5} parent=1 // pred_fallthru
      _
    // Predicated region
    $region58: #{residual_block.5} parent=1 // pred_check
      _
    $region59: #{residual_block.5} parent=1 // pred_check_branch
      %934 = sbr.rel (0) target = $region61
    $region60: #{residual_block.5} parent=1 // pred_region
      %935 = dma.done [#allocation3], 128
    $region61: #{residual_block.5} parent=1 // pred_fallthru
      _
    %936 = vsyncpa [#allocation3], 1
    %937 = vsyncpa [#allocation4], 1
    %938 = vsyncpa [#allocation6], 1
    %939 = vsyncpa [#allocation9], 1
    %940 = vsyncpa [#allocation12], 1

</llo_original>
